<compile_context>
chip_gen: v7x
topology: tpu7x:2x2x1
jax: 0.10.0
libtpu: 0.0.40
codegen_flags: <defaults>
</compile_context>

<pallas_src>
import functools
import math

import jax
import jax.numpy as jnp
from jax import lax
from jax.experimental import pallas as pl
from jax.experimental.pallas import tpu as pltpu

_EPS = 1e-5
_NEG = -1e30
_KV_TILE = 512
_VMEM_LIMIT = 64 * 1024 * 1024

_CPARAMS = pltpu.CompilerParams(
    dimension_semantics=("parallel",),
    vmem_limit_bytes=_VMEM_LIMIT,
)


# ----------------------------- in-kernel helpers -----------------------------

def _ln(x, w, b):
    """LayerNorm over last axis, PyTorch semantics (biased var, eps inside sqrt). f32 math."""
    mean = jnp.mean(x, axis=-1, keepdims=True)
    var = jnp.mean(jnp.square(x - mean), axis=-1, keepdims=True)
    return (x - mean) * lax.rsqrt(var + _EPS) * w + b


# --------------------------------- kernels -----------------------------------

def image_embed_kernel(tok_ref, w_ref, out_ref):
    # tok_ref: (1, S, 1) int32 tokens; w_ref: (768, D) bf16 folded GroupLinear weight
    # out_ref: (1, S, D) bf16.   index = 256*group + token, group = position % 3.
    s = tok_ref.shape[1]
    n_cls = w_ref.shape[0]
    tok = tok_ref[0]                                               # (S, 1)
    row = lax.broadcasted_iota(jnp.int32, (s, n_cls), 0)
    lane = lax.broadcasted_iota(jnp.int32, (s, n_cls), 1)
    idx = (row % 3) * 256 + tok                                    # (S, 768)
    onehot = (idx == lane).astype(jnp.bfloat16)
    emb = jnp.dot(onehot, w_ref[...], preferred_element_type=jnp.float32)
    out_ref[0] = emb.astype(jnp.bfloat16)


def layer_kernel(x_ref, ln1w_ref, ln1b_ref,
                 wq_ref, wqr_ref, wk_ref, wkr_ref, wv_ref, wo_ref,
                 cos_ref, sin_ref,
                 ln2w_ref, ln2b_ref, wupa_ref, wupg_ref, wdn_ref,
                 out_ref, *, n_heads, head_dim, kv_tile):
    # Fused transformer block for one batch element:
    #   x = x + attn(LN(x)); x = x + ff(LN(x))
    t = x_ref.shape[1]
    d = x_ref.shape[2]
    x = x_ref[0].astype(jnp.float32)                               # (T, D)
    cos = cos_ref[...]                                             # (T, hd) f32
    sin = sin_ref[...]                                             # (T, hd) f32 (signed)
    scale = 1.0 / math.sqrt(head_dim)
    n_chunks = -(-t // kv_tile)

    # ---------------- attention ----------------
    h1 = _ln(x, ln1w_ref[...], ln1b_ref[...]).astype(jnp.bfloat16)  # (T, D)
    attn = jnp.zeros((t, d), jnp.float32)

    for h in range(n_heads):
        # per-head projections, (T, D) x (D, hd); rotate-half folded into *_r weights
        qp = jnp.dot(h1, wq_ref[h], preferred_element_type=jnp.float32)
        qr = jnp.dot(h1, wqr_ref[h], preferred_element_type=jnp.float32)
        kp = jnp.dot(h1, wk_ref[h], preferred_element_type=jnp.float32)
        kr = jnp.dot(h1, wkr_ref[h], preferred_element_type=jnp.float32)
        v = jnp.dot(h1, wv_ref[h], preferred_element_type=jnp.float32)

        q = (qp * cos + qr * sin).astype(jnp.bfloat16)             # rotary, elementwise only
        k = (kp * cos + kr * sin).astype(jnp.bfloat16)
        vb = v.astype(jnp.bfloat16)

        # online-softmax over KV chunks (never materialize a full (T, T) score matrix)
        m_i = jnp.full((t, 1), _NEG, jnp.float32)
        l_i = jnp.zeros((t, 1), jnp.float32)
        acc = jnp.zeros((t, head_dim), jnp.float32)
        for c in range(n_chunks):
            lo = c * kv_tile
            w = min(kv_tile, t - lo)
            kc = k[lo:lo + w]
            vc = vb[lo:lo + w]
            s = lax.dot_general(q, kc, (((1,), (1,)), ((), ())),
                                preferred_element_type=jnp.float32) * scale
            row = lax.broadcasted_iota(jnp.int32, (t, w), 0)
            col = lax.broadcasted_iota(jnp.int32, (t, w), 1) + lo
            s = jnp.where(col <= row, s, _NEG)
            m_new = jnp.maximum(m_i, jnp.max(s, axis=-1, keepdims=True))
            alpha = jnp.exp(m_i - m_new)
            p = jnp.exp(s - m_new)
            l_i = alpha * l_i + jnp.sum(p, axis=-1, keepdims=True)
            acc = alpha * acc + jnp.dot(p.astype(jnp.bfloat16), vc,
                                        preferred_element_type=jnp.float32)
            m_i = m_new

        o_h = (acc * pl.reciprocal(l_i, approx=True)).astype(jnp.bfloat16)
        # accumulate output projection per head (no head concat)
        attn = attn + jnp.dot(o_h, wo_ref[h], preferred_element_type=jnp.float32)

    x2 = x + attn                                                  # residual 1 (f32)

    # ---------------- feed-forward (swiglu) ----------------
    h2 = _ln(x2, ln2w_ref[...], ln2b_ref[...]).astype(jnp.bfloat16)
    a = jnp.dot(h2, wupa_ref[...], preferred_element_type=jnp.float32)
    g = jnp.dot(h2, wupg_ref[...], preferred_element_type=jnp.float32)
    sw = (a * g * jax.nn.sigmoid(g)).astype(jnp.bfloat16)          # x * silu(gate)
    dn = jnp.dot(sw, wdn_ref[...], preferred_element_type=jnp.float32)

    out_ref[0] = (x2 + dn).astype(jnp.bfloat16)                    # residual 2


def out_proj_kernel(x_ref, nw_ref, nb_ref, w_ref, out_ref):
    # x_ref: (1, T, D) bf16; w_ref: (D, 768) bf16 folded GroupLinear; out: (1, T, 256) f32
    t = x_ref.shape[1]
    x = x_ref[0].astype(jnp.float32)
    h = _ln(x, nw_ref[...], nb_ref[...]).astype(jnp.bfloat16)
    full = jnp.dot(h, w_ref[...], preferred_element_type=jnp.float32)   # (T, 768)
    row = lax.broadcasted_iota(jnp.int32, (t, 256), 0)
    grp = row % 3                                                  # output group = position % 3
    acc = jnp.zeros((t, 256), jnp.float32)
    for g in range(3):
        sel = (grp == g).astype(jnp.float32)
        acc = acc + sel * full[:, g * 256:(g + 1) * 256]           # 128-aligned lane slices
    out_ref[0] = acc


# ------------------------------ rotary buffers --------------------------------

def make_axial_pos(h, w):
    h_pos = jnp.linspace(-1.0, 1.0, h + 1)
    w_pos = jnp.linspace(-1.0, 1.0, w + 1)
    h_pos = (h_pos[:-1] + h_pos[1:]) / 2
    w_pos = (w_pos[:-1] + w_pos[1:]) / 2
    hh, ww = jnp.meshgrid(h_pos, w_pos, indexing="ij")
    return jnp.stack([hh, ww], axis=-1).reshape(h * w, 2)


def make_axial_pos_final(h, w, d):
    poses = []
    for i in range(d):
        pos_ax = make_axial_pos(h // 2 ** i, w // 2 ** i)
        pos_rest = jnp.full((pos_ax.shape[0], 1), (d - i) / d, dtype=jnp.float32)
        poses.insert(0, jnp.concatenate([pos_ax, pos_rest], axis=-1))
    return jnp.concatenate(poses, axis=0)


def make_rotary(head_dim):
    freqs = jnp.exp(jnp.linspace(math.log(math.pi), math.log(10 * math.pi), head_dim // 8))
    pos = jnp.repeat(make_axial_pos_final(32, 32, 6), 3, axis=0)            # (4095, 3)
    pos = jnp.concatenate([jnp.zeros((1, 3), jnp.float32), pos], axis=0)    # (4096, 3)
    theta = jnp.concatenate([pos[:, 0:1] * freqs, pos[:, 1:2] * freqs, pos[:, 2:3] * freqs],
                            axis=-1)                                        # (4096, 3*hd//8)
    return jnp.cos(theta), jnp.sin(theta)


# -------------------------------- parameters ----------------------------------

def init_params(key, depth, dim, hidden_dim, head_dim):
    """PyTorch-layout f32 parameters (weights stored (out, in))."""
    def w(k, shape, scale=0.02):
        return scale * jax.random.normal(k, shape, jnp.float32)

    keys = jax.random.split(key, 3 + depth)
    params = {
        "class_embed": w(keys[0], (10, dim)),
        "image_embed_w": w(keys[1], (3, dim, 256)),
        "out_proj_w": w(keys[2], (3, 256, dim)),
        "out_norm_w": jnp.ones((dim,), jnp.float32),
        "out_norm_b": jnp.zeros((dim,), jnp.float32),
        "blocks": [],
    }
    for i in range(depth):
        k0, k1, k2, k3 = jax.random.split(keys[3 + i], 4)
        params["blocks"].append({
            "attn_norm_w": jnp.ones((dim,), jnp.float32),
            "attn_norm_b": jnp.zeros((dim,), jnp.float32),
            "wqkv": w(k0, (3 * dim, dim)),
            "wo": w(k1, (dim, dim)),         # zero_init in torch; random for benchmarking
            "ff_norm_w": jnp.ones((dim,), jnp.float32),
            "ff_norm_b": jnp.zeros((dim,), jnp.float32),
            "wup": w(k2, (2 * hidden_dim, dim)),
            "wdown": w(k3, (dim, hidden_dim)),  # zero_init in torch; random for benchmarking
        })
    return params


def prepare_params(params, *, dim, hidden_dim, head_dim):
    """Host-side, one-time: pre-transpose to (in, out) layouts, fold rotary permutation,
    fold GroupLinear groups into wide matrices, cast weights to bf16."""
    assert dim % head_dim == 0 and head_dim % 8 == 0
    n_heads = dim // head_dim
    r2 = 3 * (head_dim // 8)                 # half of the rotary width
    bf16 = jnp.bfloat16

    # rotary expanded to full head_dim (duplicated halves, pass-through tail)
    cos, sin = make_rotary(head_dim)                               # (4096, r2)
    t_max = cos.shape[0]
    pad = head_dim - 2 * r2
    cos_h = jnp.concatenate([cos, cos, jnp.ones((t_max, pad), jnp.float32)], axis=-1)
    sin_h = jnp.concatenate([-sin, sin, jnp.zeros((t_max, pad), jnp.float32)], axis=-1)

    # rotate-half permutation (folded into q/k weights)
    idx = jnp.arange(head_dim)
    pair = jnp.where(idx < r2, idx + r2, jnp.where(idx < 2 * r2, idx - r2, idx))
    perm = (idx[:, None] == pair[None, :]).astype(jnp.float32)     # P[i, j] = 1 iff i == pair(j)

    def heads_in_out(w2d):                   # (dim_out, dim_in) -> (H, dim_in, hd)
        return jnp.transpose(w2d.reshape(n_heads, head_dim, dim), (0, 2, 1))

    blocks = []
    for blk in params["blocks"]:
        wqkv = blk["wqkv"]
        wq3 = heads_in_out(wqkv[:dim])
        wk3 = heads_in_out(wqkv[dim:2 * dim])
        wv3 = heads_in_out(wqkv[2 * dim:])
        wq3r = jnp.einsum("hdk,kj->hdj", wq3, perm)
        wk3r = jnp.einsum("hdk,kj->hdj", wk3, perm)
        wo3 = jnp.transpose(blk["wo"], (1, 0)).reshape(n_heads, head_dim, dim)
        blocks.append({
            "ln1_w": blk["attn_norm_w"].reshape(1, dim),
            "ln1_b": blk["attn_norm_b"].reshape(1, dim),
            "wq3": wq3.astype(bf16), "wq3r": wq3r.astype(bf16),
            "wk3": wk3.astype(bf16), "wk3r": wk3r.astype(bf16),
            "wv3": wv3.astype(bf16), "wo3": wo3.astype(bf16),
            "ln2_w": blk["ff_norm_w"].reshape(1, dim),
            "ln2_b": blk["ff_norm_b"].reshape(1, dim),
            "wup_a": blk["wup"][:hidden_dim].T.astype(bf16),       # (D, H)
            "wup_g": blk["wup"][hidden_dim:].T.astype(bf16),       # (D, H)
            "wdown": blk["wdown"].T.astype(bf16),                  # (H, D)
        })

    return {
        "class_embed": params["class_embed"],
        # image embed GroupLinear (3, D, 256) -> one-hot table (768, D)
        "w_img768": jnp.transpose(params["image_embed_w"], (0, 2, 1)).reshape(768, dim).astype(bf16),
        # out proj GroupLinear (3, 256, D) -> (D, 768)
        "w_out768": jnp.transpose(params["out_proj_w"], (2, 0, 1)).reshape(dim, 768).astype(bf16),
        "out_norm_w": params["out_norm_w"].reshape(1, dim),
        "out_norm_b": params["out_norm_b"].reshape(1, dim),
        "cos_h": cos_h, "sin_h": sin_h,
        "blocks": blocks,
    }


# ---------------------------------- forward ------------------------------------

def transformer_forward(params, x_tokens, y_class, *, dim, hidden_dim, head_dim):
    n_heads = dim // head_dim
    N, S = x_tokens.shape
    T = S + 1
    kv_tile = min(_KV_TILE, T)

    # ---- image embedding (GroupLinear via folded one-hot matmul) ----
    tok = x_tokens.astype(jnp.int32).reshape(N, S, 1)
    x_emb = pl.pallas_call(
        image_embed_kernel,
        out_shape=jax.ShapeDtypeStruct((N, S, dim), jnp.bfloat16),
        grid=(N,),
        in_specs=[pl.BlockSpec((1, S, 1), lambda b: (b, 0, 0)),
                  pl.BlockSpec((768, dim), lambda b: (0, 0))],
        out_specs=pl.BlockSpec((1, S, dim), lambda b: (b, 0, 0)),
        compiler_params=_CPARAMS,
    )(tok, params["w_img768"])

    # class embedding lookup (glue gather) + class token concat
    y_emb = jnp.take(params["class_embed"], y_class, axis=0).astype(jnp.bfloat16)
    h = jnp.concatenate([y_emb[:, None, :], x_emb], axis=1)        # (N, T, dim) bf16

    cos_t = params["cos_h"][:T]
    sin_t = params["sin_h"][:T]

    layer_fn = functools.partial(layer_kernel, n_heads=n_heads,
                                 head_dim=head_dim, kv_tile=kv_tile)
    wspec3 = pl.BlockSpec((n_heads, dim, head_dim), lambda b: (0, 0, 0))
    layer_in_specs = [
        pl.BlockSpec((1, T, dim), lambda b: (b, 0, 0)),            # x
        pl.BlockSpec((1, dim), lambda b: (0, 0)),                  # ln1 w
        pl.BlockSpec((1, dim), lambda b: (0, 0)),                  # ln1 b
        wspec3, wspec3, wspec3, wspec3, wspec3,                    # wq, wq_rot, wk, wk_rot, wv
        pl.BlockSpec((n_heads, head_dim, dim), lambda b: (0, 0, 0)),  # wo (per-head)
        pl.BlockSpec((T, head_dim), lambda b: (0, 0)),             # cos
        pl.BlockSpec((T, head_dim), lambda b: (0, 0)),             # sin (signed)
        pl.BlockSpec((1, dim), lambda b: (0, 0)),                  # ln2 w
        pl.BlockSpec((1, dim), lambda b: (0, 0)),                  # ln2 b
        pl.BlockSpec((dim, hidden_dim), lambda b: (0, 0)),         # wup_a
        pl.BlockSpec((dim, hidden_dim), lambda b: (0, 0)),         # wup_g
        pl.BlockSpec((hidden_dim, dim), lambda b: (0, 0)),         # wdown
    ]

    for blk in params["blocks"]:
        h = pl.pallas_call(
            layer_fn,
            out_shape=jax.ShapeDtypeStruct((N, T, dim), jnp.bfloat16),
            grid=(N,),
            in_specs=layer_in_specs,
            out_specs=pl.BlockSpec((1, T, dim), lambda b: (b, 0, 0)),
            compiler_params=_CPARAMS,
        )(h, blk["ln1_w"], blk["ln1_b"],
          blk["wq3"], blk["wq3r"], blk["wk3"], blk["wk3r"], blk["wv3"], blk["wo3"],
          cos_t, sin_t,
          blk["ln2_w"], blk["ln2_b"], blk["wup_a"], blk["wup_g"], blk["wdown"])

    # ---- final norm + GroupLinear(dim, 256, 3) ----
    logits = pl.pallas_call(
        out_proj_kernel,
        out_shape=jax.ShapeDtypeStruct((N, T, 256), jnp.float32),
        grid=(N,),
        in_specs=[pl.BlockSpec((1, T, dim), lambda b: (b, 0, 0)),
                  pl.BlockSpec((1, dim), lambda b: (0, 0)),
                  pl.BlockSpec((1, dim), lambda b: (0, 0)),
                  pl.BlockSpec((dim, 768), lambda b: (0, 0))],
        out_specs=pl.BlockSpec((1, T, 256), lambda b: (b, 0, 0)),
        compiler_params=_CPARAMS,
    )(h, params["out_norm_w"], params["out_norm_b"], params["w_out768"])
    return logits


# ------------------------------------ main --------------------------------------

if __name__ == "__main__":
    depth, dim, hidden_dim, head_dim = 2, 64, 128, 32   # small config; n_heads = 2
    N, S = 2, 8                                         # batch, number of image tokens

    key = jax.random.PRNGKey(0)
    kp, kx, ky = jax.random.split(key, 3)
    raw = init_params(kp, depth, dim, hidden_dim, head_dim)
    params = prepare_params(raw, dim=dim, hidden_dim=hidden_dim, head_dim=head_dim)

    x_tokens = jax.random.randint(kx, (N, S), 0, 256, dtype=jnp.int32)
    y_class = jax.random.randint(ky, (N,), 0, 10, dtype=jnp.int32)

    fwd = jax.jit(functools.partial(transformer_forward, dim=dim,
                                    hidden_dim=hidden_dim, head_dim=head_dim))
    out = fwd(params, x_tokens, y_class)
    out = jax.block_until_ready(out)
    assert out.shape == (N, S + 1, 256) and out.dtype == jnp.float32
    print("KERNEL_OK")
</pallas_src>

<mosaic_0001>
module attributes {stable_mosaic.version = 11 : i64} {
  func.func @image_embed_kernel(%arg0: i32, %arg1: memref<1x8x1xi32, #tpu.memory_space<vmem>>, %arg2: memref<768x64xbf16, #tpu.memory_space<vmem>>, %arg3: memref<1x8x64xbf16, #tpu.memory_space<vmem>>) attributes {dimension_semantics = [#tpu.dimension_semantics<parallel>], iteration_bounds = array<i64: 2>, scalar_prefetch = 0 : i64, scratch_operands = 0 : i64, tpu.core_type = #tpu.core_type<tc>, window_params = [{transform_indices = @transform_0, window_bounds = array<i64: 1, 8, 1>}, {pipeline_mode = #tpu.pipeline_mode<synchronous>, transform_indices = @transform_1, window_bounds = array<i64: 768, 64>}, {transform_indices = @transform_2, window_bounds = array<i64: 1, 8, 64>}]} {
    %c0 = arith.constant 0 : index
    %c0_0 = arith.constant 0 : index
    %c0_1 = arith.constant 0 : index
    %0 = vector.load %arg1[%c0, %c0_0, %c0_1] : memref<1x8x1xi32, #tpu.memory_space<vmem>>, vector<1x8x1xi32>
    %1 = vector.shape_cast %0 : vector<1x8x1xi32> to vector<8x1xi32>
    %2 = tpu.iota {dimensions = array<i32: 0>} : vector<8x768xi32>
    %3 = tpu.iota {dimensions = array<i32: 1>} : vector<8x768xi32>
    %c3_i32 = arith.constant 3 : i32
    %c0_i32 = arith.constant 0 : i32
    %4 = arith.cmpi eq, %c3_i32, %c0_i32 : i32
    %c1_i32 = arith.constant 1 : i32
    %5 = arith.select %4, %c1_i32, %c3_i32 : i32
    %6 = vector.broadcast %5 : i32 to vector<8x768xi32>
    %7 = arith.remsi %2, %6 : vector<8x768xi32>
    %c0_i32_2 = arith.constant 0 : i32
    %8 = vector.broadcast %c0_i32_2 : i32 to vector<8x768xi32>
    %9 = arith.cmpi ne, %7, %8 : vector<8x768xi32>
    %c0_i32_3 = arith.constant 0 : i32
    %10 = vector.broadcast %c0_i32_3 : i32 to vector<8x768xi32>
    %11 = arith.cmpi slt, %7, %10 : vector<8x768xi32>
    %c0_i32_4 = arith.constant 0 : i32
    %12 = arith.cmpi slt, %5, %c0_i32_4 : i32
    %13 = vector.broadcast %12 : i1 to vector<8x768xi1>
    %14 = vector.broadcast %13 : vector<8x768xi1> to vector<8x768xi1>
    %15 = arith.xori %11, %14 : vector<8x768xi1>
    %16 = arith.andi %15, %9 : vector<8x768xi1>
    %17 = vector.broadcast %5 : i32 to vector<8x768xi32>
    %18 = arith.addi %7, %17 : vector<8x768xi32>
    %19 = arith.select %16, %18, %7 : vector<8x768xi1>, vector<8x768xi32>
    %c256_i32 = arith.constant 256 : i32
    %20 = vector.broadcast %c256_i32 : i32 to vector<8x768xi32>
    %21 = arith.muli %19, %20 : vector<8x768xi32>
    %22 = vector.broadcast %1 : vector<8x1xi32> to vector<8x768xi32>
    %23 = arith.addi %21, %22 : vector<8x768xi32>
    %24 = arith.cmpi eq, %23, %3 : vector<8x768xi32>
    %25 = arith.extui %24 : vector<8x768xi1> to vector<8x768xi32>
    %26 = arith.sitofp %25 : vector<8x768xi32> to vector<8x768xf32>
    %27 = arith.truncf %26 : vector<8x768xf32> to vector<8x768xbf16>
    %c0_5 = arith.constant 0 : index
    %c0_6 = arith.constant 0 : index
    %28 = vector.load %arg2[%c0_5, %c0_6] : memref<768x64xbf16, #tpu.memory_space<vmem>>, vector<768x64xbf16>
    %cst = arith.constant dense<0.000000e+00> : vector<8x64xf32>
    %29 = tpu.matmul %27, %28, %cst {dimension_numbers = #tpu.dot_dimension_numbers<[1], [0], [0], [1], [0, 0, 1, 1], [], []>} : vector<8x768xbf16>, vector<768x64xbf16>, vector<8x64xf32> -> vector<8x64xf32>
    %30 = arith.truncf %29 : vector<8x64xf32> to vector<8x64xbf16>
    %c0_7 = arith.constant 0 : index
    %c0_8 = arith.constant 0 : index
    %c0_9 = arith.constant 0 : index
    %31 = vector.load %arg3[%c0_7, %c0_8, %c0_9] : memref<1x8x64xbf16, #tpu.memory_space<vmem>>, vector<1x8x64xbf16>
    %32 = vector.shape_cast %31 : vector<1x8x64xbf16> to vector<8x64xbf16>
    %33 = vector.shape_cast %30 : vector<8x64xbf16> to vector<1x8x64xbf16>
    tpu.vector_store %arg3[%c0_7, %c0_8, %c0_9], %33 {strides = array<i32>} : memref<1x8x64xbf16, #tpu.memory_space<vmem>>, vector<1x8x64xbf16>,
    return
  }
  func.func @transform_0(%arg0: i32) -> (i32, i32, i32) {
    %c0_i32 = arith.constant 0 : i32
    %c0_i32_0 = arith.constant 0 : i32
    %c0_i32_1 = arith.constant 0 : i32
    return %arg0, %c0_i32, %c0_i32_0 : i32, i32, i32
  }
  func.func @transform_1(%arg0: i32) -> (i32, i32) {
    %c0_i32 = arith.constant 0 : i32
    %c0_i32_0 = arith.constant 0 : i32
    %c0_i32_1 = arith.constant 0 : i32
    return %c0_i32, %c0_i32_0 : i32, i32
  }
  func.func @transform_2(%arg0: i32) -> (i32, i32, i32) {
    %c0_i32 = arith.constant 0 : i32
    %c0_i32_0 = arith.constant 0 : i32
    %c0_i32_1 = arith.constant 0 : i32
    return %arg0, %c0_i32, %c0_i32_0 : i32, i32, i32
  }
}

module attributes {stable_mosaic.version = 11 : i64} {
  func.func @out_proj_kernel(%arg0: i32, %arg1: memref<1x9x64xbf16, #tpu.memory_space<vmem>>, %arg2: memref<1x64xf32, #tpu.memory_space<vmem>>, %arg3: memref<1x64xf32, #tpu.memory_space<vmem>>, %arg4: memref<64x768xbf16, #tpu.memory_space<vmem>>, %arg5: memref<1x9x256xf32, #tpu.memory_space<vmem>>) attributes {dimension_semantics = [#tpu.dimension_semantics<parallel>], iteration_bounds = array<i64: 2>, scalar_prefetch = 0 : i64, scratch_operands = 0 : i64, tpu.core_type = #tpu.core_type<tc>, window_params = [{transform_indices = @transform_0, window_bounds = array<i64: 1, 9, 64>}, {pipeline_mode = #tpu.pipeline_mode<synchronous>, transform_indices = @transform_1, window_bounds = array<i64: 1, 64>}, {pipeline_mode = #tpu.pipeline_mode<synchronous>, transform_indices = @transform_2, window_bounds = array<i64: 1, 64>}, {pipeline_mode = #tpu.pipeline_mode<synchronous>, transform_indices = @transform_3, window_bounds = array<i64: 64, 768>}, {transform_indices = @transform_4, window_bounds = array<i64: 1, 9, 256>}]} {
    %c0 = arith.constant 0 : index
    %c0_0 = arith.constant 0 : index
    %c0_1 = arith.constant 0 : index
    %0 = vector.load %arg1[%c0, %c0_0, %c0_1] : memref<1x9x64xbf16, #tpu.memory_space<vmem>>, vector<1x9x64xbf16>
    %1 = vector.shape_cast %0 : vector<1x9x64xbf16> to vector<9x64xbf16>
    %2 = arith.extf %1 : vector<9x64xbf16> to vector<9x64xf32>
    %c0_2 = arith.constant 0 : index
    %c0_3 = arith.constant 0 : index
    %3 = vector.load %arg2[%c0_2, %c0_3] : memref<1x64xf32, #tpu.memory_space<vmem>>, vector<1x64xf32>
    %c0_4 = arith.constant 0 : index
    %c0_5 = arith.constant 0 : index
    %4 = vector.load %arg3[%c0_4, %c0_5] : memref<1x64xf32, #tpu.memory_space<vmem>>, vector<1x64xf32>
    %cst = arith.constant dense<0.000000e+00> : vector<9xf32>
    %5 = vector.multi_reduction <add>, %2, %cst [1] : vector<9x64xf32> to vector<9xf32>
    %6 = vector.shape_cast %5 : vector<9xf32> to vector<9x1xf32>
    %cst_6 = arith.constant 6.400000e+01 : f32
    %7 = vector.broadcast %cst_6 : f32 to vector<9x1xf32>
    %8 = arith.divf %6, %7 : vector<9x1xf32>
    %9 = vector.broadcast %8 : vector<9x1xf32> to vector<9x64xf32>
    %10 = arith.subf %2, %9 : vector<9x64xf32>
    %11 = arith.mulf %10, %10 : vector<9x64xf32>
    %cst_7 = arith.constant dense<0.000000e+00> : vector<9xf32>
    %12 = vector.multi_reduction <add>, %11, %cst_7 [1] : vector<9x64xf32> to vector<9xf32>
    %13 = vector.shape_cast %12 : vector<9xf32> to vector<9x1xf32>
    %cst_8 = arith.constant 6.400000e+01 : f32
    %14 = vector.broadcast %cst_8 : f32 to vector<9x1xf32>
    %15 = arith.divf %13, %14 : vector<9x1xf32>
    %16 = vector.broadcast %8 : vector<9x1xf32> to vector<9x64xf32>
    %17 = arith.subf %2, %16 : vector<9x64xf32>
    %cst_9 = arith.constant 9.99999974E-6 : f32
    %18 = vector.broadcast %cst_9 : f32 to vector<9x1xf32>
    %19 = arith.addf %15, %18 : vector<9x1xf32>
    %20 = math.rsqrt %19 : vector<9x1xf32>
    %21 = vector.broadcast %20 : vector<9x1xf32> to vector<9x64xf32>
    %22 = arith.mulf %17, %21 : vector<9x64xf32>
    %23 = vector.broadcast %3 : vector<1x64xf32> to vector<9x64xf32>
    %24 = arith.mulf %22, %23 : vector<9x64xf32>
    %25 = vector.broadcast %4 : vector<1x64xf32> to vector<9x64xf32>
    %26 = arith.addf %24, %25 : vector<9x64xf32>
    %27 = arith.truncf %26 : vector<9x64xf32> to vector<9x64xbf16>
    %c0_10 = arith.constant 0 : index
    %c0_11 = arith.constant 0 : index
    %28 = vector.load %arg4[%c0_10, %c0_11] : memref<64x768xbf16, #tpu.memory_space<vmem>>, vector<64x768xbf16>
    %cst_12 = arith.constant dense<0.000000e+00> : vector<9x768xf32>
    %29 = tpu.matmul %27, %28, %cst_12 {dimension_numbers = #tpu.dot_dimension_numbers<[1], [0], [0], [1], [0, 0, 1, 1], [], []>} : vector<9x64xbf16>, vector<64x768xbf16>, vector<9x768xf32> -> vector<9x768xf32>
    %30 = tpu.iota {dimensions = array<i32: 0>} : vector<9x256xi32>
    %c3_i32 = arith.constant 3 : i32
    %c0_i32 = arith.constant 0 : i32
    %31 = arith.cmpi eq, %c3_i32, %c0_i32 : i32
    %c1_i32 = arith.constant 1 : i32
    %32 = arith.select %31, %c1_i32, %c3_i32 : i32
    %33 = vector.broadcast %32 : i32 to vector<9x256xi32>
    %34 = arith.remsi %30, %33 : vector<9x256xi32>
    %c0_i32_13 = arith.constant 0 : i32
    %35 = vector.broadcast %c0_i32_13 : i32 to vector<9x256xi32>
    %36 = arith.cmpi ne, %34, %35 : vector<9x256xi32>
    %c0_i32_14 = arith.constant 0 : i32
    %37 = vector.broadcast %c0_i32_14 : i32 to vector<9x256xi32>
    %38 = arith.cmpi slt, %34, %37 : vector<9x256xi32>
    %c0_i32_15 = arith.constant 0 : i32
    %39 = arith.cmpi slt, %32, %c0_i32_15 : i32
    %40 = vector.broadcast %39 : i1 to vector<9x256xi1>
    %41 = vector.broadcast %40 : vector<9x256xi1> to vector<9x256xi1>
    %42 = arith.xori %38, %41 : vector<9x256xi1>
    %43 = arith.andi %42, %36 : vector<9x256xi1>
    %44 = vector.broadcast %32 : i32 to vector<9x256xi32>
    %45 = arith.addi %34, %44 : vector<9x256xi32>
    %46 = arith.select %43, %45, %34 : vector<9x256xi1>, vector<9x256xi32>
    %cst_16 = arith.constant 0.000000e+00 : f32
    %47 = vector.broadcast %cst_16 : f32 to vector<9x256xf32>
    %c0_i32_17 = arith.constant 0 : i32
    %48 = vector.broadcast %c0_i32_17 : i32 to vector<9x256xi32>
    %49 = arith.cmpi eq, %46, %48 : vector<9x256xi32>
    %50 = arith.extui %49 : vector<9x256xi1> to vector<9x256xi32>
    %51 = arith.sitofp %50 : vector<9x256xi32> to vector<9x256xf32>
    %52 = vector.extract_strided_slice %29 {offsets = [0, 0], sizes = [9, 256], strides = [1, 1]} : vector<9x768xf32> to vector<9x256xf32>
    %53 = arith.mulf %51, %52 : vector<9x256xf32>
    %54 = arith.addf %47, %53 : vector<9x256xf32>
    %c1_i32_18 = arith.constant 1 : i32
    %55 = vector.broadcast %c1_i32_18 : i32 to vector<9x256xi32>
    %56 = arith.cmpi eq, %46, %55 : vector<9x256xi32>
    %57 = arith.extui %56 : vector<9x256xi1> to vector<9x256xi32>
    %58 = arith.sitofp %57 : vector<9x256xi32> to vector<9x256xf32>
    %59 = vector.extract_strided_slice %29 {offsets = [0, 256], sizes = [9, 256], strides = [1, 1]} : vector<9x768xf32> to vector<9x256xf32>
    %60 = arith.mulf %58, %59 : vector<9x256xf32>
    %61 = arith.addf %54, %60 : vector<9x256xf32>
    %c2_i32 = arith.constant 2 : i32
    %62 = vector.broadcast %c2_i32 : i32 to vector<9x256xi32>
    %63 = arith.cmpi eq, %46, %62 : vector<9x256xi32>
    %64 = arith.extui %63 : vector<9x256xi1> to vector<9x256xi32>
    %65 = arith.sitofp %64 : vector<9x256xi32> to vector<9x256xf32>
    %66 = vector.extract_strided_slice %29 {offsets = [0, 512], sizes = [9, 256], strides = [1, 1]} : vector<9x768xf32> to vector<9x256xf32>
    %67 = arith.mulf %65, %66 : vector<9x256xf32>
    %68 = arith.addf %61, %67 : vector<9x256xf32>
    %c0_19 = arith.constant 0 : index
    %c0_20 = arith.constant 0 : index
    %c0_21 = arith.constant 0 : index
    %69 = vector.load %arg5[%c0_19, %c0_20, %c0_21] : memref<1x9x256xf32, #tpu.memory_space<vmem>>, vector<1x9x256xf32>
    %70 = vector.shape_cast %69 : vector<1x9x256xf32> to vector<9x256xf32>
    %71 = vector.shape_cast %68 : vector<9x256xf32> to vector<1x9x256xf32>
    tpu.vector_store %arg5[%c0_19, %c0_20, %c0_21], %71 {strides = array<i32>} : memref<1x9x256xf32, #tpu.memory_space<vmem>>, vector<1x9x256xf32>,
    return
  }
  func.func @transform_0(%arg0: i32) -> (i32, i32, i32) {
    %c0_i32 = arith.constant 0 : i32
    %c0_i32_0 = arith.constant 0 : i32
    %c0_i32_1 = arith.constant 0 : i32
    return %arg0, %c0_i32, %c0_i32_0 : i32, i32, i32
  }
  func.func @transform_1(%arg0: i32) -> (i32, i32) {
    %c0_i32 = arith.constant 0 : i32
    %c0_i32_0 = arith.constant 0 : i32
    %c0_i32_1 = arith.constant 0 : i32
    return %c0_i32, %c0_i32_0 : i32, i32
  }
  func.func @transform_2(%arg0: i32) -> (i32, i32) {
    %c0_i32 = arith.constant 0 : i32
    %c0_i32_0 = arith.constant 0 : i32
    %c0_i32_1 = arith.constant 0 : i32
    return %c0_i32, %c0_i32_0 : i32, i32
  }
  func.func @transform_3(%arg0: i32) -> (i32, i32) {
    %c0_i32 = arith.constant 0 : i32
    %c0_i32_0 = arith.constant 0 : i32
    %c0_i32_1 = arith.constant 0 : i32
    return %c0_i32, %c0_i32_0 : i32, i32
  }
  func.func @transform_4(%arg0: i32) -> (i32, i32, i32) {
    %c0_i32 = arith.constant 0 : i32
    %c0_i32_0 = arith.constant 0 : i32
    %c0_i32_1 = arith.constant 0 : i32
    return %arg0, %c0_i32, %c0_i32_0 : i32, i32, i32
  }
}

module attributes {stable_mosaic.version = 11 : i64} {
  func.func @layer_kernel(%arg0: i32, %arg1: memref<1x9x64xbf16, #tpu.memory_space<vmem>>, %arg2: memref<1x64xf32, #tpu.memory_space<vmem>>, %arg3: memref<1x64xf32, #tpu.memory_space<vmem>>, %arg4: memref<2x64x32xbf16, #tpu.memory_space<vmem>>, %arg5: memref<2x64x32xbf16, #tpu.memory_space<vmem>>, %arg6: memref<2x64x32xbf16, #tpu.memory_space<vmem>>, %arg7: memref<2x64x32xbf16, #tpu.memory_space<vmem>>, %arg8: memref<2x64x32xbf16, #tpu.memory_space<vmem>>, %arg9: memref<2x32x64xbf16, #tpu.memory_space<vmem>>, %arg10: memref<9x32xf32, #tpu.memory_space<vmem>>, %arg11: memref<9x32xf32, #tpu.memory_space<vmem>>, %arg12: memref<1x64xf32, #tpu.memory_space<vmem>>, %arg13: memref<1x64xf32, #tpu.memory_space<vmem>>, %arg14: memref<64x128xbf16, #tpu.memory_space<vmem>>, %arg15: memref<64x128xbf16, #tpu.memory_space<vmem>>, %arg16: memref<128x64xbf16, #tpu.memory_space<vmem>>, %arg17: memref<1x9x64xbf16, #tpu.memory_space<vmem>>) attributes {dimension_semantics = [#tpu.dimension_semantics<parallel>], iteration_bounds = array<i64: 2>, scalar_prefetch = 0 : i64, scratch_operands = 0 : i64, tpu.core_type = #tpu.core_type<tc>, window_params = [{transform_indices = @transform_0, window_bounds = array<i64: 1, 9, 64>}, {pipeline_mode = #tpu.pipeline_mode<synchronous>, transform_indices = @transform_1, window_bounds = array<i64: 1, 64>}, {pipeline_mode = #tpu.pipeline_mode<synchronous>, transform_indices = @transform_2, window_bounds = array<i64: 1, 64>}, {pipeline_mode = #tpu.pipeline_mode<synchronous>, transform_indices = @transform_3, window_bounds = array<i64: 2, 64, 32>}, {pipeline_mode = #tpu.pipeline_mode<synchronous>, transform_indices = @transform_4, window_bounds = array<i64: 2, 64, 32>}, {pipeline_mode = #tpu.pipeline_mode<synchronous>, transform_indices = @transform_5, window_bounds = array<i64: 2, 64, 32>}, {pipeline_mode = #tpu.pipeline_mode<synchronous>, transform_indices = @transform_6, window_bounds = array<i64: 2, 64, 32>}, {pipeline_mode = #tpu.pipeline_mode<synchronous>, transform_indices = @transform_7, window_bounds = array<i64: 2, 64, 32>}, {pipeline_mode = #tpu.pipeline_mode<synchronous>, transform_indices = @transform_8, window_bounds = array<i64: 2, 32, 64>}, {pipeline_mode = #tpu.pipeline_mode<synchronous>, transform_indices = @transform_9, window_bounds = array<i64: 9, 32>}, {pipeline_mode = #tpu.pipeline_mode<synchronous>, transform_indices = @transform_10, window_bounds = array<i64: 9, 32>}, {pipeline_mode = #tpu.pipeline_mode<synchronous>, transform_indices = @transform_11, window_bounds = array<i64: 1, 64>}, {pipeline_mode = #tpu.pipeline_mode<synchronous>, transform_indices = @transform_12, window_bounds = array<i64: 1, 64>}, {pipeline_mode = #tpu.pipeline_mode<synchronous>, transform_indices = @transform_13, window_bounds = array<i64: 64, 128>}, {pipeline_mode = #tpu.pipeline_mode<synchronous>, transform_indices = @transform_14, window_bounds = array<i64: 64, 128>}, {pipeline_mode = #tpu.pipeline_mode<synchronous>, transform_indices = @transform_15, window_bounds = array<i64: 128, 64>}, {transform_indices = @transform_16, window_bounds = array<i64: 1, 9, 64>}]} {
    %c0 = arith.constant 0 : index
    %c0_0 = arith.constant 0 : index
    %c0_1 = arith.constant 0 : index
    %0 = vector.load %arg1[%c0, %c0_0, %c0_1] : memref<1x9x64xbf16, #tpu.memory_space<vmem>>, vector<1x9x64xbf16>
    %1 = vector.shape_cast %0 : vector<1x9x64xbf16> to vector<9x64xbf16>
    %2 = arith.extf %1 : vector<9x64xbf16> to vector<9x64xf32>
    %c0_2 = arith.constant 0 : index
    %c0_3 = arith.constant 0 : index
    %3 = vector.load %arg10[%c0_2, %c0_3] : memref<9x32xf32, #tpu.memory_space<vmem>>, vector<9x32xf32>
    %c0_4 = arith.constant 0 : index
    %c0_5 = arith.constant 0 : index
    %4 = vector.load %arg11[%c0_4, %c0_5] : memref<9x32xf32, #tpu.memory_space<vmem>>, vector<9x32xf32>
    %c0_6 = arith.constant 0 : index
    %c0_7 = arith.constant 0 : index
    %5 = vector.load %arg2[%c0_6, %c0_7] : memref<1x64xf32, #tpu.memory_space<vmem>>, vector<1x64xf32>
    %c0_8 = arith.constant 0 : index
    %c0_9 = arith.constant 0 : index
    %6 = vector.load %arg3[%c0_8, %c0_9] : memref<1x64xf32, #tpu.memory_space<vmem>>, vector<1x64xf32>
    %cst = arith.constant dense<0.000000e+00> : vector<9xf32>
    %7 = vector.multi_reduction <add>, %2, %cst [1] : vector<9x64xf32> to vector<9xf32>
    %8 = vector.shape_cast %7 : vector<9xf32> to vector<9x1xf32>
    %cst_10 = arith.constant 6.400000e+01 : f32
    %9 = vector.broadcast %cst_10 : f32 to vector<9x1xf32>
    %10 = arith.divf %8, %9 : vector<9x1xf32>
    %11 = vector.broadcast %10 : vector<9x1xf32> to vector<9x64xf32>
    %12 = arith.subf %2, %11 : vector<9x64xf32>
    %13 = arith.mulf %12, %12 : vector<9x64xf32>
    %cst_11 = arith.constant dense<0.000000e+00> : vector<9xf32>
    %14 = vector.multi_reduction <add>, %13, %cst_11 [1] : vector<9x64xf32> to vector<9xf32>
    %15 = vector.shape_cast %14 : vector<9xf32> to vector<9x1xf32>
    %cst_12 = arith.constant 6.400000e+01 : f32
    %16 = vector.broadcast %cst_12 : f32 to vector<9x1xf32>
    %17 = arith.divf %15, %16 : vector<9x1xf32>
    %18 = vector.broadcast %10 : vector<9x1xf32> to vector<9x64xf32>
    %19 = arith.subf %2, %18 : vector<9x64xf32>
    %cst_13 = arith.constant 9.99999974E-6 : f32
    %20 = vector.broadcast %cst_13 : f32 to vector<9x1xf32>
    %21 = arith.addf %17, %20 : vector<9x1xf32>
    %22 = math.rsqrt %21 : vector<9x1xf32>
    %23 = vector.broadcast %22 : vector<9x1xf32> to vector<9x64xf32>
    %24 = arith.mulf %19, %23 : vector<9x64xf32>
    %25 = vector.broadcast %5 : vector<1x64xf32> to vector<9x64xf32>
    %26 = arith.mulf %24, %25 : vector<9x64xf32>
    %27 = vector.broadcast %6 : vector<1x64xf32> to vector<9x64xf32>
    %28 = arith.addf %26, %27 : vector<9x64xf32>
    %29 = arith.truncf %28 : vector<9x64xf32> to vector<9x64xbf16>
    %cst_14 = arith.constant 0.000000e+00 : f32
    %30 = vector.broadcast %cst_14 : f32 to vector<9x64xf32>
    %c0_15 = arith.constant 0 : index
    %c0_16 = arith.constant 0 : index
    %c0_17 = arith.constant 0 : index
    %31 = vector.load %arg4[%c0_15, %c0_16, %c0_17] : memref<2x64x32xbf16, #tpu.memory_space<vmem>>, vector<1x64x32xbf16>
    %32 = vector.shape_cast %31 : vector<1x64x32xbf16> to vector<64x32xbf16>
    %cst_18 = arith.constant dense<0.000000e+00> : vector<9x32xf32>
    %33 = tpu.matmul %29, %32, %cst_18 {dimension_numbers = #tpu.dot_dimension_numbers<[1], [0], [0], [1], [0, 0, 1, 1], [], []>} : vector<9x64xbf16>, vector<64x32xbf16>, vector<9x32xf32> -> vector<9x32xf32>
    %c0_19 = arith.constant 0 : index
    %c0_20 = arith.constant 0 : index
    %c0_21 = arith.constant 0 : index
    %34 = vector.load %arg5[%c0_19, %c0_20, %c0_21] : memref<2x64x32xbf16, #tpu.memory_space<vmem>>, vector<1x64x32xbf16>
    %35 = vector.shape_cast %34 : vector<1x64x32xbf16> to vector<64x32xbf16>
    %cst_22 = arith.constant dense<0.000000e+00> : vector<9x32xf32>
    %36 = tpu.matmul %29, %35, %cst_22 {dimension_numbers = #tpu.dot_dimension_numbers<[1], [0], [0], [1], [0, 0, 1, 1], [], []>} : vector<9x64xbf16>, vector<64x32xbf16>, vector<9x32xf32> -> vector<9x32xf32>
    %c0_23 = arith.constant 0 : index
    %c0_24 = arith.constant 0 : index
    %c0_25 = arith.constant 0 : index
    %37 = vector.load %arg6[%c0_23, %c0_24, %c0_25] : memref<2x64x32xbf16, #tpu.memory_space<vmem>>, vector<1x64x32xbf16>
    %38 = vector.shape_cast %37 : vector<1x64x32xbf16> to vector<64x32xbf16>
    %cst_26 = arith.constant dense<0.000000e+00> : vector<9x32xf32>
    %39 = tpu.matmul %29, %38, %cst_26 {dimension_numbers = #tpu.dot_dimension_numbers<[1], [0], [0], [1], [0, 0, 1, 1], [], []>} : vector<9x64xbf16>, vector<64x32xbf16>, vector<9x32xf32> -> vector<9x32xf32>
    %c0_27 = arith.constant 0 : index
    %c0_28 = arith.constant 0 : index
    %c0_29 = arith.constant 0 : index
    %40 = vector.load %arg7[%c0_27, %c0_28, %c0_29] : memref<2x64x32xbf16, #tpu.memory_space<vmem>>, vector<1x64x32xbf16>
    %41 = vector.shape_cast %40 : vector<1x64x32xbf16> to vector<64x32xbf16>
    %cst_30 = arith.constant dense<0.000000e+00> : vector<9x32xf32>
    %42 = tpu.matmul %29, %41, %cst_30 {dimension_numbers = #tpu.dot_dimension_numbers<[1], [0], [0], [1], [0, 0, 1, 1], [], []>} : vector<9x64xbf16>, vector<64x32xbf16>, vector<9x32xf32> -> vector<9x32xf32>
    %c0_31 = arith.constant 0 : index
    %c0_32 = arith.constant 0 : index
    %c0_33 = arith.constant 0 : index
    %43 = vector.load %arg8[%c0_31, %c0_32, %c0_33] : memref<2x64x32xbf16, #tpu.memory_space<vmem>>, vector<1x64x32xbf16>
    %44 = vector.shape_cast %43 : vector<1x64x32xbf16> to vector<64x32xbf16>
    %cst_34 = arith.constant dense<0.000000e+00> : vector<9x32xf32>
    %45 = tpu.matmul %29, %44, %cst_34 {dimension_numbers = #tpu.dot_dimension_numbers<[1], [0], [0], [1], [0, 0, 1, 1], [], []>} : vector<9x64xbf16>, vector<64x32xbf16>, vector<9x32xf32> -> vector<9x32xf32>
    %46 = arith.mulf %33, %3 : vector<9x32xf32>
    %47 = arith.mulf %36, %4 : vector<9x32xf32>
    %48 = arith.addf %46, %47 : vector<9x32xf32>
    %49 = arith.truncf %48 : vector<9x32xf32> to vector<9x32xbf16>
    %50 = arith.mulf %39, %3 : vector<9x32xf32>
    %51 = arith.mulf %42, %4 : vector<9x32xf32>
    %52 = arith.addf %50, %51 : vector<9x32xf32>
    %53 = arith.truncf %52 : vector<9x32xf32> to vector<9x32xbf16>
    %54 = arith.truncf %45 : vector<9x32xf32> to vector<9x32xbf16>
    %cst_35 = arith.constant -1.000000e+30 : f32
    %55 = vector.broadcast %cst_35 : f32 to vector<9x1xf32>
    %cst_36 = arith.constant 0.000000e+00 : f32
    %56 = vector.broadcast %cst_36 : f32 to vector<9x1xf32>
    %cst_37 = arith.constant 0.000000e+00 : f32
    %57 = vector.broadcast %cst_37 : f32 to vector<9x32xf32>
    %cst_38 = arith.constant dense<0.000000e+00> : vector<9x9xf32>
    %58 = tpu.matmul %49, %53, %cst_38 {dimension_numbers = #tpu.dot_dimension_numbers<[1], [1], [0], [0], [0, 0, 1, 0], [], []>} : vector<9x32xbf16>, vector<9x32xbf16>, vector<9x9xf32> -> vector<9x9xf32>
    %cst_39 = arith.constant 0.176776692 : f32
    %59 = vector.broadcast %cst_39 : f32 to vector<9x9xf32>
    %60 = arith.mulf %58, %59 : vector<9x9xf32>
    %61 = tpu.iota {dimensions = array<i32: 0>} : vector<9x9xi32>
    %62 = tpu.iota {dimensions = array<i32: 1>} : vector<9x9xi32>
    %c0_i32 = arith.constant 0 : i32
    %63 = vector.broadcast %c0_i32 : i32 to vector<9x9xi32>
    %64 = arith.addi %62, %63 : vector<9x9xi32>
    %65 = arith.cmpi sle, %64, %61 : vector<9x9xi32>
    %cst_40 = arith.constant -1.000000e+30 : f32
    %66 = vector.broadcast %cst_40 : f32 to vector<9x9xf32>
    %67 = arith.select %65, %60, %66 : vector<9x9xi1>, vector<9x9xf32>
    %cst_41 = arith.constant dense<0xFF800000> : vector<9xf32>
    %68 = vector.multi_reduction <maximumf>, %67, %cst_41 [1] : vector<9x9xf32> to vector<9xf32>
    %69 = vector.shape_cast %68 : vector<9xf32> to vector<9x1xf32>
    %70 = arith.maximumf %55, %69 : vector<9x1xf32>
    %71 = arith.subf %55, %70 : vector<9x1xf32>
    %72 = math.exp %71 : vector<9x1xf32>
    %73 = vector.broadcast %70 : vector<9x1xf32> to vector<9x9xf32>
    %74 = arith.subf %67, %73 : vector<9x9xf32>
    %75 = math.exp %74 : vector<9x9xf32>
    %76 = arith.mulf %72, %56 : vector<9x1xf32>
    %cst_42 = arith.constant dense<0.000000e+00> : vector<9xf32>
    %77 = vector.multi_reduction <add>, %75, %cst_42 [1] : vector<9x9xf32> to vector<9xf32>
    %78 = vector.shape_cast %77 : vector<9xf32> to vector<9x1xf32>
    %79 = arith.addf %76, %78 : vector<9x1xf32>
    %80 = vector.broadcast %72 : vector<9x1xf32> to vector<9x32xf32>
    %81 = arith.mulf %80, %57 : vector<9x32xf32>
    %82 = arith.truncf %75 : vector<9x9xf32> to vector<9x9xbf16>
    %cst_43 = arith.constant dense<0.000000e+00> : vector<9x32xf32>
    %83 = tpu.matmul %82, %54, %cst_43 {dimension_numbers = #tpu.dot_dimension_numbers<[1], [0], [0], [1], [0, 0, 1, 1], [], []>} : vector<9x9xbf16>, vector<9x32xbf16>, vector<9x32xf32> -> vector<9x32xf32>
    %84 = arith.addf %81, %83 : vector<9x32xf32>
    %85 = tpu.reciprocal %79 {approx = true} : vector<9x1xf32> -> vector<9x1xf32>
    %86 = vector.broadcast %85 : vector<9x1xf32> to vector<9x32xf32>
    %87 = arith.mulf %84, %86 : vector<9x32xf32>
    %88 = arith.truncf %87 : vector<9x32xf32> to vector<9x32xbf16>
    %c0_44 = arith.constant 0 : index
    %c0_45 = arith.constant 0 : index
    %c0_46 = arith.constant 0 : index
    %89 = vector.load %arg9[%c0_44, %c0_45, %c0_46] : memref<2x32x64xbf16, #tpu.memory_space<vmem>>, vector<1x32x64xbf16>
    %90 = vector.shape_cast %89 : vector<1x32x64xbf16> to vector<32x64xbf16>
    %cst_47 = arith.constant dense<0.000000e+00> : vector<9x64xf32>
    %91 = tpu.matmul %88, %90, %cst_47 {dimension_numbers = #tpu.dot_dimension_numbers<[1], [0], [0], [1], [0, 0, 1, 1], [], []>} : vector<9x32xbf16>, vector<32x64xbf16>, vector<9x64xf32> -> vector<9x64xf32>
    %92 = arith.addf %30, %91 : vector<9x64xf32>
    %c1 = arith.constant 1 : index
    %c0_48 = arith.constant 0 : index
    %c0_49 = arith.constant 0 : index
    %93 = vector.load %arg4[%c1, %c0_48, %c0_49] : memref<2x64x32xbf16, #tpu.memory_space<vmem>>, vector<1x64x32xbf16>
    %94 = vector.shape_cast %93 : vector<1x64x32xbf16> to vector<64x32xbf16>
    %cst_50 = arith.constant dense<0.000000e+00> : vector<9x32xf32>
    %95 = tpu.matmul %29, %94, %cst_50 {dimension_numbers = #tpu.dot_dimension_numbers<[1], [0], [0], [1], [0, 0, 1, 1], [], []>} : vector<9x64xbf16>, vector<64x32xbf16>, vector<9x32xf32> -> vector<9x32xf32>
    %c1_51 = arith.constant 1 : index
    %c0_52 = arith.constant 0 : index
    %c0_53 = arith.constant 0 : index
    %96 = vector.load %arg5[%c1_51, %c0_52, %c0_53] : memref<2x64x32xbf16, #tpu.memory_space<vmem>>, vector<1x64x32xbf16>
    %97 = vector.shape_cast %96 : vector<1x64x32xbf16> to vector<64x32xbf16>
    %cst_54 = arith.constant dense<0.000000e+00> : vector<9x32xf32>
    %98 = tpu.matmul %29, %97, %cst_54 {dimension_numbers = #tpu.dot_dimension_numbers<[1], [0], [0], [1], [0, 0, 1, 1], [], []>} : vector<9x64xbf16>, vector<64x32xbf16>, vector<9x32xf32> -> vector<9x32xf32>
    %c1_55 = arith.constant 1 : index
    %c0_56 = arith.constant 0 : index
    %c0_57 = arith.constant 0 : index
    %99 = vector.load %arg6[%c1_55, %c0_56, %c0_57] : memref<2x64x32xbf16, #tpu.memory_space<vmem>>, vector<1x64x32xbf16>
    %100 = vector.shape_cast %99 : vector<1x64x32xbf16> to vector<64x32xbf16>
    %cst_58 = arith.constant dense<0.000000e+00> : vector<9x32xf32>
    %101 = tpu.matmul %29, %100, %cst_58 {dimension_numbers = #tpu.dot_dimension_numbers<[1], [0], [0], [1], [0, 0, 1, 1], [], []>} : vector<9x64xbf16>, vector<64x32xbf16>, vector<9x32xf32> -> vector<9x32xf32>
    %c1_59 = arith.constant 1 : index
    %c0_60 = arith.constant 0 : index
    %c0_61 = arith.constant 0 : index
    %102 = vector.load %arg7[%c1_59, %c0_60, %c0_61] : memref<2x64x32xbf16, #tpu.memory_space<vmem>>, vector<1x64x32xbf16>
    %103 = vector.shape_cast %102 : vector<1x64x32xbf16> to vector<64x32xbf16>
    %cst_62 = arith.constant dense<0.000000e+00> : vector<9x32xf32>
    %104 = tpu.matmul %29, %103, %cst_62 {dimension_numbers = #tpu.dot_dimension_numbers<[1], [0], [0], [1], [0, 0, 1, 1], [], []>} : vector<9x64xbf16>, vector<64x32xbf16>, vector<9x32xf32> -> vector<9x32xf32>
    %c1_63 = arith.constant 1 : index
    %c0_64 = arith.constant 0 : index
    %c0_65 = arith.constant 0 : index
    %105 = vector.load %arg8[%c1_63, %c0_64, %c0_65] : memref<2x64x32xbf16, #tpu.memory_space<vmem>>, vector<1x64x32xbf16>
    %106 = vector.shape_cast %105 : vector<1x64x32xbf16> to vector<64x32xbf16>
    %cst_66 = arith.constant dense<0.000000e+00> : vector<9x32xf32>
    %107 = tpu.matmul %29, %106, %cst_66 {dimension_numbers = #tpu.dot_dimension_numbers<[1], [0], [0], [1], [0, 0, 1, 1], [], []>} : vector<9x64xbf16>, vector<64x32xbf16>, vector<9x32xf32> -> vector<9x32xf32>
    %108 = arith.mulf %95, %3 : vector<9x32xf32>
    %109 = arith.mulf %98, %4 : vector<9x32xf32>
    %110 = arith.addf %108, %109 : vector<9x32xf32>
    %111 = arith.truncf %110 : vector<9x32xf32> to vector<9x32xbf16>
    %112 = arith.mulf %101, %3 : vector<9x32xf32>
    %113 = arith.mulf %104, %4 : vector<9x32xf32>
    %114 = arith.addf %112, %113 : vector<9x32xf32>
    %115 = arith.truncf %114 : vector<9x32xf32> to vector<9x32xbf16>
    %116 = arith.truncf %107 : vector<9x32xf32> to vector<9x32xbf16>
    %cst_67 = arith.constant -1.000000e+30 : f32
    %117 = vector.broadcast %cst_67 : f32 to vector<9x1xf32>
    %cst_68 = arith.constant 0.000000e+00 : f32
    %118 = vector.broadcast %cst_68 : f32 to vector<9x1xf32>
    %cst_69 = arith.constant 0.000000e+00 : f32
    %119 = vector.broadcast %cst_69 : f32 to vector<9x32xf32>
    %cst_70 = arith.constant dense<0.000000e+00> : vector<9x9xf32>
    %120 = tpu.matmul %111, %115, %cst_70 {dimension_numbers = #tpu.dot_dimension_numbers<[1], [1], [0], [0], [0, 0, 1, 0], [], []>} : vector<9x32xbf16>, vector<9x32xbf16>, vector<9x9xf32> -> vector<9x9xf32>
    %cst_71 = arith.constant 0.176776692 : f32
    %121 = vector.broadcast %cst_71 : f32 to vector<9x9xf32>
    %122 = arith.mulf %120, %121 : vector<9x9xf32>
    %123 = tpu.iota {dimensions = array<i32: 0>} : vector<9x9xi32>
    %124 = tpu.iota {dimensions = array<i32: 1>} : vector<9x9xi32>
    %c0_i32_72 = arith.constant 0 : i32
    %125 = vector.broadcast %c0_i32_72 : i32 to vector<9x9xi32>
    %126 = arith.addi %124, %125 : vector<9x9xi32>
    %127 = arith.cmpi sle, %126, %123 : vector<9x9xi32>
    %cst_73 = arith.constant -1.000000e+30 : f32
    %128 = vector.broadcast %cst_73 : f32 to vector<9x9xf32>
    %129 = arith.select %127, %122, %128 : vector<9x9xi1>, vector<9x9xf32>
    %cst_74 = arith.constant dense<0xFF800000> : vector<9xf32>
    %130 = vector.multi_reduction <maximumf>, %129, %cst_74 [1] : vector<9x9xf32> to vector<9xf32>
    %131 = vector.shape_cast %130 : vector<9xf32> to vector<9x1xf32>
    %132 = arith.maximumf %117, %131 : vector<9x1xf32>
    %133 = arith.subf %117, %132 : vector<9x1xf32>
    %134 = math.exp %133 : vector<9x1xf32>
    %135 = vector.broadcast %132 : vector<9x1xf32> to vector<9x9xf32>
    %136 = arith.subf %129, %135 : vector<9x9xf32>
    %137 = math.exp %136 : vector<9x9xf32>
    %138 = arith.mulf %134, %118 : vector<9x1xf32>
    %cst_75 = arith.constant dense<0.000000e+00> : vector<9xf32>
    %139 = vector.multi_reduction <add>, %137, %cst_75 [1] : vector<9x9xf32> to vector<9xf32>
    %140 = vector.shape_cast %139 : vector<9xf32> to vector<9x1xf32>
    %141 = arith.addf %138, %140 : vector<9x1xf32>
    %142 = vector.broadcast %134 : vector<9x1xf32> to vector<9x32xf32>
    %143 = arith.mulf %142, %119 : vector<9x32xf32>
    %144 = arith.truncf %137 : vector<9x9xf32> to vector<9x9xbf16>
    %cst_76 = arith.constant dense<0.000000e+00> : vector<9x32xf32>
    %145 = tpu.matmul %144, %116, %cst_76 {dimension_numbers = #tpu.dot_dimension_numbers<[1], [0], [0], [1], [0, 0, 1, 1], [], []>} : vector<9x9xbf16>, vector<9x32xbf16>, vector<9x32xf32> -> vector<9x32xf32>
    %146 = arith.addf %143, %145 : vector<9x32xf32>
    %147 = tpu.reciprocal %141 {approx = true} : vector<9x1xf32> -> vector<9x1xf32>
    %148 = vector.broadcast %147 : vector<9x1xf32> to vector<9x32xf32>
    %149 = arith.mulf %146, %148 : vector<9x32xf32>
    %150 = arith.truncf %149 : vector<9x32xf32> to vector<9x32xbf16>
    %c1_77 = arith.constant 1 : index
    %c0_78 = arith.constant 0 : index
    %c0_79 = arith.constant 0 : index
    %151 = vector.load %arg9[%c1_77, %c0_78, %c0_79] : memref<2x32x64xbf16, #tpu.memory_space<vmem>>, vector<1x32x64xbf16>
    %152 = vector.shape_cast %151 : vector<1x32x64xbf16> to vector<32x64xbf16>
    %cst_80 = arith.constant dense<0.000000e+00> : vector<9x64xf32>
    %153 = tpu.matmul %150, %152, %cst_80 {dimension_numbers = #tpu.dot_dimension_numbers<[1], [0], [0], [1], [0, 0, 1, 1], [], []>} : vector<9x32xbf16>, vector<32x64xbf16>, vector<9x64xf32> -> vector<9x64xf32>
    %154 = arith.addf %92, %153 : vector<9x64xf32>
    %155 = arith.addf %2, %154 : vector<9x64xf32>
    %c0_81 = arith.constant 0 : index
    %c0_82 = arith.constant 0 : index
    %156 = vector.load %arg12[%c0_81, %c0_82] : memref<1x64xf32, #tpu.memory_space<vmem>>, vector<1x64xf32>
    %c0_83 = arith.constant 0 : index
    %c0_84 = arith.constant 0 : index
    %157 = vector.load %arg13[%c0_83, %c0_84] : memref<1x64xf32, #tpu.memory_space<vmem>>, vector<1x64xf32>
    %cst_85 = arith.constant dense<0.000000e+00> : vector<9xf32>
    %158 = vector.multi_reduction <add>, %155, %cst_85 [1] : vector<9x64xf32> to vector<9xf32>
    %159 = vector.shape_cast %158 : vector<9xf32> to vector<9x1xf32>
    %cst_86 = arith.constant 6.400000e+01 : f32
    %160 = vector.broadcast %cst_86 : f32 to vector<9x1xf32>
    %161 = arith.divf %159, %160 : vector<9x1xf32>
    %162 = vector.broadcast %161 : vector<9x1xf32> to vector<9x64xf32>
    %163 = arith.subf %155, %162 : vector<9x64xf32>
    %164 = arith.mulf %163, %163 : vector<9x64xf32>
    %cst_87 = arith.constant dense<0.000000e+00> : vector<9xf32>
    %165 = vector.multi_reduction <add>, %164, %cst_87 [1] : vector<9x64xf32> to vector<9xf32>
    %166 = vector.shape_cast %165 : vector<9xf32> to vector<9x1xf32>
    %cst_88 = arith.constant 6.400000e+01 : f32
    %167 = vector.broadcast %cst_88 : f32 to vector<9x1xf32>
    %168 = arith.divf %166, %167 : vector<9x1xf32>
    %169 = vector.broadcast %161 : vector<9x1xf32> to vector<9x64xf32>
    %170 = arith.subf %155, %169 : vector<9x64xf32>
    %cst_89 = arith.constant 9.99999974E-6 : f32
    %171 = vector.broadcast %cst_89 : f32 to vector<9x1xf32>
    %172 = arith.addf %168, %171 : vector<9x1xf32>
    %173 = math.rsqrt %172 : vector<9x1xf32>
    %174 = vector.broadcast %173 : vector<9x1xf32> to vector<9x64xf32>
    %175 = arith.mulf %170, %174 : vector<9x64xf32>
    %176 = vector.broadcast %156 : vector<1x64xf32> to vector<9x64xf32>
    %177 = arith.mulf %175, %176 : vector<9x64xf32>
    %178 = vector.broadcast %157 : vector<1x64xf32> to vector<9x64xf32>
    %179 = arith.addf %177, %178 : vector<9x64xf32>
    %180 = arith.truncf %179 : vector<9x64xf32> to vector<9x64xbf16>
    %c0_90 = arith.constant 0 : index
    %c0_91 = arith.constant 0 : index
    %181 = vector.load %arg14[%c0_90, %c0_91] : memref<64x128xbf16, #tpu.memory_space<vmem>>, vector<64x128xbf16>
    %cst_92 = arith.constant dense<0.000000e+00> : vector<9x128xf32>
    %182 = tpu.matmul %180, %181, %cst_92 {dimension_numbers = #tpu.dot_dimension_numbers<[1], [0], [0], [1], [0, 0, 1, 1], [], []>} : vector<9x64xbf16>, vector<64x128xbf16>, vector<9x128xf32> -> vector<9x128xf32>
    %c0_93 = arith.constant 0 : index
    %c0_94 = arith.constant 0 : index
    %183 = vector.load %arg15[%c0_93, %c0_94] : memref<64x128xbf16, #tpu.memory_space<vmem>>, vector<64x128xbf16>
    %cst_95 = arith.constant dense<0.000000e+00> : vector<9x128xf32>
    %184 = tpu.matmul %180, %183, %cst_95 {dimension_numbers = #tpu.dot_dimension_numbers<[1], [0], [0], [1], [0, 0, 1, 1], [], []>} : vector<9x64xbf16>, vector<64x128xbf16>, vector<9x128xf32> -> vector<9x128xf32>
    %185 = arith.mulf %182, %184 : vector<9x128xf32>
    %186 = arith.negf %184 : vector<9x128xf32>
    %187 = math.exp %186 : vector<9x128xf32>
    %cst_96 = arith.constant 1.000000e+00 : f32
    %188 = vector.broadcast %cst_96 : f32 to vector<9x128xf32>
    %189 = arith.addf %188, %187 : vector<9x128xf32>
    %190 = arith.divf %188, %189 : vector<9x128xf32>
    %191 = arith.mulf %185, %190 : vector<9x128xf32>
    %192 = arith.truncf %191 : vector<9x128xf32> to vector<9x128xbf16>
    %c0_97 = arith.constant 0 : index
    %c0_98 = arith.constant 0 : index
    %193 = vector.load %arg16[%c0_97, %c0_98] : memref<128x64xbf16, #tpu.memory_space<vmem>>, vector<128x64xbf16>
    %cst_99 = arith.constant dense<0.000000e+00> : vector<9x64xf32>
    %194 = tpu.matmul %192, %193, %cst_99 {dimension_numbers = #tpu.dot_dimension_numbers<[1], [0], [0], [1], [0, 0, 1, 1], [], []>} : vector<9x128xbf16>, vector<128x64xbf16>, vector<9x64xf32> -> vector<9x64xf32>
    %195 = arith.addf %155, %194 : vector<9x64xf32>
    %196 = arith.truncf %195 : vector<9x64xf32> to vector<9x64xbf16>
    %c0_100 = arith.constant 0 : index
    %c0_101 = arith.constant 0 : index
    %c0_102 = arith.constant 0 : index
    %197 = vector.load %arg17[%c0_100, %c0_101, %c0_102] : memref<1x9x64xbf16, #tpu.memory_space<vmem>>, vector<1x9x64xbf16>
    %198 = vector.shape_cast %197 : vector<1x9x64xbf16> to vector<9x64xbf16>
    %199 = vector.shape_cast %196 : vector<9x64xbf16> to vector<1x9x64xbf16>
    tpu.vector_store %arg17[%c0_100, %c0_101, %c0_102], %199 {strides = array<i32>} : memref<1x9x64xbf16, #tpu.memory_space<vmem>>, vector<1x9x64xbf16>,
    return
  }
  func.func @transform_0(%arg0: i32) -> (i32, i32, i32) {
    %c0_i32 = arith.constant 0 : i32
    %c0_i32_0 = arith.constant 0 : i32
    %c0_i32_1 = arith.constant 0 : i32
    return %arg0, %c0_i32, %c0_i32_0 : i32, i32, i32
  }
  func.func @transform_1(%arg0: i32) -> (i32, i32) {
    %c0_i32 = arith.constant 0 : i32
    %c0_i32_0 = arith.constant 0 : i32
    %c0_i32_1 = arith.constant 0 : i32
    return %c0_i32, %c0_i32_0 : i32, i32
  }
  func.func @transform_2(%arg0: i32) -> (i32, i32) {
    %c0_i32 = arith.constant 0 : i32
    %c0_i32_0 = arith.constant 0 : i32
    %c0_i32_1 = arith.constant 0 : i32
    return %c0_i32, %c0_i32_0 : i32, i32
  }
  func.func @transform_3(%arg0: i32) -> (i32, i32, i32) {
    %c0_i32 = arith.constant 0 : i32
    %c0_i32_0 = arith.constant 0 : i32
    %c0_i32_1 = arith.constant 0 : i32
    %c0_i32_2 = arith.constant 0 : i32
    return %c0_i32, %c0_i32_0, %c0_i32_1 : i32, i32, i32
  }
  func.func @transform_4(%arg0: i32) -> (i32, i32, i32) {
    %c0_i32 = arith.constant 0 : i32
    %c0_i32_0 = arith.constant 0 : i32
    %c0_i32_1 = arith.constant 0 : i32
    %c0_i32_2 = arith.constant 0 : i32
    return %c0_i32, %c0_i32_0, %c0_i32_1 : i32, i32, i32
  }
  func.func @transform_5(%arg0: i32) -> (i32, i32, i32) {
    %c0_i32 = arith.constant 0 : i32
    %c0_i32_0 = arith.constant 0 : i32
    %c0_i32_1 = arith.constant 0 : i32
    %c0_i32_2 = arith.constant 0 : i32
    return %c0_i32, %c0_i32_0, %c0_i32_1 : i32, i32, i32
  }
  func.func @transform_6(%arg0: i32) -> (i32, i32, i32) {
    %c0_i32 = arith.constant 0 : i32
    %c0_i32_0 = arith.constant 0 : i32
    %c0_i32_1 = arith.constant 0 : i32
    %c0_i32_2 = arith.constant 0 : i32
    return %c0_i32, %c0_i32_0, %c0_i32_1 : i32, i32, i32
  }
  func.func @transform_7(%arg0: i32) -> (i32, i32, i32) {
    %c0_i32 = arith.constant 0 : i32
    %c0_i32_0 = arith.constant 0 : i32
    %c0_i32_1 = arith.constant 0 : i32
    %c0_i32_2 = arith.constant 0 : i32
    return %c0_i32, %c0_i32_0, %c0_i32_1 : i32, i32, i32
  }
  func.func @transform_8(%arg0: i32) -> (i32, i32, i32) {
    %c0_i32 = arith.constant 0 : i32
    %c0_i32_0 = arith.constant 0 : i32
    %c0_i32_1 = arith.constant 0 : i32
    %c0_i32_2 = arith.constant 0 : i32
    return %c0_i32, %c0_i32_0, %c0_i32_1 : i32, i32, i32
  }
  func.func @transform_9(%arg0: i32) -> (i32, i32) {
    %c0_i32 = arith.constant 0 : i32
    %c0_i32_0 = arith.constant 0 : i32
    %c0_i32_1 = arith.constant 0 : i32
    return %c0_i32, %c0_i32_0 : i32, i32
  }
  func.func @transform_10(%arg0: i32) -> (i32, i32) {
    %c0_i32 = arith.constant 0 : i32
    %c0_i32_0 = arith.constant 0 : i32
    %c0_i32_1 = arith.constant 0 : i32
    return %c0_i32, %c0_i32_0 : i32, i32
  }
  func.func @transform_11(%arg0: i32) -> (i32, i32) {
    %c0_i32 = arith.constant 0 : i32
    %c0_i32_0 = arith.constant 0 : i32
    %c0_i32_1 = arith.constant 0 : i32
    return %c0_i32, %c0_i32_0 : i32, i32
  }
  func.func @transform_12(%arg0: i32) -> (i32, i32) {
    %c0_i32 = arith.constant 0 : i32
    %c0_i32_0 = arith.constant 0 : i32
    %c0_i32_1 = arith.constant 0 : i32
    return %c0_i32, %c0_i32_0 : i32, i32
  }
  func.func @transform_13(%arg0: i32) -> (i32, i32) {
    %c0_i32 = arith.constant 0 : i32
    %c0_i32_0 = arith.constant 0 : i32
    %c0_i32_1 = arith.constant 0 : i32
    return %c0_i32, %c0_i32_0 : i32, i32
  }
  func.func @transform_14(%arg0: i32) -> (i32, i32) {
    %c0_i32 = arith.constant 0 : i32
    %c0_i32_0 = arith.constant 0 : i32
    %c0_i32_1 = arith.constant 0 : i32
    return %c0_i32, %c0_i32_0 : i32, i32
  }
  func.func @transform_15(%arg0: i32) -> (i32, i32) {
    %c0_i32 = arith.constant 0 : i32
    %c0_i32_0 = arith.constant 0 : i32
    %c0_i32_1 = arith.constant 0 : i32
    return %c0_i32, %c0_i32_0 : i32, i32
  }
  func.func @transform_16(%arg0: i32) -> (i32, i32, i32) {
    %c0_i32 = arith.constant 0 : i32
    %c0_i32_0 = arith.constant 0 : i32
    %c0_i32_1 = arith.constant 0 : i32
    return %arg0, %c0_i32, %c0_i32_0 : i32, i32, i32
  }
}

</mosaic_0001>

<llo_original>
// kernel: transformer_forward.4
$region0: #{transformer_forward.4}
  #allocation0 [shape = 'u32[]', space=smem, size = 0x4, offset = 0x4, fixed_abs, tag = 'smem constant byte address 0x4 - core index']
  #allocation1 [shape = 'u32[144,128]{1,0:T(1,128)}', space=vmem, size = 0x12000, scoped, tag = 'internal scratch']
  %s0 = inlined_call_operand.hbm [shape: s32[2,8,1], index: 0, kind: input, shape index: {}]
  %s1 = inlined_call_operand.hbm [shape: bf16[768,64], index: 1, kind: input, shape index: {}]
  %s2 = inlined_call_operand.hbm [shape: bf16[2,8,64], index: 2, kind: output, shape index: {}]
  %s3 = sld [smem:[#allocation0]]
  $region49: #{transformer_forward.4} parent=0
    _
  %s5 = ssub.s32 1, %s3
  %s6 = scalar_select 0, %s5, %s3
  $region1: #{transformer_forward.4} parent=0
    #allocation2 [shape = 'u8[8192]{0}', space=vmem, size = 0x2000, scoped, tag = 'input window, operand 0']
    #allocation3 [shape = 's32[2]{0}', space=sflag, size = 0x8, scoped, tag = 'scoped memory for transformer_forward.4']
    #allocation4 [shape = 's32[2]{0}', space=sflag, size = 0x8, scoped, tag = 'scoped memory for transformer_forward.4']
    #allocation5 [shape = 'u8[196608]{0}', space=vmem, size = 0x30000, scoped, tag = 'input window, operand 1, single buffered']
    #allocation6 [shape = 's32[1]{0}', space=sflag, size = 0x4, scoped, tag = 'scoped memory for transformer_forward.4']
    #allocation7 [shape = 'u8[4096]{0}', space=vmem, size = 0x1000, scoped, tag = 'output window, operand 0']
    %7 = vsyncpa [#allocation3], 0
    %s8 = scalar_lea.sflag [#allocation3], 1
    %9 = vsyncpa %s8, 0
    %10 = vsyncpa [#allocation6], 0
    %11 = vsyncpa [#allocation4], 0
    %s12 = scalar_lea.sflag [#allocation4], 1
    %13 = vsyncpa %s12, 0
    loop: start=0, step=1, limit=4
    $region2: #{transformer_forward.4} parent=1 // loop_pre_header
      _
    $region3: #{transformer_forward.4} parent=1 // loop_header
      %s15 = sphi 0, %s19
      %p16 = scmp.ge.s32.totalorder %s15, 4
      %s25 = sphi 0, %s27
      %s28 = sphi 0, %s25
      %s29 = sphi 0, %s28
      %s45 = sphi 0, %s29
      %s49 = sphi 0, %s49
      %s51 = sphi 0, %s49
      %s52 = sphi 0, %s51
      %s66 = sphi 0, %s52
      %s72 = sphi 0, %s74
      %s75 = sphi 0, %s72
      %s76 = sphi 0, %s75
      %s92 = sphi 0, %s76
    $region4: #{transformer_forward.4} parent=1 // loop_header_branch
      %18 = sbr.rel (%p16) target = $region8
    $region5: #{transformer_forward.4} parent=1 // loop_body
      %s20 = ssub.s32 %s15, 1
      %s21 = ssub.s32 %s15, 2
      %s22 = sadd.s32 %s15, 1
      %s23 = ssub.s32 %s15, %s22
      %p24 = scmp.eq.s32.totalorder %s23, 0
      %s26 = sadd.s32 %s25, 1
      %s27 = scalar_select %p24, %s25, %s26
      %p30 = pneg %p24
      %p31 = scmp.eq.s32.totalorder %s15, 1
      %p32 = por %p30, %p31
      %p33 = scmp.ne.s32.totalorder %s25, %s28
      %p34 = scmp.eq.s32.totalorder %s15, 0
      %p35 = por %p33, %p34
      %p36 = scmp.ne.s32.totalorder %s25, %s28
      %p37 = scmp.eq.s32.totalorder %s20, 1
      %p38 = por %p36, %p37
      %p39 = scmp.ne.s32.totalorder %s28, %s29
      %p40 = scmp.eq.s32.totalorder %s20, 0
      %p41 = por %p39, %p40
      %p42 = scmp.ne.s32.totalorder %s28, %s29
      %p43 = scmp.eq.s32.totalorder %s21, 1
      %p44 = por %p42, %p43
      %p46 = scmp.ne.s32.totalorder %s29, %s45
      %p47 = scmp.eq.s32.totalorder %s21, 0
      %p48 = por %p46, %p47
      %s50 = sadd.s32 %s49, 1
      %p53 = scmp.eq.s32.totalorder %s15, 1
      %p54 = scmp.ne.s32.totalorder %s49, %s51
      %p55 = scmp.eq.s32.totalorder %s15, 0
      %p56 = por %p54, %p55
      %p57 = scmp.ne.s32.totalorder %s49, %s51
      %p58 = scmp.eq.s32.totalorder %s20, 1
      %p59 = por %p57, %p58
      %p60 = scmp.ne.s32.totalorder %s51, %s52
      %p61 = scmp.eq.s32.totalorder %s20, 0
      %p62 = por %p60, %p61
      %p63 = scmp.ne.s32.totalorder %s51, %s52
      %p64 = scmp.eq.s32.totalorder %s21, 1
      %p65 = por %p63, %p64
      %p67 = scmp.ne.s32.totalorder %s52, %s66
      %p68 = scmp.eq.s32.totalorder %s21, 0
      %p69 = por %p67, %p68
      %s70 = ssub.s32 %s15, %s22
      %p71 = scmp.eq.s32.totalorder %s70, 0
      %s73 = sadd.s32 %s72, 1
      %s74 = scalar_select %p71, %s72, %s73
      %p77 = pneg %p71
      %p78 = scmp.eq.s32.totalorder %s15, 1
      %p79 = por %p77, %p78
      %p80 = scmp.ne.s32.totalorder %s72, %s75
      %p81 = scmp.eq.s32.totalorder %s15, 0
      %p82 = por %p80, %p81
      %p83 = scmp.ne.s32.totalorder %s72, %s75
      %p84 = scmp.eq.s32.totalorder %s20, 1
      %p85 = por %p83, %p84
      %p86 = scmp.ne.s32.totalorder %s75, %s76
      %p87 = scmp.eq.s32.totalorder %s20, 0
      %p88 = por %p86, %p87
      %p89 = scmp.ne.s32.totalorder %s75, %s76
      %p90 = scmp.eq.s32.totalorder %s21, 1
      %p91 = por %p89, %p90
      %p93 = scmp.ne.s32.totalorder %s76, %s92
      %p94 = scmp.eq.s32.totalorder %s21, 0
      %p95 = por %p93, %p94
      %p96 = scmp.le.s32.totalorder 1, %s15
      %p97 = scmp.lt.s32.totalorder %s15, 3
      %p98 = pnand %p96, %p97
      %p99 = pneg %p98
      // Predicated region
      $region9: #{transformer_forward.4} parent=5 // pred_check
        _
      $region10: #{transformer_forward.4} parent=5 // pred_check_branch
        %101 = sbr.rel (%p98) target = $region12
      $region11: #{transformer_forward.4} parent=5 // pred_region
        %s102 = ssub.s32 %s15, 1
        // Predicated region
        $region13: #{transformer_forward.4} parent=11 // pred_check
          %p103 = pneg %p62
        $region14: #{transformer_forward.4} parent=11 // pred_check_branch
          %105 = sbr.rel (%p103) target = $region16
        $region15: #{transformer_forward.4} parent=11 // pred_region
          %s107 = ssub.s32 6144, 6144
          %108 = vsyncadd [#allocation6], %s107
          %s109 = sshll.u32 [#allocation5], 4
          %s110 = int_to_ptr.vmem [resolvable:$true] %s109
          %115 = dma.hbm_to_vmem [thread:$0]  %s1, 6144, %s110, [#allocation6], 64, 64, 4
        $region16: #{transformer_forward.4} parent=11 // pred_fallthru
          _
      $region12: #{transformer_forward.4} parent=5 // pred_fallthru
        _
      %p116 = scmp.lt.s32.totalorder %s15, 2
      // Predicated region
      $region17: #{transformer_forward.4} parent=5 // pred_check
        %p117 = pneg %p116
      $region18: #{transformer_forward.4} parent=5 // pred_check_branch
        %119 = sbr.rel (%p117) target = $region20
      $region19: #{transformer_forward.4} parent=5 // pred_region
        // Predicated region
        $region21: #{transformer_forward.4} parent=19 // pred_check
          %p120 = pneg %p35
        $region22: #{transformer_forward.4} parent=19 // pred_check_branch
          %122 = sbr.rel (%p120) target = $region24
        $region23: #{transformer_forward.4} parent=19 // pred_region
          %s123 = sand.u32 %s25, 1
          %s124 = scalar_lea.sflag [#allocation3], %s123
          %s125 = sand.u32 %s25, 1
          %s126 = smul.addr %s125, 8
          %s127 = scalar_lea.vmem [#allocation2], %s126
          %s129 = ssub.s32 128, 128
          %130 = vsyncadd %s124, %s129
          %s131 = smul.addr %s15, 128
          %s132 = scalar_lea.hbm %s0, %s131
          %s134 = sshll.u32 %s127, 4
          %s135 = int_to_ptr.vmem [resolvable:$true] %s134
          %137 = dma.hbm_to_vmem [thread:$0]  %s132, 128, %s135, %s124
        $region24: #{transformer_forward.4} parent=19 // pred_fallthru
          _
      $region20: #{transformer_forward.4} parent=5 // pred_fallthru
        _
      %p138 = scmp.le.s32.totalorder 1, %s15
      %p139 = scmp.lt.s32.totalorder %s15, 3
      %p140 = pnand %p138, %p139
      %p141 = pneg %p140
      // Predicated region
      $region25: #{transformer_forward.4} parent=5 // pred_check
        _
      $region26: #{transformer_forward.4} parent=5 // pred_check_branch
        %143 = sbr.rel (%p140) target = $region28
      $region27: #{transformer_forward.4} parent=5 // pred_region
        %s144 = ssub.s32 %s15, 1
        %s145 = sand.u32 %s28, 1
        %s146 = scalar_lea.sflag [#allocation3], %s145
        %s147 = sand.u32 %s28, 1
        %s148 = smul.addr %s147, 8
        %s149 = scalar_lea.vmem [#allocation2], %s148
        // Predicated region
        $region29: #{transformer_forward.4} parent=27 // pred_check
          %p150 = pneg %p41
        $region30: #{transformer_forward.4} parent=27 // pred_check_branch
          %152 = sbr.rel (%p150) target = $region32
        $region31: #{transformer_forward.4} parent=27 // pred_region
          %153 = dma.done %s146, 128
        $region32: #{transformer_forward.4} parent=27 // pred_fallthru
          _
        // Predicated region
        $region33: #{transformer_forward.4} parent=27 // pred_check
          %p154 = pneg %p62
        $region34: #{transformer_forward.4} parent=27 // pred_check_branch
          %156 = sbr.rel (%p154) target = $region36
        $region35: #{transformer_forward.4} parent=27 // pred_region
          %157 = dma.done [#allocation6], 6144
        $region36: #{transformer_forward.4} parent=27 // pred_fallthru
          _
        %s158 = sand.u32 %s28, 1
        %s159 = scalar_lea.sflag [#allocation3], %s158
        %s160 = sand.u32 %s28, 1
        %s161 = smul.addr %s160, 8
        %s162 = scalar_lea.vmem [#allocation2], %s161
        %p163 = pneg %p41
        %p164 = pneg %p38
        %p165 = pneg %p62
        %p166 = pneg %p59
        %p167 = pneg %p88
        %p168 = pneg %p85
        %s169 = sand.u32 %s75, 1
        %s170 = scalar_lea.sflag [#allocation4], %s169
        %s171 = sand.u32 %s75, 1
        %s172 = smul.addr %s171, 4
        %s173 = scalar_lea.vmem [#allocation7], %s172
        %v175 = vld [vmem:[%s149] sm:$0xff]
        %v176 = vlaneseq
        %v177 = vshrl.u32 %v176, 7
        %v178 = vlaneseq
        %v179 = vand.u32 %v178, 127
        %v180 = vadd.s32 %v179, 128
        %v181 = vadd.s32 %v179, 256
        %v182 = vadd.s32 %v179, 384
        %v183 = vadd.s32 %v179, 512
        %v184 = vadd.s32 %v179, 640
        %vm185 = vcmp.lt.s32.totalorder %v177, 0
        %v186 = vsub.s32 0, %v177
        %v187 = vsel %vm185, %v186, %v177
        %v188 = vmul.u32.u64.compose %v187, 2863311531
        %v189 = vextract.low.u32 %v188
        %v190 = vextract.high.u32 %v188
        %v191 = vshrl.u32 %v190, 1
        %v192 = vmul.u32 %v191, 3
        %v193 = vsub.s32 %v187, %v192
        %v194 = vsub.s32 0, %v193
        %v195 = vsel %vm185, %v194, %v193
        %vm196 = vcmp.ne.s32.totalorder %v195, 0
        %vm197 = vcmp.lt.s32.totalorder %v195, 0
        %vm198 = vmand %vm197, %vm196
        %v199 = vadd.s32 %v195, 3
        %v200 = vsel %vm198, %v199, %v195
        %v201 = vmul.u32 %v200, 256
        %202 = vset.pattern.permute.xlu0 0
        %203 = vperm.xlu0 %202, %v175
        %v204 = vpop.permute.xlu0 %203
        %v205 = vadd.s32 %v201, %v204
        %vm206 = vcmp.eq.s32.totalorder %v205, %v179
        %vm207 = vcmp.eq.s32.totalorder %v205, %v180
        %vm208 = vcmp.eq.s32.totalorder %v205, %v181
        %vm209 = vcmp.eq.s32.totalorder %v205, %v182
        %vm210 = vcmp.eq.s32.totalorder %v205, %v183
        %vm211 = vcmp.eq.s32.totalorder %v205, %v184
        %v212 = vsel %vm206, 1, 0
        %v213 = vsel %vm207, 1, 0
        %v214 = vsel %vm208, 1, 0
        %v215 = vsel %vm209, 1, 0
        %v216 = vsel %vm210, 1, 0
        %v217 = vsel %vm211, 1, 0
        %v218 = vcvt.s32.f32 %v212
        %v219 = vcvt.s32.f32 %v213
        %v220 = vcvt.s32.f32 %v214
        %v221 = vcvt.s32.f32 %v215
        %v222 = vcvt.s32.f32 %v216
        %v223 = vcvt.s32.f32 %v217
        %v224 = vpack.c.bf16 %v218, %v218
        %v225 = vpack.c.bf16 %v219, %v219
        %v226 = vpack.c.bf16 %v220, %v220
        %v227 = vpack.c.bf16 %v221, %v221
        %v228 = vpack.c.bf16 %v222, %v222
        %v229 = vpack.c.bf16 %v223, %v223
        %v230 = vld [vmem:[#allocation5] sm:$0xf]
        %v231 = vld [vmem:[#allocation5 + $0x4] sm:$0xf]
        %v232 = vld [vmem:[#allocation5 + $0x8] sm:$0xf]
        %v233 = vld [vmem:[#allocation5 + $0xc] sm:$0xf]
        %v234 = vld [vmem:[#allocation5 + $0x10] sm:$0xf]
        %v235 = vld [vmem:[#allocation5 + $0x14] sm:$0xf]
        %v236 = vld [vmem:[#allocation5 + $0x18] sm:$0xf]
        %v237 = vld [vmem:[#allocation5 + $0x1c] sm:$0xf]
        %v238 = vld [vmem:[#allocation5 + $0x20] sm:$0xf]
        %v239 = vld [vmem:[#allocation5 + $0x24] sm:$0xf]
        %v240 = vld [vmem:[#allocation5 + $0x28] sm:$0xf]
        %v241 = vld [vmem:[#allocation5 + $0x2c] sm:$0xf]
        %v242 = vld [vmem:[#allocation5 + $0x30] sm:$0xf]
        %v243 = vld [vmem:[#allocation5 + $0x34] sm:$0xf]
        %v244 = vld [vmem:[#allocation5 + $0x38] sm:$0xf]
        %v245 = vld [vmem:[#allocation5 + $0x3c] sm:$0xf]
        %v246 = vld [vmem:[#allocation5 + $0x40] sm:$0xf]
        %v247 = vld [vmem:[#allocation5 + $0x44] sm:$0xf]
        %v248 = vld [vmem:[#allocation5 + $0x48] sm:$0xf]
        %v249 = vld [vmem:[#allocation5 + $0x4c] sm:$0xf]
        %v250 = vld [vmem:[#allocation5 + $0x50] sm:$0xf]
        %v251 = vld [vmem:[#allocation5 + $0x54] sm:$0xf]
        %v252 = vld [vmem:[#allocation5 + $0x58] sm:$0xf]
        %v253 = vld [vmem:[#allocation5 + $0x5c] sm:$0xf]
        %v254 = vld [vmem:[#allocation5 + $0x60] sm:$0xf]
        %v255 = vld [vmem:[#allocation5 + $0x64] sm:$0xf]
        %v256 = vld [vmem:[#allocation5 + $0x68] sm:$0xf]
        %v257 = vld [vmem:[#allocation5 + $0x6c] sm:$0xf]
        %v258 = vld [vmem:[#allocation5 + $0x70] sm:$0xf]
        %v259 = vld [vmem:[#allocation5 + $0x74] sm:$0xf]
        %v260 = vld [vmem:[#allocation5 + $0x78] sm:$0xf]
        %v261 = vld [vmem:[#allocation5 + $0x7c] sm:$0xf]
        %v262 = vld [vmem:[#allocation5 + $0x80] sm:$0xf]
        %v263 = vld [vmem:[#allocation5 + $0x84] sm:$0xf]
        %v264 = vld [vmem:[#allocation5 + $0x88] sm:$0xf]
        %v265 = vld [vmem:[#allocation5 + $0x8c] sm:$0xf]
        %v266 = vld [vmem:[#allocation5 + $0x90] sm:$0xf]
        %v267 = vld [vmem:[#allocation5 + $0x94] sm:$0xf]
        %v268 = vld [vmem:[#allocation5 + $0x98] sm:$0xf]
        %v269 = vld [vmem:[#allocation5 + $0x9c] sm:$0xf]
        %v270 = vld [vmem:[#allocation5 + $0xa0] sm:$0xf]
        %v271 = vld [vmem:[#allocation5 + $0xa4] sm:$0xf]
        %v272 = vld [vmem:[#allocation5 + $0xa8] sm:$0xf]
        %v273 = vld [vmem:[#allocation5 + $0xac] sm:$0xf]
        %v274 = vld [vmem:[#allocation5 + $0xb0] sm:$0xf]
        %v275 = vld [vmem:[#allocation5 + $0xb4] sm:$0xf]
        %v276 = vld [vmem:[#allocation5 + $0xb8] sm:$0xf]
        %v277 = vld [vmem:[#allocation5 + $0xbc] sm:$0xf]
        %v278 = vld [vmem:[#allocation5 + $0xc0] sm:$0xf]
        %v279 = vld [vmem:[#allocation5 + $0xc4] sm:$0xf]
        %v280 = vld [vmem:[#allocation5 + $0xc8] sm:$0xf]
        %v281 = vld [vmem:[#allocation5 + $0xcc] sm:$0xf]
        %v282 = vld [vmem:[#allocation5 + $0xd0] sm:$0xf]
        %v283 = vld [vmem:[#allocation5 + $0xd4] sm:$0xf]
        %v284 = vld [vmem:[#allocation5 + $0xd8] sm:$0xf]
        %v285 = vld [vmem:[#allocation5 + $0xdc] sm:$0xf]
        %v286 = vld [vmem:[#allocation5 + $0xe0] sm:$0xf]
        %v287 = vld [vmem:[#allocation5 + $0xe4] sm:$0xf]
        %v288 = vld [vmem:[#allocation5 + $0xe8] sm:$0xf]
        %v289 = vld [vmem:[#allocation5 + $0xec] sm:$0xf]
        %v290 = vld [vmem:[#allocation5 + $0xf0] sm:$0xf]
        %v291 = vld [vmem:[#allocation5 + $0xf4] sm:$0xf]
        %v292 = vld [vmem:[#allocation5 + $0xf8] sm:$0xf]
        %v293 = vld [vmem:[#allocation5 + $0xfc] sm:$0xf]
        %v294 = vld [vmem:[#allocation5 + $0x100] sm:$0xf]
        %v295 = vld [vmem:[#allocation5 + $0x104] sm:$0xf]
        %v296 = vld [vmem:[#allocation5 + $0x108] sm:$0xf]
        %v297 = vld [vmem:[#allocation5 + $0x10c] sm:$0xf]
        %v298 = vld [vmem:[#allocation5 + $0x110] sm:$0xf]
        %v299 = vld [vmem:[#allocation5 + $0x114] sm:$0xf]
        %v300 = vld [vmem:[#allocation5 + $0x118] sm:$0xf]
        %v301 = vld [vmem:[#allocation5 + $0x11c] sm:$0xf]
        %v302 = vld [vmem:[#allocation5 + $0x120] sm:$0xf]
        %v303 = vld [vmem:[#allocation5 + $0x124] sm:$0xf]
        %v304 = vld [vmem:[#allocation5 + $0x128] sm:$0xf]
        %v305 = vld [vmem:[#allocation5 + $0x12c] sm:$0xf]
        %v306 = vld [vmem:[#allocation5 + $0x130] sm:$0xf]
        %v307 = vld [vmem:[#allocation5 + $0x134] sm:$0xf]
        %v308 = vld [vmem:[#allocation5 + $0x138] sm:$0xf]
        %v309 = vld [vmem:[#allocation5 + $0x13c] sm:$0xf]
        %v310 = vld [vmem:[#allocation5 + $0x140] sm:$0xf]
        %v311 = vld [vmem:[#allocation5 + $0x144] sm:$0xf]
        %v312 = vld [vmem:[#allocation5 + $0x148] sm:$0xf]
        %v313 = vld [vmem:[#allocation5 + $0x14c] sm:$0xf]
        %v314 = vld [vmem:[#allocation5 + $0x150] sm:$0xf]
        %v315 = vld [vmem:[#allocation5 + $0x154] sm:$0xf]
        %v316 = vld [vmem:[#allocation5 + $0x158] sm:$0xf]
        %v317 = vld [vmem:[#allocation5 + $0x15c] sm:$0xf]
        %v318 = vld [vmem:[#allocation5 + $0x160] sm:$0xf]
        %v319 = vld [vmem:[#allocation5 + $0x164] sm:$0xf]
        %v320 = vld [vmem:[#allocation5 + $0x168] sm:$0xf]
        %v321 = vld [vmem:[#allocation5 + $0x16c] sm:$0xf]
        %v322 = vld [vmem:[#allocation5 + $0x170] sm:$0xf]
        %v323 = vld [vmem:[#allocation5 + $0x174] sm:$0xf]
        %v324 = vld [vmem:[#allocation5 + $0x178] sm:$0xf]
        %v325 = vld [vmem:[#allocation5 + $0x17c] sm:$0xf]
        %v422 = vunpack.c.l.b16 %v230
        %v423 = vunpack.c.l.b16 %v231
        %v424 = vunpack.c.l.b16 %v232
        %v425 = vunpack.c.l.b16 %v233
        %v426 = vunpack.c.l.b16 %v234
        %v427 = vunpack.c.l.b16 %v235
        %v428 = vunpack.c.l.b16 %v236
        %v429 = vunpack.c.l.b16 %v237
        %v430 = vunpack.c.l.b16 %v238
        %v431 = vunpack.c.l.b16 %v239
        %v432 = vunpack.c.l.b16 %v240
        %v433 = vunpack.c.l.b16 %v241
        %v434 = vunpack.c.l.b16 %v242
        %v435 = vunpack.c.l.b16 %v243
        %v436 = vunpack.c.l.b16 %v244
        %v437 = vunpack.c.l.b16 %v245
        %v438 = vunpack.c.l.b16 %v246
        %v439 = vunpack.c.l.b16 %v247
        %v440 = vunpack.c.l.b16 %v248
        %v441 = vunpack.c.l.b16 %v249
        %v442 = vunpack.c.l.b16 %v250
        %v443 = vunpack.c.l.b16 %v251
        %v444 = vunpack.c.l.b16 %v252
        %v445 = vunpack.c.l.b16 %v253
        %v446 = vunpack.c.l.b16 %v254
        %v447 = vunpack.c.l.b16 %v255
        %v448 = vunpack.c.l.b16 %v256
        %v449 = vunpack.c.l.b16 %v257
        %v450 = vunpack.c.l.b16 %v258
        %v451 = vunpack.c.l.b16 %v259
        %v452 = vunpack.c.l.b16 %v260
        %v453 = vunpack.c.l.b16 %v261
        %v454 = vunpack.c.l.b16 %v262
        %v455 = vunpack.c.l.b16 %v263
        %v456 = vunpack.c.l.b16 %v264
        %v457 = vunpack.c.l.b16 %v265
        %v458 = vunpack.c.l.b16 %v266
        %v459 = vunpack.c.l.b16 %v267
        %v460 = vunpack.c.l.b16 %v268
        %v461 = vunpack.c.l.b16 %v269
        %v462 = vunpack.c.l.b16 %v270
        %v463 = vunpack.c.l.b16 %v271
        %v464 = vunpack.c.l.b16 %v272
        %v465 = vunpack.c.l.b16 %v273
        %v466 = vunpack.c.l.b16 %v274
        %v467 = vunpack.c.l.b16 %v275
        %v468 = vunpack.c.l.b16 %v276
        %v469 = vunpack.c.l.b16 %v277
        %v470 = vunpack.c.l.b16 %v278
        %v471 = vunpack.c.l.b16 %v279
        %v472 = vunpack.c.l.b16 %v280
        %v473 = vunpack.c.l.b16 %v281
        %v474 = vunpack.c.l.b16 %v282
        %v475 = vunpack.c.l.b16 %v283
        %v476 = vunpack.c.l.b16 %v284
        %v477 = vunpack.c.l.b16 %v285
        %v478 = vunpack.c.l.b16 %v286
        %v479 = vunpack.c.l.b16 %v287
        %v480 = vunpack.c.l.b16 %v288
        %v481 = vunpack.c.l.b16 %v289
        %v482 = vunpack.c.l.b16 %v290
        %v483 = vunpack.c.l.b16 %v291
        %v484 = vunpack.c.l.b16 %v292
        %v485 = vunpack.c.l.b16 %v293
        %v486 = vunpack.c.l.b16 %v294
        %v487 = vunpack.c.l.b16 %v295
        %v488 = vunpack.c.l.b16 %v296
        %v489 = vunpack.c.l.b16 %v297
        %v490 = vunpack.c.l.b16 %v298
        %v491 = vunpack.c.l.b16 %v299
        %v492 = vunpack.c.l.b16 %v300
        %v493 = vunpack.c.l.b16 %v301
        %v494 = vunpack.c.l.b16 %v302
        %v495 = vunpack.c.l.b16 %v303
        %v496 = vunpack.c.l.b16 %v304
        %v497 = vunpack.c.l.b16 %v305
        %v498 = vunpack.c.l.b16 %v306
        %v499 = vunpack.c.l.b16 %v307
        %v500 = vunpack.c.l.b16 %v308
        %v501 = vunpack.c.l.b16 %v309
        %v502 = vunpack.c.l.b16 %v310
        %v503 = vunpack.c.l.b16 %v311
        %v504 = vunpack.c.l.b16 %v312
        %v505 = vunpack.c.l.b16 %v313
        %v506 = vunpack.c.l.b16 %v314
        %v507 = vunpack.c.l.b16 %v315
        %v508 = vunpack.c.l.b16 %v316
        %v509 = vunpack.c.l.b16 %v317
        %v510 = vunpack.c.l.b16 %v318
        %v511 = vunpack.c.l.b16 %v319
        %v512 = vunpack.c.l.b16 %v320
        %v513 = vunpack.c.l.b16 %v321
        %v514 = vunpack.c.l.b16 %v322
        %v515 = vunpack.c.l.b16 %v323
        %v516 = vunpack.c.l.b16 %v324
        %v517 = vunpack.c.l.b16 %v325
        %v518 = vpack.c.b16 %v423, %v422
        %v519 = vpack.c.b16 %v425, %v424
        %v520 = vpack.c.b16 %v427, %v426
        %v521 = vpack.c.b16 %v429, %v428
        %v522 = vpack.c.b16 %v431, %v430
        %v523 = vpack.c.b16 %v433, %v432
        %v524 = vpack.c.b16 %v435, %v434
        %v525 = vpack.c.b16 %v437, %v436
        %v526 = vpack.c.b16 %v439, %v438
        %v527 = vpack.c.b16 %v441, %v440
        %v528 = vpack.c.b16 %v443, %v442
        %v529 = vpack.c.b16 %v445, %v444
        %v530 = vpack.c.b16 %v447, %v446
        %v531 = vpack.c.b16 %v449, %v448
        %v532 = vpack.c.b16 %v451, %v450
        %v533 = vpack.c.b16 %v453, %v452
        %v534 = vpack.c.b16 %v455, %v454
        %v535 = vpack.c.b16 %v457, %v456
        %v536 = vpack.c.b16 %v459, %v458
        %v537 = vpack.c.b16 %v461, %v460
        %v538 = vpack.c.b16 %v463, %v462
        %v539 = vpack.c.b16 %v465, %v464
        %v540 = vpack.c.b16 %v467, %v466
        %v541 = vpack.c.b16 %v469, %v468
        %v542 = vpack.c.b16 %v471, %v470
        %v543 = vpack.c.b16 %v473, %v472
        %v544 = vpack.c.b16 %v475, %v474
        %v545 = vpack.c.b16 %v477, %v476
        %v546 = vpack.c.b16 %v479, %v478
        %v547 = vpack.c.b16 %v481, %v480
        %v548 = vpack.c.b16 %v483, %v482
        %v549 = vpack.c.b16 %v485, %v484
        %v550 = vpack.c.b16 %v487, %v486
        %v551 = vpack.c.b16 %v489, %v488
        %v552 = vpack.c.b16 %v491, %v490
        %v553 = vpack.c.b16 %v493, %v492
        %v554 = vpack.c.b16 %v495, %v494
        %v555 = vpack.c.b16 %v497, %v496
        %v556 = vpack.c.b16 %v499, %v498
        %v557 = vpack.c.b16 %v501, %v500
        %v558 = vpack.c.b16 %v503, %v502
        %v559 = vpack.c.b16 %v505, %v504
        %v560 = vpack.c.b16 %v507, %v506
        %v561 = vpack.c.b16 %v509, %v508
        %v562 = vpack.c.b16 %v511, %v510
        %v563 = vpack.c.b16 %v513, %v512
        %v564 = vpack.c.b16 %v515, %v514
        %v565 = vpack.c.b16 %v517, %v516
        %614 = vmatprep.subr.bf16.mxu0 0
        %615 = vmatpush1.bf16.msra.mxu0 %v518
        %616 = vmatprep.subr.bf16.mxu0 0
        %617 = vmatpush1.bf16.msra.mxu0 %v519
        %618 = vmatprep.subr.bf16.mxu0 0
        %619 = vmatpush1.bf16.msra.mxu0 %v520
        %620 = vmatprep.subr.bf16.mxu0 0
        %621 = vmatpush1.bf16.msra.mxu0 %v521
        %622 = vmatprep.subr.bf16.mxu0 0
        %623 = vmatpush1.bf16.msra.mxu0 %v522
        %624 = vmatprep.subr.bf16.mxu0 0
        %625 = vmatpush1.bf16.msra.mxu0 %v523
        %626 = vmatprep.subr.bf16.mxu0 0
        %627 = vmatpush1.bf16.msra.mxu0 %v524
        %628 = vmatprep.subr.bf16.mxu0 0
        %629 = vmatpush1.bf16.msra.mxu0 %v525
        %630 = vmatprep.subr.bf16.mxu0 0
        %631 = vmatpush1.bf16.msra.mxu0 %v526
        %632 = vmatprep.subr.bf16.mxu0 0
        %633 = vmatpush1.bf16.msra.mxu0 %v527
        %634 = vmatprep.subr.bf16.mxu0 0
        %635 = vmatpush1.bf16.msra.mxu0 %v528
        %636 = vmatprep.subr.bf16.mxu0 0
        %637 = vmatpush1.bf16.msra.mxu0 %v529
        %638 = vmatprep.subr.bf16.mxu0 0
        %639 = vmatpush1.bf16.msra.mxu0 %v530
        %640 = vmatprep.subr.bf16.mxu0 0
        %641 = vmatpush1.bf16.msra.mxu0 %v531
        %642 = vmatprep.subr.bf16.mxu0 0
        %643 = vmatpush1.bf16.msra.mxu0 %v532
        %644 = vmatprep.subr.bf16.mxu0 0
        %645 = vmatpush1.bf16.msra.mxu0 %v533
        %646 = vmatprep.mubr.bf16.mxu0 %v225
        %647 = vmatmul.mubr.bf16.gmra.mrb[0].mxu0 %v224
        %v648 = vpop.f32.mrb[0].mxu0
        %v649 = vadd.f32 0.0, %v648
        %v650 = vpop.f32.mrb[0].mxu0
        %v651 = vpop.f32.mrb[0].mxu0
        %v652 = vpop.f32.mrb[0].mxu0
        %653 = vdwg.mxu0
        %654 = vmatprep.subr.bf16.mxu0 0
        %655 = vmatpush1.bf16.msra.mxu0 %v534
        %656 = vmatprep.subr.bf16.mxu0 0
        %657 = vmatpush1.bf16.msra.mxu0 %v535
        %658 = vmatprep.subr.bf16.mxu0 0
        %659 = vmatpush1.bf16.msra.mxu0 %v536
        %660 = vmatprep.subr.bf16.mxu0 0
        %661 = vmatpush1.bf16.msra.mxu0 %v537
        %662 = vmatprep.subr.bf16.mxu0 0
        %663 = vmatpush1.bf16.msra.mxu0 %v538
        %664 = vmatprep.subr.bf16.mxu0 0
        %665 = vmatpush1.bf16.msra.mxu0 %v539
        %666 = vmatprep.subr.bf16.mxu0 0
        %667 = vmatpush1.bf16.msra.mxu0 %v540
        %668 = vmatprep.subr.bf16.mxu0 0
        %669 = vmatpush1.bf16.msra.mxu0 %v541
        %670 = vmatprep.subr.bf16.mxu0 0
        %671 = vmatpush1.bf16.msra.mxu0 %v542
        %672 = vmatprep.subr.bf16.mxu0 0
        %673 = vmatpush1.bf16.msra.mxu0 %v543
        %674 = vmatprep.subr.bf16.mxu0 0
        %675 = vmatpush1.bf16.msra.mxu0 %v544
        %676 = vmatprep.subr.bf16.mxu0 0
        %677 = vmatpush1.bf16.msra.mxu0 %v545
        %678 = vmatprep.subr.bf16.mxu0 0
        %679 = vmatpush1.bf16.msra.mxu0 %v546
        %680 = vmatprep.subr.bf16.mxu0 0
        %681 = vmatpush1.bf16.msra.mxu0 %v547
        %682 = vmatprep.subr.bf16.mxu0 0
        %683 = vmatpush1.bf16.msra.mxu0 %v548
        %684 = vmatprep.subr.bf16.mxu0 0
        %685 = vmatpush1.bf16.msra.mxu0 %v549
        %686 = vmatprep.mubr.bf16.mxu0 %v227
        %687 = vmatmul.mubr.bf16.gmra.mrb[0].mxu0 %v226
        %v688 = vpop.f32.mrb[0].mxu0
        %v689 = vadd.f32 %v649, %v688
        %v690 = vpop.f32.mrb[0].mxu0
        %v691 = vpop.f32.mrb[0].mxu0
        %v692 = vpop.f32.mrb[0].mxu0
        %693 = vdwg.mxu0
        %694 = vmatprep.subr.bf16.mxu0 0
        %695 = vmatpush1.bf16.msra.mxu0 %v550
        %696 = vmatprep.subr.bf16.mxu0 0
        %697 = vmatpush1.bf16.msra.mxu0 %v551
        %698 = vmatprep.subr.bf16.mxu0 0
        %699 = vmatpush1.bf16.msra.mxu0 %v552
        %700 = vmatprep.subr.bf16.mxu0 0
        %701 = vmatpush1.bf16.msra.mxu0 %v553
        %702 = vmatprep.subr.bf16.mxu0 0
        %703 = vmatpush1.bf16.msra.mxu0 %v554
        %704 = vmatprep.subr.bf16.mxu0 0
        %705 = vmatpush1.bf16.msra.mxu0 %v555
        %706 = vmatprep.subr.bf16.mxu0 0
        %707 = vmatpush1.bf16.msra.mxu0 %v556
        %708 = vmatprep.subr.bf16.mxu0 0
        %709 = vmatpush1.bf16.msra.mxu0 %v557
        %710 = vmatprep.subr.bf16.mxu0 0
        %711 = vmatpush1.bf16.msra.mxu0 %v558
        %712 = vmatprep.subr.bf16.mxu0 0
        %713 = vmatpush1.bf16.msra.mxu0 %v559
        %714 = vmatprep.subr.bf16.mxu0 0
        %715 = vmatpush1.bf16.msra.mxu0 %v560
        %716 = vmatprep.subr.bf16.mxu0 0
        %717 = vmatpush1.bf16.msra.mxu0 %v561
        %718 = vmatprep.subr.bf16.mxu0 0
        %719 = vmatpush1.bf16.msra.mxu0 %v562
        %720 = vmatprep.subr.bf16.mxu0 0
        %721 = vmatpush1.bf16.msra.mxu0 %v563
        %722 = vmatprep.subr.bf16.mxu0 0
        %723 = vmatpush1.bf16.msra.mxu0 %v564
        %724 = vmatprep.subr.bf16.mxu0 0
        %725 = vmatpush1.bf16.msra.mxu0 %v565
        %726 = vmatprep.mubr.bf16.mxu0 %v229
        %727 = vmatmul.mubr.bf16.gmra.mrb[0].mxu0 %v228
        %v728 = vpop.f32.mrb[0].mxu0
        %v729 = vadd.f32 %v689, %v728
        %v730 = vpop.f32.mrb[0].mxu0
        %v731 = vpop.f32.mrb[0].mxu0
        %v732 = vpop.f32.mrb[0].mxu0
        %733 = vdwg.mxu0
        %v734 = vpack.c.bf16 %v729, %v729
        %vm735 = vcmask 519168
        %736 = vst.msk [vmem:[%s173] sm:$0xf] %vm735, %v734
        %s737 = sand.u32 %s75, 1
        %s738 = scalar_lea.sflag [#allocation4], %s737
        %s739 = sand.u32 %s75, 1
        %s740 = smul.addr %s739, 4
        %s741 = scalar_lea.vmem [#allocation7], %s740
        // Predicated region
        $region37: #{transformer_forward.4} parent=27 // pred_check
          %p742 = pneg %p85
        $region38: #{transformer_forward.4} parent=27 // pred_check_branch
          %744 = sbr.rel (%p742) target = $region40
        $region39: #{transformer_forward.4} parent=27 // pred_region
          %s746 = ssub.s32 64, 64
          %747 = vsyncadd %s738, %s746
          %s748 = smul.addr %s20, 64
          %s749 = scalar_lea.hbm %s2, %s748
          %s751 = sshll.u32 %s741, 4
          %s752 = int_to_ptr.vmem [resolvable:$true] %s751
          %754 = dma.vmem_to_hbm [thread:$0]  %s752, 64, %s749, %s738
        $region40: #{transformer_forward.4} parent=27 // pred_fallthru
          _
      $region28: #{transformer_forward.4} parent=5 // pred_fallthru
        _
      %p755 = scmp.le.s32.totalorder 2, %s15
      // Predicated region
      $region41: #{transformer_forward.4} parent=5 // pred_check
        %p756 = pneg %p755
      $region42: #{transformer_forward.4} parent=5 // pred_check_branch
        %758 = sbr.rel (%p756) target = $region44
      $region43: #{transformer_forward.4} parent=5 // pred_region
        %s759 = ssub.s32 %s15, 2
        // Predicated region
        $region45: #{transformer_forward.4} parent=43 // pred_check
          %p760 = pneg %p91
        $region46: #{transformer_forward.4} parent=43 // pred_check_branch
          %762 = sbr.rel (%p760) target = $region48
        $region47: #{transformer_forward.4} parent=43 // pred_region
          %s763 = sand.u32 %s76, 1
          %s764 = scalar_lea.sflag [#allocation4], %s763
          %s765 = sand.u32 %s76, 1
          %s766 = smul.addr %s765, 4
          %s767 = scalar_lea.vmem [#allocation7], %s766
          %768 = dma.done %s764, 64
        $region48: #{transformer_forward.4} parent=43 // pred_fallthru
          _
      $region44: #{transformer_forward.4} parent=5 // pred_fallthru
        _
    $region6: #{transformer_forward.4} parent=1 // loop_footer
      %s19 = sadd.s32 1, %s15
    $region7: #{transformer_forward.4} parent=1 // loop_footer_branch
      %14 = sbr.rel target = $region3
    $region8: #{transformer_forward.4} parent=1 // loop_exit
      _
    %769 = vsyncpa [#allocation3], 1
    %s770 = scalar_lea.sflag [#allocation3], 1
    %771 = vsyncpa %s770, 1
    %772 = vsyncpa [#allocation6], 1
    %773 = vsyncpa [#allocation4], 1
    %s774 = scalar_lea.sflag [#allocation4], 1
    %775 = vsyncpa %s774, 1

// kernel: transformer_forward.7
$region0: #{transformer_forward.7}
  #allocation0 [shape = 'u32[]', space=smem, size = 0x4, offset = 0x4, fixed_abs, tag = 'smem constant byte address 0x4 - core index']
  #allocation1 [shape = 'u32[144,128]{1,0:T(1,128)}', space=vmem, size = 0x12000, scoped, tag = 'internal scratch']
  %s0 = inlined_call_operand.hbm [shape: bf16[2,9,64], index: 0, kind: input, shape index: {}]
  %s1 = inlined_call_operand.hbm [shape: f32[1,64], index: 1, kind: input, shape index: {}]
  %s2 = inlined_call_operand.hbm [shape: f32[1,64], index: 2, kind: input, shape index: {}]
  %s3 = inlined_call_operand.hbm [shape: bf16[64,768], index: 3, kind: input, shape index: {}]
  %s4 = inlined_call_operand.hbm [shape: f32[2,9,256], index: 4, kind: output, shape index: {}]
  %s5 = sld [smem:[#allocation0]]
  $region65: #{transformer_forward.7} parent=0
    _
  %s7 = ssub.s32 1, %s5
  %s8 = scalar_select 0, %s7, %s5
  $region1: #{transformer_forward.7} parent=0
    #allocation2 [shape = 'u8[8192]{0}', space=vmem, size = 0x2000, scoped, tag = 'input window, operand 0']
    #allocation3 [shape = 's32[2]{0}', space=sflag, size = 0x8, scoped, tag = 'scoped memory for transformer_forward.7']
    #allocation4 [shape = 's32[2]{0}', space=sflag, size = 0x8, scoped, tag = 'scoped memory for transformer_forward.7']
    #allocation5 [shape = 'u8[512]{0}', space=vmem, size = 0x400, scoped, tag = 'input window, operand 1, single buffered']
    #allocation6 [shape = 's32[1]{0}', space=sflag, size = 0x4, scoped, tag = 'scoped memory for transformer_forward.7']
    #allocation7 [shape = 'u8[512]{0}', space=vmem, size = 0x400, scoped, tag = 'input window, operand 2, single buffered']
    #allocation8 [shape = 'u8[98304]{0}', space=vmem, size = 0x18000, scoped, tag = 'input window, operand 3, single buffered']
    #allocation9 [shape = 's32[1]{0}', space=sflag, size = 0x4, scoped, tag = 'scoped memory for transformer_forward.7']
    #allocation10 [shape = 'u8[32768]{0}', space=vmem, size = 0x8000, scoped, tag = 'output window, operand 0']
    %9 = vsyncpa [#allocation3], 0
    %s10 = scalar_lea.sflag [#allocation3], 1
    %11 = vsyncpa %s10, 0
    %12 = vsyncpa [#allocation6], 0
    %13 = vsyncpa [#allocation9], 0
    %14 = vsyncpa [#allocation4], 0
    %s15 = scalar_lea.sflag [#allocation4], 1
    %16 = vsyncpa %s15, 0
    loop: start=0, step=1, limit=4
    $region2: #{transformer_forward.7} parent=1 // loop_pre_header
      _
    $region3: #{transformer_forward.7} parent=1 // loop_header
      %s18 = sphi 0, %s22
      %p19 = scmp.ge.s32.totalorder %s18, 4
      %s28 = sphi 0, %s30
      %s31 = sphi 0, %s28
      %s32 = sphi 0, %s31
      %s48 = sphi 0, %s32
      %s52 = sphi 0, %s52
      %s54 = sphi 0, %s52
      %s55 = sphi 0, %s54
      %s69 = sphi 0, %s55
      %s73 = sphi 0, %s73
      %s75 = sphi 0, %s73
      %s76 = sphi 0, %s75
      %s90 = sphi 0, %s76
      %s94 = sphi 0, %s94
      %s96 = sphi 0, %s94
      %s97 = sphi 0, %s96
      %s111 = sphi 0, %s97
      %s117 = sphi 0, %s119
      %s120 = sphi 0, %s117
      %s121 = sphi 0, %s120
      %s137 = sphi 0, %s121
    $region4: #{transformer_forward.7} parent=1 // loop_header_branch
      %21 = sbr.rel (%p19) target = $region8
    $region5: #{transformer_forward.7} parent=1 // loop_body
      %s23 = ssub.s32 %s18, 1
      %s24 = ssub.s32 %s18, 2
      %s25 = sadd.s32 %s18, 1
      %s26 = ssub.s32 %s18, %s25
      %p27 = scmp.eq.s32.totalorder %s26, 0
      %s29 = sadd.s32 %s28, 1
      %s30 = scalar_select %p27, %s28, %s29
      %p33 = pneg %p27
      %p34 = scmp.eq.s32.totalorder %s18, 1
      %p35 = por %p33, %p34
      %p36 = scmp.ne.s32.totalorder %s28, %s31
      %p37 = scmp.eq.s32.totalorder %s18, 0
      %p38 = por %p36, %p37
      %p39 = scmp.ne.s32.totalorder %s28, %s31
      %p40 = scmp.eq.s32.totalorder %s23, 1
      %p41 = por %p39, %p40
      %p42 = scmp.ne.s32.totalorder %s31, %s32
      %p43 = scmp.eq.s32.totalorder %s23, 0
      %p44 = por %p42, %p43
      %p45 = scmp.ne.s32.totalorder %s31, %s32
      %p46 = scmp.eq.s32.totalorder %s24, 1
      %p47 = por %p45, %p46
      %p49 = scmp.ne.s32.totalorder %s32, %s48
      %p50 = scmp.eq.s32.totalorder %s24, 0
      %p51 = por %p49, %p50
      %s53 = sadd.s32 %s52, 1
      %p56 = scmp.eq.s32.totalorder %s18, 1
      %p57 = scmp.ne.s32.totalorder %s52, %s54
      %p58 = scmp.eq.s32.totalorder %s18, 0
      %p59 = por %p57, %p58
      %p60 = scmp.ne.s32.totalorder %s52, %s54
      %p61 = scmp.eq.s32.totalorder %s23, 1
      %p62 = por %p60, %p61
      %p63 = scmp.ne.s32.totalorder %s54, %s55
      %p64 = scmp.eq.s32.totalorder %s23, 0
      %p65 = por %p63, %p64
      %p66 = scmp.ne.s32.totalorder %s54, %s55
      %p67 = scmp.eq.s32.totalorder %s24, 1
      %p68 = por %p66, %p67
      %p70 = scmp.ne.s32.totalorder %s55, %s69
      %p71 = scmp.eq.s32.totalorder %s24, 0
      %p72 = por %p70, %p71
      %s74 = sadd.s32 %s73, 1
      %p77 = scmp.eq.s32.totalorder %s18, 1
      %p78 = scmp.ne.s32.totalorder %s73, %s75
      %p79 = scmp.eq.s32.totalorder %s18, 0
      %p80 = por %p78, %p79
      %p81 = scmp.ne.s32.totalorder %s73, %s75
      %p82 = scmp.eq.s32.totalorder %s23, 1
      %p83 = por %p81, %p82
      %p84 = scmp.ne.s32.totalorder %s75, %s76
      %p85 = scmp.eq.s32.totalorder %s23, 0
      %p86 = por %p84, %p85
      %p87 = scmp.ne.s32.totalorder %s75, %s76
      %p88 = scmp.eq.s32.totalorder %s24, 1
      %p89 = por %p87, %p88
      %p91 = scmp.ne.s32.totalorder %s76, %s90
      %p92 = scmp.eq.s32.totalorder %s24, 0
      %p93 = por %p91, %p92
      %s95 = sadd.s32 %s94, 1
      %p98 = scmp.eq.s32.totalorder %s18, 1
      %p99 = scmp.ne.s32.totalorder %s94, %s96
      %p100 = scmp.eq.s32.totalorder %s18, 0
      %p101 = por %p99, %p100
      %p102 = scmp.ne.s32.totalorder %s94, %s96
      %p103 = scmp.eq.s32.totalorder %s23, 1
      %p104 = por %p102, %p103
      %p105 = scmp.ne.s32.totalorder %s96, %s97
      %p106 = scmp.eq.s32.totalorder %s23, 0
      %p107 = por %p105, %p106
      %p108 = scmp.ne.s32.totalorder %s96, %s97
      %p109 = scmp.eq.s32.totalorder %s24, 1
      %p110 = por %p108, %p109
      %p112 = scmp.ne.s32.totalorder %s97, %s111
      %p113 = scmp.eq.s32.totalorder %s24, 0
      %p114 = por %p112, %p113
      %s115 = ssub.s32 %s18, %s25
      %p116 = scmp.eq.s32.totalorder %s115, 0
      %s118 = sadd.s32 %s117, 1
      %s119 = scalar_select %p116, %s117, %s118
      %p122 = pneg %p116
      %p123 = scmp.eq.s32.totalorder %s18, 1
      %p124 = por %p122, %p123
      %p125 = scmp.ne.s32.totalorder %s117, %s120
      %p126 = scmp.eq.s32.totalorder %s18, 0
      %p127 = por %p125, %p126
      %p128 = scmp.ne.s32.totalorder %s117, %s120
      %p129 = scmp.eq.s32.totalorder %s23, 1
      %p130 = por %p128, %p129
      %p131 = scmp.ne.s32.totalorder %s120, %s121
      %p132 = scmp.eq.s32.totalorder %s23, 0
      %p133 = por %p131, %p132
      %p134 = scmp.ne.s32.totalorder %s120, %s121
      %p135 = scmp.eq.s32.totalorder %s24, 1
      %p136 = por %p134, %p135
      %p138 = scmp.ne.s32.totalorder %s121, %s137
      %p139 = scmp.eq.s32.totalorder %s24, 0
      %p140 = por %p138, %p139
      %p141 = scmp.le.s32.totalorder 1, %s18
      %p142 = scmp.lt.s32.totalorder %s18, 3
      %p143 = pnand %p141, %p142
      %p144 = pneg %p143
      // Predicated region
      $region9: #{transformer_forward.7} parent=5 // pred_check
        _
      $region10: #{transformer_forward.7} parent=5 // pred_check_branch
        %146 = sbr.rel (%p143) target = $region12
      $region11: #{transformer_forward.7} parent=5 // pred_region
        %s147 = ssub.s32 %s18, 1
        // Predicated region
        $region13: #{transformer_forward.7} parent=11 // pred_check
          %p148 = pneg %p65
        $region14: #{transformer_forward.7} parent=11 // pred_check_branch
          %150 = sbr.rel (%p148) target = $region16
        $region15: #{transformer_forward.7} parent=11 // pred_region
          %s152 = ssub.s32 16, 16
          %153 = vsyncadd [#allocation6], %s152
          %s155 = sshll.u32 [#allocation5], 4
          %s156 = int_to_ptr.vmem [resolvable:$true] %s155
          %158 = dma.hbm_to_vmem [thread:$0]  %s1, 16, %s156, [#allocation6]
        $region16: #{transformer_forward.7} parent=11 // pred_fallthru
          _
        // Predicated region
        $region17: #{transformer_forward.7} parent=11 // pred_check
          %p159 = pneg %p86
        $region18: #{transformer_forward.7} parent=11 // pred_check_branch
          %161 = sbr.rel (%p159) target = $region20
        $region19: #{transformer_forward.7} parent=11 // pred_region
          %s163 = ssub.s32 16, 16
          %164 = vsyncadd [#allocation6], %s163
          %s166 = sshll.u32 [#allocation7], 4
          %s167 = int_to_ptr.vmem [resolvable:$true] %s166
          %169 = dma.hbm_to_vmem [thread:$0]  %s2, 16, %s167, [#allocation6]
        $region20: #{transformer_forward.7} parent=11 // pred_fallthru
          _
        // Predicated region
        $region21: #{transformer_forward.7} parent=11 // pred_check
          %p170 = pneg %p107
        $region22: #{transformer_forward.7} parent=11 // pred_check_branch
          %172 = sbr.rel (%p170) target = $region24
        $region23: #{transformer_forward.7} parent=11 // pred_region
          %s174 = ssub.s32 3072, 3072
          %175 = vsyncadd [#allocation9], %s174
          %s176 = sshll.u32 [#allocation8], 4
          %s177 = int_to_ptr.vmem [resolvable:$true] %s176
          %182 = dma.hbm_to_vmem [thread:$0]  %s3, 3072, %s177, [#allocation9], 384, 384, 24
        $region24: #{transformer_forward.7} parent=11 // pred_fallthru
          _
      $region12: #{transformer_forward.7} parent=5 // pred_fallthru
        _
      %p183 = scmp.lt.s32.totalorder %s18, 2
      // Predicated region
      $region25: #{transformer_forward.7} parent=5 // pred_check
        %p184 = pneg %p183
      $region26: #{transformer_forward.7} parent=5 // pred_check_branch
        %186 = sbr.rel (%p184) target = $region28
      $region27: #{transformer_forward.7} parent=5 // pred_region
        // Predicated region
        $region29: #{transformer_forward.7} parent=27 // pred_check
          %p187 = pneg %p38
        $region30: #{transformer_forward.7} parent=27 // pred_check_branch
          %189 = sbr.rel (%p187) target = $region32
        $region31: #{transformer_forward.7} parent=27 // pred_region
          %s190 = sand.u32 %s28, 1
          %s191 = scalar_lea.sflag [#allocation3], %s190
          %s192 = sand.u32 %s28, 1
          %s193 = smul.addr %s192, 8
          %s194 = scalar_lea.vmem [#allocation2], %s193
          %s196 = ssub.s32 128, 128
          %197 = vsyncadd %s191, %s196
          %s198 = smul.addr %s18, 2
          %s199 = smul.addr %s198, 64
          %s200 = scalar_lea.hbm %s0, %s199
          %s201 = sshll.u32 %s194, 4
          %s202 = int_to_ptr.vmem [resolvable:$true] %s201
          %207 = dma.hbm_to_vmem [thread:$0]  %s200, 128, %s202, %s191, 64, 64, 4
        $region32: #{transformer_forward.7} parent=27 // pred_fallthru
          _
      $region28: #{transformer_forward.7} parent=5 // pred_fallthru
        _
      %p208 = scmp.le.s32.totalorder 1, %s18
      %p209 = scmp.lt.s32.totalorder %s18, 3
      %p210 = pnand %p208, %p209
      %p211 = pneg %p210
      // Predicated region
      $region33: #{transformer_forward.7} parent=5 // pred_check
        _
      $region34: #{transformer_forward.7} parent=5 // pred_check_branch
        %213 = sbr.rel (%p210) target = $region36
      $region35: #{transformer_forward.7} parent=5 // pred_region
        %s214 = ssub.s32 %s18, 1
        %s215 = sand.u32 %s31, 1
        %s216 = scalar_lea.sflag [#allocation3], %s215
        %s217 = sand.u32 %s31, 1
        %s218 = smul.addr %s217, 8
        %s219 = scalar_lea.vmem [#allocation2], %s218
        // Predicated region
        $region37: #{transformer_forward.7} parent=35 // pred_check
          %p220 = pneg %p44
        $region38: #{transformer_forward.7} parent=35 // pred_check_branch
          %222 = sbr.rel (%p220) target = $region40
        $region39: #{transformer_forward.7} parent=35 // pred_region
          %223 = dma.done %s216, 128
        $region40: #{transformer_forward.7} parent=35 // pred_fallthru
          _
        // Predicated region
        $region41: #{transformer_forward.7} parent=35 // pred_check
          %p224 = pneg %p65
        $region42: #{transformer_forward.7} parent=35 // pred_check_branch
          %226 = sbr.rel (%p224) target = $region44
        $region43: #{transformer_forward.7} parent=35 // pred_region
          %227 = dma.done [#allocation6], 16
        $region44: #{transformer_forward.7} parent=35 // pred_fallthru
          _
        // Predicated region
        $region45: #{transformer_forward.7} parent=35 // pred_check
          %p228 = pneg %p86
        $region46: #{transformer_forward.7} parent=35 // pred_check_branch
          %230 = sbr.rel (%p228) target = $region48
        $region47: #{transformer_forward.7} parent=35 // pred_region
          %231 = dma.done [#allocation6], 16
        $region48: #{transformer_forward.7} parent=35 // pred_fallthru
          _
        // Predicated region
        $region49: #{transformer_forward.7} parent=35 // pred_check
          %p232 = pneg %p107
        $region50: #{transformer_forward.7} parent=35 // pred_check_branch
          %234 = sbr.rel (%p232) target = $region52
        $region51: #{transformer_forward.7} parent=35 // pred_region
          %235 = dma.done [#allocation9], 3072
        $region52: #{transformer_forward.7} parent=35 // pred_fallthru
          _
        %s236 = sand.u32 %s31, 1
        %s237 = scalar_lea.sflag [#allocation3], %s236
        %s238 = sand.u32 %s31, 1
        %s239 = smul.addr %s238, 8
        %s240 = scalar_lea.vmem [#allocation2], %s239
        %p241 = pneg %p44
        %p242 = pneg %p41
        %p243 = pneg %p65
        %p244 = pneg %p62
        %p245 = pneg %p86
        %p246 = pneg %p83
        %p247 = pneg %p107
        %p248 = pneg %p104
        %p249 = pneg %p133
        %p250 = pneg %p130
        %s251 = sand.u32 %s120, 1
        %s252 = scalar_lea.sflag [#allocation4], %s251
        %s253 = sand.u32 %s120, 1
        %s254 = smul.addr %s253, 32
        %s255 = scalar_lea.vmem [#allocation10], %s254
        %v257 = vld [vmem:[%s219] sm:$0xf]
        %v258 = vld [vmem:[%s219 + $0x4] sm:$0x1]
        %v259 = vunpack.c.l.bf16 %v257
        %v260 = vunpack.c.l.bf16 %v258
        %v261 = vld [vmem:[#allocation5] sm:$0x1]
        %v262 = vld [vmem:[#allocation7] sm:$0x1]
        %vm263 = vcmask 523264
        %v264 = vsel %vm263, %v259, 0.0
        %265 = vadd.xlane.f32.xlu0 %v264
        %v266 = vpop.xlane.xlu0 %265
        %vm267 = vcmask 516096
        %v268 = vsel %vm267, %v260, 0.0
        %269 = vadd.xlane.f32.xlu0 %v268
        %v270 = vpop.xlane.xlu0 %269
        %v271 = vrcp.pop 64.0
        %v272 = vmul.f32 %v266, %v271
        %v273 = vmul.f32 %v270, %v271
        %v274 = vsub.f32 %v259, %v272
        %v275 = vsub.f32 %v260, %v273
        %v276 = vmul.f32 %v274, %v274
        %v277 = vmul.f32 %v275, %v275
        %v278 = vsel %vm263, %v276, 0.0
        %279 = vadd.xlane.f32.xlu0 %v278
        %v280 = vpop.xlane.xlu0 %279
        %v281 = vsel %vm267, %v277, 0.0
        %282 = vadd.xlane.f32.xlu0 %v281
        %v283 = vpop.xlane.xlu0 %282
        %v284 = vmul.f32 %v280, %v271
        %v285 = vmul.f32 %v283, %v271
        %v286 = vadd.f32 %v284, 1e-05
        %v287 = vadd.f32 %v285, 1e-05
        %v288 = vrsqrt.pop %v286
        %v289 = vrsqrt.pop %v287
        %v290 = vmul.f32 %v274, %v288
        %v291 = vmul.f32 %v275, %v289
        %v293 = vlaneseq
        %v294 = vshrl.u32 %v293, 7
        %v295 = vsub.s32 0, %v294
        %v296 = vrot.slane %v261, %v295
        %v298 = vmul.f32 %v290, %v296
        %v299 = vmul.f32 %v291, %v296
        %v301 = vlaneseq
        %v302 = vshrl.u32 %v301, 7
        %v303 = vsub.s32 0, %v302
        %v304 = vrot.slane %v262, %v303
        %v306 = vadd.f32 %v298, %v304
        %v307 = vadd.f32 %v299, %v304
        %v308 = vpack.c.bf16 %v307, %v306
        %v309 = vld [vmem:[#allocation8] sm:$0xff]
        %v310 = vld [vmem:[#allocation8 + $0x8] sm:$0xff]
        %v311 = vld [vmem:[#allocation8 + $0x10] sm:$0xff]
        %v312 = vld [vmem:[#allocation8 + $0x18] sm:$0xff]
        %v313 = vld [vmem:[#allocation8 + $0x20] sm:$0xff]
        %v314 = vld [vmem:[#allocation8 + $0x28] sm:$0xff]
        %v315 = vld [vmem:[#allocation8 + $0x30] sm:$0xff]
        %v316 = vld [vmem:[#allocation8 + $0x38] sm:$0xff]
        %v317 = vld [vmem:[#allocation8 + $0x40] sm:$0xff]
        %v318 = vld [vmem:[#allocation8 + $0x48] sm:$0xff]
        %v319 = vld [vmem:[#allocation8 + $0x50] sm:$0xff]
        %v320 = vld [vmem:[#allocation8 + $0x58] sm:$0xff]
        %v321 = vld [vmem:[#allocation8 + $0x60] sm:$0xff]
        %v322 = vld [vmem:[#allocation8 + $0x68] sm:$0xff]
        %v323 = vld [vmem:[#allocation8 + $0x70] sm:$0xff]
        %v324 = vld [vmem:[#allocation8 + $0x78] sm:$0xff]
        %v325 = vld [vmem:[#allocation8 + $0x80] sm:$0xff]
        %v326 = vld [vmem:[#allocation8 + $0x88] sm:$0xff]
        %v327 = vld [vmem:[#allocation8 + $0x90] sm:$0xff]
        %v328 = vld [vmem:[#allocation8 + $0x98] sm:$0xff]
        %v329 = vld [vmem:[#allocation8 + $0xa0] sm:$0xff]
        %v330 = vld [vmem:[#allocation8 + $0xa8] sm:$0xff]
        %v331 = vld [vmem:[#allocation8 + $0xb0] sm:$0xff]
        %v332 = vld [vmem:[#allocation8 + $0xb8] sm:$0xff]
        %v357 = vunpack.c.l.b16 %v309
        %v358 = vunpack.c.h.b16 %v309
        %v359 = vunpack.c.l.b16 %v310
        %v360 = vunpack.c.h.b16 %v310
        %v361 = vunpack.c.l.b16 %v311
        %v362 = vunpack.c.h.b16 %v311
        %v363 = vunpack.c.l.b16 %v312
        %v364 = vunpack.c.h.b16 %v312
        %v365 = vunpack.c.l.b16 %v313
        %v366 = vunpack.c.h.b16 %v313
        %v367 = vunpack.c.l.b16 %v314
        %v368 = vunpack.c.h.b16 %v314
        %v369 = vunpack.c.l.b16 %v315
        %v370 = vunpack.c.h.b16 %v315
        %v371 = vunpack.c.l.b16 %v316
        %v372 = vunpack.c.h.b16 %v316
        %v373 = vunpack.c.l.b16 %v317
        %v374 = vunpack.c.h.b16 %v317
        %v375 = vunpack.c.l.b16 %v318
        %v376 = vunpack.c.h.b16 %v318
        %v377 = vunpack.c.l.b16 %v319
        %v378 = vunpack.c.h.b16 %v319
        %v379 = vunpack.c.l.b16 %v320
        %v380 = vunpack.c.h.b16 %v320
        %v381 = vunpack.c.l.b16 %v321
        %v382 = vunpack.c.h.b16 %v321
        %v383 = vunpack.c.l.b16 %v322
        %v384 = vunpack.c.h.b16 %v322
        %v385 = vunpack.c.l.b16 %v323
        %v386 = vunpack.c.h.b16 %v323
        %v387 = vunpack.c.l.b16 %v324
        %v388 = vunpack.c.h.b16 %v324
        %v389 = vunpack.c.l.b16 %v325
        %v390 = vunpack.c.h.b16 %v325
        %v391 = vunpack.c.l.b16 %v326
        %v392 = vunpack.c.h.b16 %v326
        %v393 = vunpack.c.l.b16 %v327
        %v394 = vunpack.c.h.b16 %v327
        %v395 = vunpack.c.l.b16 %v328
        %v396 = vunpack.c.h.b16 %v328
        %v397 = vunpack.c.l.b16 %v329
        %v398 = vunpack.c.h.b16 %v329
        %v399 = vunpack.c.l.b16 %v330
        %v400 = vunpack.c.h.b16 %v330
        %v401 = vunpack.c.l.b16 %v331
        %v402 = vunpack.c.h.b16 %v331
        %v403 = vunpack.c.l.b16 %v332
        %v404 = vunpack.c.h.b16 %v332
        %v405 = vpack.c.b16 %v363, %v357
        %v406 = vpack.c.b16 %v364, %v358
        %v407 = vpack.c.b16 %v365, %v359
        %v408 = vpack.c.b16 %v366, %v360
        %v409 = vpack.c.b16 %v367, %v361
        %v410 = vpack.c.b16 %v368, %v362
        %v411 = vpack.c.b16 %v375, %v369
        %v412 = vpack.c.b16 %v376, %v370
        %v413 = vpack.c.b16 %v377, %v371
        %v414 = vpack.c.b16 %v378, %v372
        %v415 = vpack.c.b16 %v379, %v373
        %v416 = vpack.c.b16 %v380, %v374
        %v417 = vpack.c.b16 %v387, %v381
        %v418 = vpack.c.b16 %v388, %v382
        %v419 = vpack.c.b16 %v389, %v383
        %v420 = vpack.c.b16 %v390, %v384
        %v421 = vpack.c.b16 %v391, %v385
        %v422 = vpack.c.b16 %v392, %v386
        %v423 = vpack.c.b16 %v399, %v393
        %v424 = vpack.c.b16 %v400, %v394
        %v425 = vpack.c.b16 %v401, %v395
        %v426 = vpack.c.b16 %v402, %v396
        %v427 = vpack.c.b16 %v403, %v397
        %v428 = vpack.c.b16 %v404, %v398
        %v454 = vsel %vm263, %v308, 0
        %456 = vmatprep.subr.bf16.mxu0 %v406
        %457 = vmatpush1.bf16.msra.mxu0 %v405
        %458 = vmatprep.subr.bf16.mxu0 %v412
        %459 = vmatpush1.bf16.msra.mxu0 %v411
        %460 = vmatprep.subr.bf16.mxu0 %v418
        %461 = vmatpush1.bf16.msra.mxu0 %v417
        %462 = vmatprep.subr.bf16.mxu0 %v424
        %463 = vmatpush1.bf16.msra.mxu0 %v423
        %464 = vmatprep.subr.bf16.mxu0 0
        %465 = vmatpush1.bf16.msra.mxu0 0
        %466 = vmatprep.subr.bf16.mxu0 0
        %467 = vmatpush1.bf16.msra.mxu0 0
        %468 = vmatprep.subr.bf16.mxu0 0
        %469 = vmatpush1.bf16.msra.mxu0 0
        %470 = vmatprep.subr.bf16.mxu0 0
        %471 = vmatpush1.bf16.msra.mxu0 0
        %472 = vmatprep.subr.bf16.mxu0 0
        %473 = vmatpush1.bf16.msra.mxu0 0
        %474 = vmatprep.subr.bf16.mxu0 0
        %475 = vmatpush1.bf16.msra.mxu0 0
        %476 = vmatprep.subr.bf16.mxu0 0
        %477 = vmatpush1.bf16.msra.mxu0 0
        %478 = vmatprep.subr.bf16.mxu0 0
        %479 = vmatpush1.bf16.msra.mxu0 0
        %480 = vmatprep.subr.bf16.mxu0 0
        %481 = vmatpush1.bf16.msra.mxu0 0
        %482 = vmatprep.subr.bf16.mxu0 0
        %483 = vmatpush1.bf16.msra.mxu0 0
        %484 = vmatprep.subr.bf16.mxu0 0
        %485 = vmatpush1.bf16.msra.mxu0 0
        %486 = vmatprep.subr.bf16.mxu0 0
        %487 = vmatpush1.bf16.msra.mxu0 0
        %488 = vmatprep.mubr.bf16.mxu0 0
        %489 = vmatmul.mubr.bf16.gmra.mrb[0].mxu0 %v454
        %v490 = vpop.f32.mrb[0].mxu0
        %v491 = vadd.f32 0.0, %v490
        %v492 = vpop.f32.mrb[0].mxu0
        %v493 = vadd.f32 0.0, %v492
        %v494 = vpop.f32.mrb[0].mxu0
        %v495 = vadd.f32 0.0, %v494
        %v496 = vpop.f32.mrb[0].mxu0
        %v497 = vadd.f32 0.0, %v496
        %498 = vdwg.mxu0
        %499 = vmatprep.subr.bf16.mxu0 %v408
        %500 = vmatpush1.bf16.msra.mxu0 %v407
        %501 = vmatprep.subr.bf16.mxu0 %v414
        %502 = vmatpush1.bf16.msra.mxu0 %v413
        %503 = vmatprep.subr.bf16.mxu0 %v420
        %504 = vmatpush1.bf16.msra.mxu0 %v419
        %505 = vmatprep.subr.bf16.mxu0 %v426
        %506 = vmatpush1.bf16.msra.mxu0 %v425
        %507 = vmatprep.subr.bf16.mxu0 0
        %508 = vmatpush1.bf16.msra.mxu0 0
        %509 = vmatprep.subr.bf16.mxu0 0
        %510 = vmatpush1.bf16.msra.mxu0 0
        %511 = vmatprep.subr.bf16.mxu0 0
        %512 = vmatpush1.bf16.msra.mxu0 0
        %513 = vmatprep.subr.bf16.mxu0 0
        %514 = vmatpush1.bf16.msra.mxu0 0
        %515 = vmatprep.subr.bf16.mxu0 0
        %516 = vmatpush1.bf16.msra.mxu0 0
        %517 = vmatprep.subr.bf16.mxu0 0
        %518 = vmatpush1.bf16.msra.mxu0 0
        %519 = vmatprep.subr.bf16.mxu0 0
        %520 = vmatpush1.bf16.msra.mxu0 0
        %521 = vmatprep.subr.bf16.mxu0 0
        %522 = vmatpush1.bf16.msra.mxu0 0
        %523 = vmatprep.subr.bf16.mxu0 0
        %524 = vmatpush1.bf16.msra.mxu0 0
        %525 = vmatprep.subr.bf16.mxu0 0
        %526 = vmatpush1.bf16.msra.mxu0 0
        %527 = vmatprep.subr.bf16.mxu0 0
        %528 = vmatpush1.bf16.msra.mxu0 0
        %529 = vmatprep.subr.bf16.mxu0 0
        %530 = vmatpush1.bf16.msra.mxu0 0
        %531 = vmatprep.mubr.bf16.mxu0 0
        %532 = vmatmul.mubr.bf16.gmra.mrb[0].mxu0 %v454
        %v533 = vpop.f32.mrb[0].mxu0
        %v534 = vadd.f32 0.0, %v533
        %v535 = vpop.f32.mrb[0].mxu0
        %v536 = vadd.f32 0.0, %v535
        %v537 = vpop.f32.mrb[0].mxu0
        %v538 = vadd.f32 0.0, %v537
        %v539 = vpop.f32.mrb[0].mxu0
        %v540 = vadd.f32 0.0, %v539
        %541 = vdwg.mxu0
        %542 = vmatprep.subr.bf16.mxu0 %v410
        %543 = vmatpush1.bf16.msra.mxu0 %v409
        %544 = vmatprep.subr.bf16.mxu0 %v416
        %545 = vmatpush1.bf16.msra.mxu0 %v415
        %546 = vmatprep.subr.bf16.mxu0 %v422
        %547 = vmatpush1.bf16.msra.mxu0 %v421
        %548 = vmatprep.subr.bf16.mxu0 %v428
        %549 = vmatpush1.bf16.msra.mxu0 %v427
        %550 = vmatprep.subr.bf16.mxu0 0
        %551 = vmatpush1.bf16.msra.mxu0 0
        %552 = vmatprep.subr.bf16.mxu0 0
        %553 = vmatpush1.bf16.msra.mxu0 0
        %554 = vmatprep.subr.bf16.mxu0 0
        %555 = vmatpush1.bf16.msra.mxu0 0
        %556 = vmatprep.subr.bf16.mxu0 0
        %557 = vmatpush1.bf16.msra.mxu0 0
        %558 = vmatprep.subr.bf16.mxu0 0
        %559 = vmatpush1.bf16.msra.mxu0 0
        %560 = vmatprep.subr.bf16.mxu0 0
        %561 = vmatpush1.bf16.msra.mxu0 0
        %562 = vmatprep.subr.bf16.mxu0 0
        %563 = vmatpush1.bf16.msra.mxu0 0
        %564 = vmatprep.subr.bf16.mxu0 0
        %565 = vmatpush1.bf16.msra.mxu0 0
        %566 = vmatprep.subr.bf16.mxu0 0
        %567 = vmatpush1.bf16.msra.mxu0 0
        %568 = vmatprep.subr.bf16.mxu0 0
        %569 = vmatpush1.bf16.msra.mxu0 0
        %570 = vmatprep.subr.bf16.mxu0 0
        %571 = vmatpush1.bf16.msra.mxu0 0
        %572 = vmatprep.subr.bf16.mxu0 0
        %573 = vmatpush1.bf16.msra.mxu0 0
        %574 = vmatprep.mubr.bf16.mxu0 0
        %575 = vmatmul.mubr.bf16.gmra.mrb[0].mxu0 %v454
        %v576 = vpop.f32.mrb[0].mxu0
        %v577 = vadd.f32 0.0, %v576
        %v578 = vpop.f32.mrb[0].mxu0
        %v579 = vadd.f32 0.0, %v578
        %v580 = vpop.f32.mrb[0].mxu0
        %v581 = vadd.f32 0.0, %v580
        %v582 = vpop.f32.mrb[0].mxu0
        %v583 = vadd.f32 0.0, %v582
        %584 = vdwg.mxu0
        %v585 = vlaneseq
        %v586 = vshrl.u32 %v585, 7
        %v587 = vadd.s32 %v586, 8
        %vm588 = vcmp.lt.s32.totalorder %v586, 0
        %v589 = vsub.s32 0, %v586
        %v590 = vsel %vm588, %v589, %v586
        %v591 = vmul.u32.u64.compose %v590, 2863311531
        %v592 = vextract.low.u32 %v591
        %v593 = vextract.high.u32 %v591
        %v594 = vshrl.u32 %v593, 1
        %v595 = vmul.u32 %v594, 3
        %v596 = vsub.s32 %v590, %v595
        %v597 = vsub.s32 0, %v596
        %v598 = vsel %vm588, %v597, %v596
        %vm599 = vcmp.lt.s32.totalorder %v587, 0
        %v600 = vsub.s32 0, %v587
        %v601 = vsel %vm599, %v600, %v587
        %v602 = vmul.u32.u64.compose %v601, 2863311531
        %v603 = vextract.low.u32 %v602
        %v604 = vextract.high.u32 %v602
        %v605 = vshrl.u32 %v604, 1
        %v606 = vmul.u32 %v605, 3
        %v607 = vsub.s32 %v601, %v606
        %v608 = vsub.s32 0, %v607
        %v609 = vsel %vm599, %v608, %v607
        %vm610 = vcmp.ne.s32.totalorder %v598, 0
        %vm611 = vcmp.ne.s32.totalorder %v609, 0
        %vm612 = vcmp.lt.s32.totalorder %v598, 0
        %vm613 = vcmp.lt.s32.totalorder %v609, 0
        %vm614 = vmand %vm612, %vm610
        %vm615 = vmand %vm613, %vm611
        %v616 = vadd.s32 %v598, 3
        %v617 = vadd.s32 %v609, 3
        %v618 = vsel %vm614, %v616, %v598
        %v619 = vsel %vm615, %v617, %v609
        %vm620 = vcmp.eq.s32.totalorder %v618, 0
        %vm621 = vcmp.eq.s32.totalorder %v619, 0
        %v622 = vsel %vm620, 1, 0
        %v623 = vsel %vm621, 1, 0
        %v624 = vcvt.s32.f32 %v622
        %v625 = vcvt.s32.f32 %v623
        %v626 = vmul.f32 %v624, %v491
        %v627 = vmul.f32 %v624, %v493
        %v628 = vmul.f32 %v625, %v495
        %v629 = vmul.f32 %v625, %v497
        %v630 = vadd.f32 %v626, 0.0
        %v631 = vadd.f32 %v627, 0.0
        %v632 = vadd.f32 %v628, 0.0
        %v633 = vadd.f32 %v629, 0.0
        %vm634 = vcmp.eq.s32.totalorder %v618, 1
        %vm635 = vcmp.eq.s32.totalorder %v619, 1
        %v636 = vsel %vm634, 1, 0
        %v637 = vsel %vm635, 1, 0
        %v638 = vcvt.s32.f32 %v636
        %v639 = vcvt.s32.f32 %v637
        %v640 = vmul.f32 %v638, %v534
        %v641 = vmul.f32 %v638, %v536
        %v642 = vmul.f32 %v639, %v538
        %v643 = vmul.f32 %v639, %v540
        %v644 = vadd.f32 %v630, %v640
        %v645 = vadd.f32 %v631, %v641
        %v646 = vadd.f32 %v632, %v642
        %v647 = vadd.f32 %v633, %v643
        %vm648 = vcmp.eq.s32.totalorder %v618, 2
        %vm649 = vcmp.eq.s32.totalorder %v619, 2
        %v650 = vsel %vm648, 1, 0
        %v651 = vsel %vm649, 1, 0
        %v652 = vcvt.s32.f32 %v650
        %v653 = vcvt.s32.f32 %v651
        %v654 = vmul.f32 %v652, %v577
        %v655 = vmul.f32 %v652, %v579
        %v656 = vmul.f32 %v653, %v581
        %v657 = vmul.f32 %v653, %v583
        %v658 = vadd.f32 %v644, %v654
        %v659 = vadd.f32 %v645, %v655
        %v660 = vadd.f32 %v646, %v656
        %v661 = vadd.f32 %v647, %v657
        %662 = vst [vmem:[%s255] sm:$0xff] %v658
        %663 = vst [vmem:[%s255 + $0x8] sm:$0xff] %v659
        %664 = vst [vmem:[%s255 + $0x10] sm:$0x1] %v660
        %665 = vst [vmem:[%s255 + $0x18] sm:$0x1] %v661
        %s666 = sand.u32 %s120, 1
        %s667 = scalar_lea.sflag [#allocation4], %s666
        %s668 = sand.u32 %s120, 1
        %s669 = smul.addr %s668, 32
        %s670 = scalar_lea.vmem [#allocation10], %s669
        // Predicated region
        $region53: #{transformer_forward.7} parent=35 // pred_check
          %p671 = pneg %p130
        $region54: #{transformer_forward.7} parent=35 // pred_check_branch
          %673 = sbr.rel (%p671) target = $region56
        $region55: #{transformer_forward.7} parent=35 // pred_region
          %s675 = ssub.s32 512, 512
          %676 = vsyncadd %s667, %s675
          %s677 = smul.addr %s23, 4
          %s678 = smul.addr %s677, 128
          %s679 = scalar_lea.hbm %s4, %s678
          %s680 = sshll.u32 %s670, 4
          %s681 = int_to_ptr.vmem [resolvable:$true] %s680
          %686 = dma.vmem_to_hbm [thread:$0]  %s681, 512, %s679, %s667, 256, 256, 16
        $region56: #{transformer_forward.7} parent=35 // pred_fallthru
          _
      $region36: #{transformer_forward.7} parent=5 // pred_fallthru
        _
      %p687 = scmp.le.s32.totalorder 2, %s18
      // Predicated region
      $region57: #{transformer_forward.7} parent=5 // pred_check
        %p688 = pneg %p687
      $region58: #{transformer_forward.7} parent=5 // pred_check_branch
        %690 = sbr.rel (%p688) target = $region60
      $region59: #{transformer_forward.7} parent=5 // pred_region
        %s691 = ssub.s32 %s18, 2
        // Predicated region
        $region61: #{transformer_forward.7} parent=59 // pred_check
          %p692 = pneg %p136
        $region62: #{transformer_forward.7} parent=59 // pred_check_branch
          %694 = sbr.rel (%p692) target = $region64
        $region63: #{transformer_forward.7} parent=59 // pred_region
          %s695 = sand.u32 %s121, 1
          %s696 = scalar_lea.sflag [#allocation4], %s695
          %s697 = sand.u32 %s121, 1
          %s698 = smul.addr %s697, 32
          %s699 = scalar_lea.vmem [#allocation10], %s698
          %700 = dma.done %s696, 512
        $region64: #{transformer_forward.7} parent=59 // pred_fallthru
          _
      $region60: #{transformer_forward.7} parent=5 // pred_fallthru
        _
    $region6: #{transformer_forward.7} parent=1 // loop_footer
      %s22 = sadd.s32 1, %s18
    $region7: #{transformer_forward.7} parent=1 // loop_footer_branch
      %17 = sbr.rel target = $region3
    $region8: #{transformer_forward.7} parent=1 // loop_exit
      _
    %701 = vsyncpa [#allocation3], 1
    %s702 = scalar_lea.sflag [#allocation3], 1
    %703 = vsyncpa %s702, 1
    %704 = vsyncpa [#allocation6], 1
    %705 = vsyncpa [#allocation9], 1
    %706 = vsyncpa [#allocation4], 1
    %s707 = scalar_lea.sflag [#allocation4], 1
    %708 = vsyncpa %s707, 1

// kernel: transformer_forward.5
$region0: #{transformer_forward.5}
  #allocation0 [shape = 'u32[]', space=smem, size = 0x4, offset = 0x4, fixed_abs, tag = 'smem constant byte address 0x4 - core index']
  #allocation1 [shape = 'u32[144,128]{1,0:T(1,128)}', space=vmem, size = 0x12000, scoped, tag = 'internal scratch']
  %s0 = inlined_call_operand.hbm [shape: bf16[2,9,64], index: 0, kind: input, shape index: {}]
  %s1 = inlined_call_operand.hbm [shape: f32[1,64], index: 1, kind: input, shape index: {}]
  %s2 = inlined_call_operand.hbm [shape: f32[1,64], index: 2, kind: input, shape index: {}]
  %s3 = inlined_call_operand.hbm [shape: bf16[2,64,32], index: 3, kind: input, shape index: {}]
  %s4 = inlined_call_operand.hbm [shape: bf16[2,64,32], index: 4, kind: input, shape index: {}]
  %s5 = inlined_call_operand.hbm [shape: bf16[2,64,32], index: 5, kind: input, shape index: {}]
  %s6 = inlined_call_operand.hbm [shape: bf16[2,64,32], index: 6, kind: input, shape index: {}]
  %s7 = inlined_call_operand.hbm [shape: bf16[2,64,32], index: 7, kind: input, shape index: {}]
  %s8 = inlined_call_operand.hbm [shape: bf16[2,32,64], index: 8, kind: input, shape index: {}]
  %s9 = inlined_call_operand.hbm [shape: f32[9,32], index: 9, kind: input, shape index: {}]
  %s10 = inlined_call_operand.hbm [shape: f32[9,32], index: 10, kind: input, shape index: {}]
  %s11 = inlined_call_operand.hbm [shape: f32[1,64], index: 11, kind: input, shape index: {}]
  %s12 = inlined_call_operand.hbm [shape: f32[1,64], index: 12, kind: input, shape index: {}]
  %s13 = inlined_call_operand.hbm [shape: bf16[64,128], index: 13, kind: input, shape index: {}]
  %s14 = inlined_call_operand.hbm [shape: bf16[64,128], index: 14, kind: input, shape index: {}]
  %s15 = inlined_call_operand.hbm [shape: bf16[128,64], index: 15, kind: input, shape index: {}]
  %s16 = inlined_call_operand.hbm [shape: bf16[2,9,64], index: 16, kind: output, shape index: {}]
  %s17 = sld [smem:[#allocation0]]
  $region161: #{transformer_forward.5} parent=0
    _
  %s19 = ssub.s32 1, %s17
  %s20 = scalar_select 0, %s19, %s17
  $region1: #{transformer_forward.5} parent=0
    #allocation2 [shape = 'u8[8192]{0}', space=vmem, size = 0x2000, scoped, tag = 'input window, operand 0']
    #allocation3 [shape = 's32[2]{0}', space=sflag, size = 0x8, scoped, tag = 'scoped memory for transformer_forward.5']
    #allocation4 [shape = 's32[2]{0}', space=sflag, size = 0x8, scoped, tag = 'scoped memory for transformer_forward.5']
    #allocation5 [shape = 'u8[512]{0}', space=vmem, size = 0x400, scoped, tag = 'input window, operand 1, single buffered']
    #allocation6 [shape = 's32[1]{0}', space=sflag, size = 0x4, scoped, tag = 'scoped memory for transformer_forward.5']
    #allocation7 [shape = 'u8[512]{0}', space=vmem, size = 0x400, scoped, tag = 'input window, operand 2, single buffered']
    #allocation8 [shape = 'u8[32768]{0}', space=vmem, size = 0x8000, scoped, tag = 'input window, operand 3, single buffered']
    #allocation9 [shape = 's32[1]{0}', space=sflag, size = 0x4, scoped, tag = 'scoped memory for transformer_forward.5']
    #allocation10 [shape = 'u8[32768]{0}', space=vmem, size = 0x8000, scoped, tag = 'input window, operand 4, single buffered']
    #allocation11 [shape = 'u8[32768]{0}', space=vmem, size = 0x8000, scoped, tag = 'input window, operand 5, single buffered']
    #allocation12 [shape = 's32[1]{0}', space=sflag, size = 0x4, scoped, tag = 'scoped memory for transformer_forward.5']
    #allocation13 [shape = 'u8[32768]{0}', space=vmem, size = 0x8000, scoped, tag = 'input window, operand 6, single buffered']
    #allocation14 [shape = 'u8[32768]{0}', space=vmem, size = 0x8000, scoped, tag = 'input window, operand 7, single buffered']
    #allocation15 [shape = 's32[1]{0}', space=sflag, size = 0x4, scoped, tag = 'scoped memory for transformer_forward.5']
    #allocation16 [shape = 'u8[16384]{0}', space=vmem, size = 0x4000, scoped, tag = 'input window, operand 8, single buffered']
    #allocation17 [shape = 'u8[8192]{0}', space=vmem, size = 0x2000, scoped, tag = 'input window, operand 9, single buffered']
    #allocation18 [shape = 's32[1]{0}', space=sflag, size = 0x4, scoped, tag = 'scoped memory for transformer_forward.5']
    #allocation19 [shape = 'u8[8192]{0}', space=vmem, size = 0x2000, scoped, tag = 'input window, operand 10, single buffered']
    #allocation20 [shape = 'u8[512]{0}', space=vmem, size = 0x400, scoped, tag = 'input window, operand 11, single buffered']
    #allocation21 [shape = 's32[1]{0}', space=sflag, size = 0x4, scoped, tag = 'scoped memory for transformer_forward.5']
    #allocation22 [shape = 'u8[512]{0}', space=vmem, size = 0x400, scoped, tag = 'input window, operand 12, single buffered']
    #allocation23 [shape = 'u8[16384]{0}', space=vmem, size = 0x4000, scoped, tag = 'input window, operand 13, single buffered']
    #allocation24 [shape = 's32[1]{0}', space=sflag, size = 0x4, scoped, tag = 'scoped memory for transformer_forward.5']
    #allocation25 [shape = 'u8[16384]{0}', space=vmem, size = 0x4000, scoped, tag = 'input window, operand 14, single buffered']
    #allocation26 [shape = 'u8[32768]{0}', space=vmem, size = 0x8000, scoped, tag = 'input window, operand 15, single buffered']
    #allocation27 [shape = 's32[1]{0}', space=sflag, size = 0x4, scoped, tag = 'scoped memory for transformer_forward.5']
    #allocation28 [shape = 'u8[8192]{0}', space=vmem, size = 0x2000, scoped, tag = 'output window, operand 0']
    %21 = vsyncpa [#allocation3], 0
    %s22 = scalar_lea.sflag [#allocation3], 1
    %23 = vsyncpa %s22, 0
    %24 = vsyncpa [#allocation6], 0
    %25 = vsyncpa [#allocation9], 0
    %26 = vsyncpa [#allocation12], 0
    %27 = vsyncpa [#allocation15], 0
    %28 = vsyncpa [#allocation18], 0
    %29 = vsyncpa [#allocation21], 0
    %30 = vsyncpa [#allocation24], 0
    %31 = vsyncpa [#allocation27], 0
    %32 = vsyncpa [#allocation4], 0
    %s33 = scalar_lea.sflag [#allocation4], 1
    %34 = vsyncpa %s33, 0
    loop: start=0, step=1, limit=4
    $region2: #{transformer_forward.5} parent=1 // loop_pre_header
      _
    $region3: #{transformer_forward.5} parent=1 // loop_header
      %s36 = sphi 0, %s40
      %p37 = scmp.ge.s32.totalorder %s36, 4
      %s46 = sphi 0, %s48
      %s49 = sphi 0, %s46
      %s50 = sphi 0, %s49
      %s66 = sphi 0, %s50
      %s70 = sphi 0, %s70
      %s72 = sphi 0, %s70
      %s73 = sphi 0, %s72
      %s87 = sphi 0, %s73
      %s91 = sphi 0, %s91
      %s93 = sphi 0, %s91
      %s94 = sphi 0, %s93
      %s108 = sphi 0, %s94
      %s112 = sphi 0, %s112
      %s114 = sphi 0, %s112
      %s115 = sphi 0, %s114
      %s129 = sphi 0, %s115
      %s133 = sphi 0, %s133
      %s135 = sphi 0, %s133
      %s136 = sphi 0, %s135
      %s150 = sphi 0, %s136
      %s154 = sphi 0, %s154
      %s156 = sphi 0, %s154
      %s157 = sphi 0, %s156
      %s171 = sphi 0, %s157
      %s175 = sphi 0, %s175
      %s177 = sphi 0, %s175
      %s178 = sphi 0, %s177
      %s192 = sphi 0, %s178
      %s196 = sphi 0, %s196
      %s198 = sphi 0, %s196
      %s199 = sphi 0, %s198
      %s213 = sphi 0, %s199
      %s217 = sphi 0, %s217
      %s219 = sphi 0, %s217
      %s220 = sphi 0, %s219
      %s234 = sphi 0, %s220
      %s238 = sphi 0, %s238
      %s240 = sphi 0, %s238
      %s241 = sphi 0, %s240
      %s255 = sphi 0, %s241
      %s259 = sphi 0, %s259
      %s261 = sphi 0, %s259
      %s262 = sphi 0, %s261
      %s276 = sphi 0, %s262
      %s280 = sphi 0, %s280
      %s282 = sphi 0, %s280
      %s283 = sphi 0, %s282
      %s297 = sphi 0, %s283
      %s301 = sphi 0, %s301
      %s303 = sphi 0, %s301
      %s304 = sphi 0, %s303
      %s318 = sphi 0, %s304
      %s322 = sphi 0, %s322
      %s324 = sphi 0, %s322
      %s325 = sphi 0, %s324
      %s339 = sphi 0, %s325
      %s343 = sphi 0, %s343
      %s345 = sphi 0, %s343
      %s346 = sphi 0, %s345
      %s360 = sphi 0, %s346
      %s364 = sphi 0, %s364
      %s366 = sphi 0, %s364
      %s367 = sphi 0, %s366
      %s381 = sphi 0, %s367
      %s387 = sphi 0, %s389
      %s390 = sphi 0, %s387
      %s391 = sphi 0, %s390
      %s407 = sphi 0, %s391
    $region4: #{transformer_forward.5} parent=1 // loop_header_branch
      %39 = sbr.rel (%p37) target = $region8
    $region5: #{transformer_forward.5} parent=1 // loop_body
      %s41 = ssub.s32 %s36, 1
      %s42 = ssub.s32 %s36, 2
      %s43 = sadd.s32 %s36, 1
      %s44 = ssub.s32 %s36, %s43
      %p45 = scmp.eq.s32.totalorder %s44, 0
      %s47 = sadd.s32 %s46, 1
      %s48 = scalar_select %p45, %s46, %s47
      %p51 = pneg %p45
      %p52 = scmp.eq.s32.totalorder %s36, 1
      %p53 = por %p51, %p52
      %p54 = scmp.ne.s32.totalorder %s46, %s49
      %p55 = scmp.eq.s32.totalorder %s36, 0
      %p56 = por %p54, %p55
      %p57 = scmp.ne.s32.totalorder %s46, %s49
      %p58 = scmp.eq.s32.totalorder %s41, 1
      %p59 = por %p57, %p58
      %p60 = scmp.ne.s32.totalorder %s49, %s50
      %p61 = scmp.eq.s32.totalorder %s41, 0
      %p62 = por %p60, %p61
      %p63 = scmp.ne.s32.totalorder %s49, %s50
      %p64 = scmp.eq.s32.totalorder %s42, 1
      %p65 = por %p63, %p64
      %p67 = scmp.ne.s32.totalorder %s50, %s66
      %p68 = scmp.eq.s32.totalorder %s42, 0
      %p69 = por %p67, %p68
      %s71 = sadd.s32 %s70, 1
      %p74 = scmp.eq.s32.totalorder %s36, 1
      %p75 = scmp.ne.s32.totalorder %s70, %s72
      %p76 = scmp.eq.s32.totalorder %s36, 0
      %p77 = por %p75, %p76
      %p78 = scmp.ne.s32.totalorder %s70, %s72
      %p79 = scmp.eq.s32.totalorder %s41, 1
      %p80 = por %p78, %p79
      %p81 = scmp.ne.s32.totalorder %s72, %s73
      %p82 = scmp.eq.s32.totalorder %s41, 0
      %p83 = por %p81, %p82
      %p84 = scmp.ne.s32.totalorder %s72, %s73
      %p85 = scmp.eq.s32.totalorder %s42, 1
      %p86 = por %p84, %p85
      %p88 = scmp.ne.s32.totalorder %s73, %s87
      %p89 = scmp.eq.s32.totalorder %s42, 0
      %p90 = por %p88, %p89
      %s92 = sadd.s32 %s91, 1
      %p95 = scmp.eq.s32.totalorder %s36, 1
      %p96 = scmp.ne.s32.totalorder %s91, %s93
      %p97 = scmp.eq.s32.totalorder %s36, 0
      %p98 = por %p96, %p97
      %p99 = scmp.ne.s32.totalorder %s91, %s93
      %p100 = scmp.eq.s32.totalorder %s41, 1
      %p101 = por %p99, %p100
      %p102 = scmp.ne.s32.totalorder %s93, %s94
      %p103 = scmp.eq.s32.totalorder %s41, 0
      %p104 = por %p102, %p103
      %p105 = scmp.ne.s32.totalorder %s93, %s94
      %p106 = scmp.eq.s32.totalorder %s42, 1
      %p107 = por %p105, %p106
      %p109 = scmp.ne.s32.totalorder %s94, %s108
      %p110 = scmp.eq.s32.totalorder %s42, 0
      %p111 = por %p109, %p110
      %s113 = sadd.s32 %s112, 1
      %p116 = scmp.eq.s32.totalorder %s36, 1
      %p117 = scmp.ne.s32.totalorder %s112, %s114
      %p118 = scmp.eq.s32.totalorder %s36, 0
      %p119 = por %p117, %p118
      %p120 = scmp.ne.s32.totalorder %s112, %s114
      %p121 = scmp.eq.s32.totalorder %s41, 1
      %p122 = por %p120, %p121
      %p123 = scmp.ne.s32.totalorder %s114, %s115
      %p124 = scmp.eq.s32.totalorder %s41, 0
      %p125 = por %p123, %p124
      %p126 = scmp.ne.s32.totalorder %s114, %s115
      %p127 = scmp.eq.s32.totalorder %s42, 1
      %p128 = por %p126, %p127
      %p130 = scmp.ne.s32.totalorder %s115, %s129
      %p131 = scmp.eq.s32.totalorder %s42, 0
      %p132 = por %p130, %p131
      %s134 = sadd.s32 %s133, 1
      %p137 = scmp.eq.s32.totalorder %s36, 1
      %p138 = scmp.ne.s32.totalorder %s133, %s135
      %p139 = scmp.eq.s32.totalorder %s36, 0
      %p140 = por %p138, %p139
      %p141 = scmp.ne.s32.totalorder %s133, %s135
      %p142 = scmp.eq.s32.totalorder %s41, 1
      %p143 = por %p141, %p142
      %p144 = scmp.ne.s32.totalorder %s135, %s136
      %p145 = scmp.eq.s32.totalorder %s41, 0
      %p146 = por %p144, %p145
      %p147 = scmp.ne.s32.totalorder %s135, %s136
      %p148 = scmp.eq.s32.totalorder %s42, 1
      %p149 = por %p147, %p148
      %p151 = scmp.ne.s32.totalorder %s136, %s150
      %p152 = scmp.eq.s32.totalorder %s42, 0
      %p153 = por %p151, %p152
      %s155 = sadd.s32 %s154, 1
      %p158 = scmp.eq.s32.totalorder %s36, 1
      %p159 = scmp.ne.s32.totalorder %s154, %s156
      %p160 = scmp.eq.s32.totalorder %s36, 0
      %p161 = por %p159, %p160
      %p162 = scmp.ne.s32.totalorder %s154, %s156
      %p163 = scmp.eq.s32.totalorder %s41, 1
      %p164 = por %p162, %p163
      %p165 = scmp.ne.s32.totalorder %s156, %s157
      %p166 = scmp.eq.s32.totalorder %s41, 0
      %p167 = por %p165, %p166
      %p168 = scmp.ne.s32.totalorder %s156, %s157
      %p169 = scmp.eq.s32.totalorder %s42, 1
      %p170 = por %p168, %p169
      %p172 = scmp.ne.s32.totalorder %s157, %s171
      %p173 = scmp.eq.s32.totalorder %s42, 0
      %p174 = por %p172, %p173
      %s176 = sadd.s32 %s175, 1
      %p179 = scmp.eq.s32.totalorder %s36, 1
      %p180 = scmp.ne.s32.totalorder %s175, %s177
      %p181 = scmp.eq.s32.totalorder %s36, 0
      %p182 = por %p180, %p181
      %p183 = scmp.ne.s32.totalorder %s175, %s177
      %p184 = scmp.eq.s32.totalorder %s41, 1
      %p185 = por %p183, %p184
      %p186 = scmp.ne.s32.totalorder %s177, %s178
      %p187 = scmp.eq.s32.totalorder %s41, 0
      %p188 = por %p186, %p187
      %p189 = scmp.ne.s32.totalorder %s177, %s178
      %p190 = scmp.eq.s32.totalorder %s42, 1
      %p191 = por %p189, %p190
      %p193 = scmp.ne.s32.totalorder %s178, %s192
      %p194 = scmp.eq.s32.totalorder %s42, 0
      %p195 = por %p193, %p194
      %s197 = sadd.s32 %s196, 1
      %p200 = scmp.eq.s32.totalorder %s36, 1
      %p201 = scmp.ne.s32.totalorder %s196, %s198
      %p202 = scmp.eq.s32.totalorder %s36, 0
      %p203 = por %p201, %p202
      %p204 = scmp.ne.s32.totalorder %s196, %s198
      %p205 = scmp.eq.s32.totalorder %s41, 1
      %p206 = por %p204, %p205
      %p207 = scmp.ne.s32.totalorder %s198, %s199
      %p208 = scmp.eq.s32.totalorder %s41, 0
      %p209 = por %p207, %p208
      %p210 = scmp.ne.s32.totalorder %s198, %s199
      %p211 = scmp.eq.s32.totalorder %s42, 1
      %p212 = por %p210, %p211
      %p214 = scmp.ne.s32.totalorder %s199, %s213
      %p215 = scmp.eq.s32.totalorder %s42, 0
      %p216 = por %p214, %p215
      %s218 = sadd.s32 %s217, 1
      %p221 = scmp.eq.s32.totalorder %s36, 1
      %p222 = scmp.ne.s32.totalorder %s217, %s219
      %p223 = scmp.eq.s32.totalorder %s36, 0
      %p224 = por %p222, %p223
      %p225 = scmp.ne.s32.totalorder %s217, %s219
      %p226 = scmp.eq.s32.totalorder %s41, 1
      %p227 = por %p225, %p226
      %p228 = scmp.ne.s32.totalorder %s219, %s220
      %p229 = scmp.eq.s32.totalorder %s41, 0
      %p230 = por %p228, %p229
      %p231 = scmp.ne.s32.totalorder %s219, %s220
      %p232 = scmp.eq.s32.totalorder %s42, 1
      %p233 = por %p231, %p232
      %p235 = scmp.ne.s32.totalorder %s220, %s234
      %p236 = scmp.eq.s32.totalorder %s42, 0
      %p237 = por %p235, %p236
      %s239 = sadd.s32 %s238, 1
      %p242 = scmp.eq.s32.totalorder %s36, 1
      %p243 = scmp.ne.s32.totalorder %s238, %s240
      %p244 = scmp.eq.s32.totalorder %s36, 0
      %p245 = por %p243, %p244
      %p246 = scmp.ne.s32.totalorder %s238, %s240
      %p247 = scmp.eq.s32.totalorder %s41, 1
      %p248 = por %p246, %p247
      %p249 = scmp.ne.s32.totalorder %s240, %s241
      %p250 = scmp.eq.s32.totalorder %s41, 0
      %p251 = por %p249, %p250
      %p252 = scmp.ne.s32.totalorder %s240, %s241
      %p253 = scmp.eq.s32.totalorder %s42, 1
      %p254 = por %p252, %p253
      %p256 = scmp.ne.s32.totalorder %s241, %s255
      %p257 = scmp.eq.s32.totalorder %s42, 0
      %p258 = por %p256, %p257
      %s260 = sadd.s32 %s259, 1
      %p263 = scmp.eq.s32.totalorder %s36, 1
      %p264 = scmp.ne.s32.totalorder %s259, %s261
      %p265 = scmp.eq.s32.totalorder %s36, 0
      %p266 = por %p264, %p265
      %p267 = scmp.ne.s32.totalorder %s259, %s261
      %p268 = scmp.eq.s32.totalorder %s41, 1
      %p269 = por %p267, %p268
      %p270 = scmp.ne.s32.totalorder %s261, %s262
      %p271 = scmp.eq.s32.totalorder %s41, 0
      %p272 = por %p270, %p271
      %p273 = scmp.ne.s32.totalorder %s261, %s262
      %p274 = scmp.eq.s32.totalorder %s42, 1
      %p275 = por %p273, %p274
      %p277 = scmp.ne.s32.totalorder %s262, %s276
      %p278 = scmp.eq.s32.totalorder %s42, 0
      %p279 = por %p277, %p278
      %s281 = sadd.s32 %s280, 1
      %p284 = scmp.eq.s32.totalorder %s36, 1
      %p285 = scmp.ne.s32.totalorder %s280, %s282
      %p286 = scmp.eq.s32.totalorder %s36, 0
      %p287 = por %p285, %p286
      %p288 = scmp.ne.s32.totalorder %s280, %s282
      %p289 = scmp.eq.s32.totalorder %s41, 1
      %p290 = por %p288, %p289
      %p291 = scmp.ne.s32.totalorder %s282, %s283
      %p292 = scmp.eq.s32.totalorder %s41, 0
      %p293 = por %p291, %p292
      %p294 = scmp.ne.s32.totalorder %s282, %s283
      %p295 = scmp.eq.s32.totalorder %s42, 1
      %p296 = por %p294, %p295
      %p298 = scmp.ne.s32.totalorder %s283, %s297
      %p299 = scmp.eq.s32.totalorder %s42, 0
      %p300 = por %p298, %p299
      %s302 = sadd.s32 %s301, 1
      %p305 = scmp.eq.s32.totalorder %s36, 1
      %p306 = scmp.ne.s32.totalorder %s301, %s303
      %p307 = scmp.eq.s32.totalorder %s36, 0
      %p308 = por %p306, %p307
      %p309 = scmp.ne.s32.totalorder %s301, %s303
      %p310 = scmp.eq.s32.totalorder %s41, 1
      %p311 = por %p309, %p310
      %p312 = scmp.ne.s32.totalorder %s303, %s304
      %p313 = scmp.eq.s32.totalorder %s41, 0
      %p314 = por %p312, %p313
      %p315 = scmp.ne.s32.totalorder %s303, %s304
      %p316 = scmp.eq.s32.totalorder %s42, 1
      %p317 = por %p315, %p316
      %p319 = scmp.ne.s32.totalorder %s304, %s318
      %p320 = scmp.eq.s32.totalorder %s42, 0
      %p321 = por %p319, %p320
      %s323 = sadd.s32 %s322, 1
      %p326 = scmp.eq.s32.totalorder %s36, 1
      %p327 = scmp.ne.s32.totalorder %s322, %s324
      %p328 = scmp.eq.s32.totalorder %s36, 0
      %p329 = por %p327, %p328
      %p330 = scmp.ne.s32.totalorder %s322, %s324
      %p331 = scmp.eq.s32.totalorder %s41, 1
      %p332 = por %p330, %p331
      %p333 = scmp.ne.s32.totalorder %s324, %s325
      %p334 = scmp.eq.s32.totalorder %s41, 0
      %p335 = por %p333, %p334
      %p336 = scmp.ne.s32.totalorder %s324, %s325
      %p337 = scmp.eq.s32.totalorder %s42, 1
      %p338 = por %p336, %p337
      %p340 = scmp.ne.s32.totalorder %s325, %s339
      %p341 = scmp.eq.s32.totalorder %s42, 0
      %p342 = por %p340, %p341
      %s344 = sadd.s32 %s343, 1
      %p347 = scmp.eq.s32.totalorder %s36, 1
      %p348 = scmp.ne.s32.totalorder %s343, %s345
      %p349 = scmp.eq.s32.totalorder %s36, 0
      %p350 = por %p348, %p349
      %p351 = scmp.ne.s32.totalorder %s343, %s345
      %p352 = scmp.eq.s32.totalorder %s41, 1
      %p353 = por %p351, %p352
      %p354 = scmp.ne.s32.totalorder %s345, %s346
      %p355 = scmp.eq.s32.totalorder %s41, 0
      %p356 = por %p354, %p355
      %p357 = scmp.ne.s32.totalorder %s345, %s346
      %p358 = scmp.eq.s32.totalorder %s42, 1
      %p359 = por %p357, %p358
      %p361 = scmp.ne.s32.totalorder %s346, %s360
      %p362 = scmp.eq.s32.totalorder %s42, 0
      %p363 = por %p361, %p362
      %s365 = sadd.s32 %s364, 1
      %p368 = scmp.eq.s32.totalorder %s36, 1
      %p369 = scmp.ne.s32.totalorder %s364, %s366
      %p370 = scmp.eq.s32.totalorder %s36, 0
      %p371 = por %p369, %p370
      %p372 = scmp.ne.s32.totalorder %s364, %s366
      %p373 = scmp.eq.s32.totalorder %s41, 1
      %p374 = por %p372, %p373
      %p375 = scmp.ne.s32.totalorder %s366, %s367
      %p376 = scmp.eq.s32.totalorder %s41, 0
      %p377 = por %p375, %p376
      %p378 = scmp.ne.s32.totalorder %s366, %s367
      %p379 = scmp.eq.s32.totalorder %s42, 1
      %p380 = por %p378, %p379
      %p382 = scmp.ne.s32.totalorder %s367, %s381
      %p383 = scmp.eq.s32.totalorder %s42, 0
      %p384 = por %p382, %p383
      %s385 = ssub.s32 %s36, %s43
      %p386 = scmp.eq.s32.totalorder %s385, 0
      %s388 = sadd.s32 %s387, 1
      %s389 = scalar_select %p386, %s387, %s388
      %p392 = pneg %p386
      %p393 = scmp.eq.s32.totalorder %s36, 1
      %p394 = por %p392, %p393
      %p395 = scmp.ne.s32.totalorder %s387, %s390
      %p396 = scmp.eq.s32.totalorder %s36, 0
      %p397 = por %p395, %p396
      %p398 = scmp.ne.s32.totalorder %s387, %s390
      %p399 = scmp.eq.s32.totalorder %s41, 1
      %p400 = por %p398, %p399
      %p401 = scmp.ne.s32.totalorder %s390, %s391
      %p402 = scmp.eq.s32.totalorder %s41, 0
      %p403 = por %p401, %p402
      %p404 = scmp.ne.s32.totalorder %s390, %s391
      %p405 = scmp.eq.s32.totalorder %s42, 1
      %p406 = por %p404, %p405
      %p408 = scmp.ne.s32.totalorder %s391, %s407
      %p409 = scmp.eq.s32.totalorder %s42, 0
      %p410 = por %p408, %p409
      %p411 = scmp.le.s32.totalorder 1, %s36
      %p412 = scmp.lt.s32.totalorder %s36, 3
      %p413 = pnand %p411, %p412
      %p414 = pneg %p413
      // Predicated region
      $region9: #{transformer_forward.5} parent=5 // pred_check
        _
      $region10: #{transformer_forward.5} parent=5 // pred_check_branch
        %416 = sbr.rel (%p413) target = $region12
      $region11: #{transformer_forward.5} parent=5 // pred_region
        %s417 = ssub.s32 %s36, 1
        // Predicated region
        $region13: #{transformer_forward.5} parent=11 // pred_check
          %p418 = pneg %p83
        $region14: #{transformer_forward.5} parent=11 // pred_check_branch
          %420 = sbr.rel (%p418) target = $region16
        $region15: #{transformer_forward.5} parent=11 // pred_region
          %s422 = ssub.s32 16, 16
          %423 = vsyncadd [#allocation6], %s422
          %s425 = sshll.u32 [#allocation5], 4
          %s426 = int_to_ptr.vmem [resolvable:$true] %s425
          %428 = dma.hbm_to_vmem [thread:$0]  %s1, 16, %s426, [#allocation6]
        $region16: #{transformer_forward.5} parent=11 // pred_fallthru
          _
        // Predicated region
        $region17: #{transformer_forward.5} parent=11 // pred_check
          %p429 = pneg %p104
        $region18: #{transformer_forward.5} parent=11 // pred_check_branch
          %431 = sbr.rel (%p429) target = $region20
        $region19: #{transformer_forward.5} parent=11 // pred_region
          %s433 = ssub.s32 16, 16
          %434 = vsyncadd [#allocation6], %s433
          %s436 = sshll.u32 [#allocation7], 4
          %s437 = int_to_ptr.vmem [resolvable:$true] %s436
          %439 = dma.hbm_to_vmem [thread:$0]  %s2, 16, %s437, [#allocation6]
        $region20: #{transformer_forward.5} parent=11 // pred_fallthru
          _
        // Predicated region
        $region21: #{transformer_forward.5} parent=11 // pred_check
          %p440 = pneg %p125
        $region22: #{transformer_forward.5} parent=11 // pred_check_branch
          %442 = sbr.rel (%p440) target = $region24
        $region23: #{transformer_forward.5} parent=11 // pred_region
          %s444 = ssub.s32 1024, 1024
          %445 = vsyncadd [#allocation9], %s444
          %s446 = sshll.u32 [#allocation8], 4
          %s447 = int_to_ptr.vmem [resolvable:$true] %s446
          %452 = dma.hbm_to_vmem [thread:$0]  %s3, 1024, %s447, [#allocation9], 64, 64, 4
        $region24: #{transformer_forward.5} parent=11 // pred_fallthru
          _
        // Predicated region
        $region25: #{transformer_forward.5} parent=11 // pred_check
          %p453 = pneg %p146
        $region26: #{transformer_forward.5} parent=11 // pred_check_branch
          %455 = sbr.rel (%p453) target = $region28
        $region27: #{transformer_forward.5} parent=11 // pred_region
          %s457 = ssub.s32 1024, 1024
          %458 = vsyncadd [#allocation9], %s457
          %s459 = sshll.u32 [#allocation10], 4
          %s460 = int_to_ptr.vmem [resolvable:$true] %s459
          %465 = dma.hbm_to_vmem [thread:$0]  %s4, 1024, %s460, [#allocation9], 64, 64, 4
        $region28: #{transformer_forward.5} parent=11 // pred_fallthru
          _
        // Predicated region
        $region29: #{transformer_forward.5} parent=11 // pred_check
          %p466 = pneg %p167
        $region30: #{transformer_forward.5} parent=11 // pred_check_branch
          %468 = sbr.rel (%p466) target = $region32
        $region31: #{transformer_forward.5} parent=11 // pred_region
          %s470 = ssub.s32 1024, 1024
          %471 = vsyncadd [#allocation12], %s470
          %s472 = sshll.u32 [#allocation11], 4
          %s473 = int_to_ptr.vmem [resolvable:$true] %s472
          %478 = dma.hbm_to_vmem [thread:$0]  %s5, 1024, %s473, [#allocation12], 64, 64, 4
        $region32: #{transformer_forward.5} parent=11 // pred_fallthru
          _
        // Predicated region
        $region33: #{transformer_forward.5} parent=11 // pred_check
          %p479 = pneg %p188
        $region34: #{transformer_forward.5} parent=11 // pred_check_branch
          %481 = sbr.rel (%p479) target = $region36
        $region35: #{transformer_forward.5} parent=11 // pred_region
          %s483 = ssub.s32 1024, 1024
          %484 = vsyncadd [#allocation12], %s483
          %s485 = sshll.u32 [#allocation13], 4
          %s486 = int_to_ptr.vmem [resolvable:$true] %s485
          %491 = dma.hbm_to_vmem [thread:$0]  %s6, 1024, %s486, [#allocation12], 64, 64, 4
        $region36: #{transformer_forward.5} parent=11 // pred_fallthru
          _
        // Predicated region
        $region37: #{transformer_forward.5} parent=11 // pred_check
          %p492 = pneg %p209
        $region38: #{transformer_forward.5} parent=11 // pred_check_branch
          %494 = sbr.rel (%p492) target = $region40
        $region39: #{transformer_forward.5} parent=11 // pred_region
          %s496 = ssub.s32 1024, 1024
          %497 = vsyncadd [#allocation15], %s496
          %s498 = sshll.u32 [#allocation14], 4
          %s499 = int_to_ptr.vmem [resolvable:$true] %s498
          %504 = dma.hbm_to_vmem [thread:$0]  %s7, 1024, %s499, [#allocation15], 64, 64, 4
        $region40: #{transformer_forward.5} parent=11 // pred_fallthru
          _
        // Predicated region
        $region41: #{transformer_forward.5} parent=11 // pred_check
          %p505 = pneg %p230
        $region42: #{transformer_forward.5} parent=11 // pred_check_branch
          %507 = sbr.rel (%p505) target = $region44
        $region43: #{transformer_forward.5} parent=11 // pred_region
          %s509 = ssub.s32 512, 512
          %510 = vsyncadd [#allocation15], %s509
          %s511 = sshll.u32 [#allocation16], 4
          %s512 = int_to_ptr.vmem [resolvable:$true] %s511
          %517 = dma.hbm_to_vmem [thread:$0]  %s8, 512, %s512, [#allocation15], 64, 64, 4
        $region44: #{transformer_forward.5} parent=11 // pred_fallthru
          _
        // Predicated region
        $region45: #{transformer_forward.5} parent=11 // pred_check
          %p518 = pneg %p251
        $region46: #{transformer_forward.5} parent=11 // pred_check_branch
          %520 = sbr.rel (%p518) target = $region48
        $region47: #{transformer_forward.5} parent=11 // pred_region
          %s522 = ssub.s32 256, 256
          %523 = vsyncadd [#allocation18], %s522
          %s524 = sshll.u32 [#allocation17], 4
          %s525 = int_to_ptr.vmem [resolvable:$true] %s524
          %530 = dma.hbm_to_vmem [thread:$0]  %s9, 256, %s525, [#allocation18], 128, 128, 8
        $region48: #{transformer_forward.5} parent=11 // pred_fallthru
          _
        // Predicated region
        $region49: #{transformer_forward.5} parent=11 // pred_check
          %p531 = pneg %p272
        $region50: #{transformer_forward.5} parent=11 // pred_check_branch
          %533 = sbr.rel (%p531) target = $region52
        $region51: #{transformer_forward.5} parent=11 // pred_region
          %s535 = ssub.s32 256, 256
          %536 = vsyncadd [#allocation18], %s535
          %s537 = sshll.u32 [#allocation19], 4
          %s538 = int_to_ptr.vmem [resolvable:$true] %s537
          %543 = dma.hbm_to_vmem [thread:$0]  %s10, 256, %s538, [#allocation18], 128, 128, 8
        $region52: #{transformer_forward.5} parent=11 // pred_fallthru
          _
        // Predicated region
        $region53: #{transformer_forward.5} parent=11 // pred_check
          %p544 = pneg %p293
        $region54: #{transformer_forward.5} parent=11 // pred_check_branch
          %546 = sbr.rel (%p544) target = $region56
        $region55: #{transformer_forward.5} parent=11 // pred_region
          %s548 = ssub.s32 16, 16
          %549 = vsyncadd [#allocation21], %s548
          %s551 = sshll.u32 [#allocation20], 4
          %s552 = int_to_ptr.vmem [resolvable:$true] %s551
          %554 = dma.hbm_to_vmem [thread:$0]  %s11, 16, %s552, [#allocation21]
        $region56: #{transformer_forward.5} parent=11 // pred_fallthru
          _
        // Predicated region
        $region57: #{transformer_forward.5} parent=11 // pred_check
          %p555 = pneg %p314
        $region58: #{transformer_forward.5} parent=11 // pred_check_branch
          %557 = sbr.rel (%p555) target = $region60
        $region59: #{transformer_forward.5} parent=11 // pred_region
          %s559 = ssub.s32 16, 16
          %560 = vsyncadd [#allocation21], %s559
          %s562 = sshll.u32 [#allocation22], 4
          %s563 = int_to_ptr.vmem [resolvable:$true] %s562
          %565 = dma.hbm_to_vmem [thread:$0]  %s12, 16, %s563, [#allocation21]
        $region60: #{transformer_forward.5} parent=11 // pred_fallthru
          _
        // Predicated region
        $region61: #{transformer_forward.5} parent=11 // pred_check
          %p566 = pneg %p335
        $region62: #{transformer_forward.5} parent=11 // pred_check_branch
          %568 = sbr.rel (%p566) target = $region64
        $region63: #{transformer_forward.5} parent=11 // pred_region
          %s570 = ssub.s32 512, 512
          %571 = vsyncadd [#allocation24], %s570
          %s572 = sshll.u32 [#allocation23], 4
          %s573 = int_to_ptr.vmem [resolvable:$true] %s572
          %578 = dma.hbm_to_vmem [thread:$0]  %s13, 512, %s573, [#allocation24], 64, 64, 4
        $region64: #{transformer_forward.5} parent=11 // pred_fallthru
          _
        // Predicated region
        $region65: #{transformer_forward.5} parent=11 // pred_check
          %p579 = pneg %p356
        $region66: #{transformer_forward.5} parent=11 // pred_check_branch
          %581 = sbr.rel (%p579) target = $region68
        $region67: #{transformer_forward.5} parent=11 // pred_region
          %s583 = ssub.s32 512, 512
          %584 = vsyncadd [#allocation24], %s583
          %s585 = sshll.u32 [#allocation25], 4
          %s586 = int_to_ptr.vmem [resolvable:$true] %s585
          %591 = dma.hbm_to_vmem [thread:$0]  %s14, 512, %s586, [#allocation24], 64, 64, 4
        $region68: #{transformer_forward.5} parent=11 // pred_fallthru
          _
        // Predicated region
        $region69: #{transformer_forward.5} parent=11 // pred_check
          %p592 = pneg %p377
        $region70: #{transformer_forward.5} parent=11 // pred_check_branch
          %594 = sbr.rel (%p592) target = $region72
        $region71: #{transformer_forward.5} parent=11 // pred_region
          %s596 = ssub.s32 1024, 1024
          %597 = vsyncadd [#allocation27], %s596
          %s598 = sshll.u32 [#allocation26], 4
          %s599 = int_to_ptr.vmem [resolvable:$true] %s598
          %604 = dma.hbm_to_vmem [thread:$0]  %s15, 1024, %s599, [#allocation27], 64, 64, 4
        $region72: #{transformer_forward.5} parent=11 // pred_fallthru
          _
      $region12: #{transformer_forward.5} parent=5 // pred_fallthru
        _
      %p605 = scmp.lt.s32.totalorder %s36, 2
      // Predicated region
      $region73: #{transformer_forward.5} parent=5 // pred_check
        %p606 = pneg %p605
      $region74: #{transformer_forward.5} parent=5 // pred_check_branch
        %608 = sbr.rel (%p606) target = $region76
      $region75: #{transformer_forward.5} parent=5 // pred_region
        // Predicated region
        $region77: #{transformer_forward.5} parent=75 // pred_check
          %p609 = pneg %p56
        $region78: #{transformer_forward.5} parent=75 // pred_check_branch
          %611 = sbr.rel (%p609) target = $region80
        $region79: #{transformer_forward.5} parent=75 // pred_region
          %s612 = sand.u32 %s46, 1
          %s613 = scalar_lea.sflag [#allocation3], %s612
          %s614 = sand.u32 %s46, 1
          %s615 = smul.addr %s614, 8
          %s616 = scalar_lea.vmem [#allocation2], %s615
          %s618 = ssub.s32 128, 128
          %619 = vsyncadd %s613, %s618
          %s620 = smul.addr %s36, 2
          %s621 = smul.addr %s620, 64
          %s622 = scalar_lea.hbm %s0, %s621
          %s623 = sshll.u32 %s616, 4
          %s624 = int_to_ptr.vmem [resolvable:$true] %s623
          %629 = dma.hbm_to_vmem [thread:$0]  %s622, 128, %s624, %s613, 64, 64, 4
        $region80: #{transformer_forward.5} parent=75 // pred_fallthru
          _
      $region76: #{transformer_forward.5} parent=5 // pred_fallthru
        _
      %p630 = scmp.le.s32.totalorder 1, %s36
      %p631 = scmp.lt.s32.totalorder %s36, 3
      %p632 = pnand %p630, %p631
      %p633 = pneg %p632
      // Predicated region
      $region81: #{transformer_forward.5} parent=5 // pred_check
        _
      $region82: #{transformer_forward.5} parent=5 // pred_check_branch
        %635 = sbr.rel (%p632) target = $region84
      $region83: #{transformer_forward.5} parent=5 // pred_region
        %s636 = ssub.s32 %s36, 1
        %s637 = sand.u32 %s49, 1
        %s638 = scalar_lea.sflag [#allocation3], %s637
        %s639 = sand.u32 %s49, 1
        %s640 = smul.addr %s639, 8
        %s641 = scalar_lea.vmem [#allocation2], %s640
        // Predicated region
        $region85: #{transformer_forward.5} parent=83 // pred_check
          %p642 = pneg %p62
        $region86: #{transformer_forward.5} parent=83 // pred_check_branch
          %644 = sbr.rel (%p642) target = $region88
        $region87: #{transformer_forward.5} parent=83 // pred_region
          %645 = dma.done %s638, 128
        $region88: #{transformer_forward.5} parent=83 // pred_fallthru
          _
        // Predicated region
        $region89: #{transformer_forward.5} parent=83 // pred_check
          %p646 = pneg %p83
        $region90: #{transformer_forward.5} parent=83 // pred_check_branch
          %648 = sbr.rel (%p646) target = $region92
        $region91: #{transformer_forward.5} parent=83 // pred_region
          %649 = dma.done [#allocation6], 16
        $region92: #{transformer_forward.5} parent=83 // pred_fallthru
          _
        // Predicated region
        $region93: #{transformer_forward.5} parent=83 // pred_check
          %p650 = pneg %p104
        $region94: #{transformer_forward.5} parent=83 // pred_check_branch
          %652 = sbr.rel (%p650) target = $region96
        $region95: #{transformer_forward.5} parent=83 // pred_region
          %653 = dma.done [#allocation6], 16
        $region96: #{transformer_forward.5} parent=83 // pred_fallthru
          _
        // Predicated region
        $region97: #{transformer_forward.5} parent=83 // pred_check
          %p654 = pneg %p125
        $region98: #{transformer_forward.5} parent=83 // pred_check_branch
          %656 = sbr.rel (%p654) target = $region100
        $region99: #{transformer_forward.5} parent=83 // pred_region
          %657 = dma.done [#allocation9], 1024
        $region100: #{transformer_forward.5} parent=83 // pred_fallthru
          _
        // Predicated region
        $region101: #{transformer_forward.5} parent=83 // pred_check
          %p658 = pneg %p146
        $region102: #{transformer_forward.5} parent=83 // pred_check_branch
          %660 = sbr.rel (%p658) target = $region104
        $region103: #{transformer_forward.5} parent=83 // pred_region
          %661 = dma.done [#allocation9], 1024
        $region104: #{transformer_forward.5} parent=83 // pred_fallthru
          _
        // Predicated region
        $region105: #{transformer_forward.5} parent=83 // pred_check
          %p662 = pneg %p167
        $region106: #{transformer_forward.5} parent=83 // pred_check_branch
          %664 = sbr.rel (%p662) target = $region108
        $region107: #{transformer_forward.5} parent=83 // pred_region
          %665 = dma.done [#allocation12], 1024
        $region108: #{transformer_forward.5} parent=83 // pred_fallthru
          _
        // Predicated region
        $region109: #{transformer_forward.5} parent=83 // pred_check
          %p666 = pneg %p188
        $region110: #{transformer_forward.5} parent=83 // pred_check_branch
          %668 = sbr.rel (%p666) target = $region112
        $region111: #{transformer_forward.5} parent=83 // pred_region
          %669 = dma.done [#allocation12], 1024
        $region112: #{transformer_forward.5} parent=83 // pred_fallthru
          _
        // Predicated region
        $region113: #{transformer_forward.5} parent=83 // pred_check
          %p670 = pneg %p209
        $region114: #{transformer_forward.5} parent=83 // pred_check_branch
          %672 = sbr.rel (%p670) target = $region116
        $region115: #{transformer_forward.5} parent=83 // pred_region
          %673 = dma.done [#allocation15], 1024
        $region116: #{transformer_forward.5} parent=83 // pred_fallthru
          _
        // Predicated region
        $region117: #{transformer_forward.5} parent=83 // pred_check
          %p674 = pneg %p230
        $region118: #{transformer_forward.5} parent=83 // pred_check_branch
          %676 = sbr.rel (%p674) target = $region120
        $region119: #{transformer_forward.5} parent=83 // pred_region
          %677 = dma.done [#allocation15], 512
        $region120: #{transformer_forward.5} parent=83 // pred_fallthru
          _
        // Predicated region
        $region121: #{transformer_forward.5} parent=83 // pred_check
          %p678 = pneg %p251
        $region122: #{transformer_forward.5} parent=83 // pred_check_branch
          %680 = sbr.rel (%p678) target = $region124
        $region123: #{transformer_forward.5} parent=83 // pred_region
          %681 = dma.done [#allocation18], 256
        $region124: #{transformer_forward.5} parent=83 // pred_fallthru
          _
        // Predicated region
        $region125: #{transformer_forward.5} parent=83 // pred_check
          %p682 = pneg %p272
        $region126: #{transformer_forward.5} parent=83 // pred_check_branch
          %684 = sbr.rel (%p682) target = $region128
        $region127: #{transformer_forward.5} parent=83 // pred_region
          %685 = dma.done [#allocation18], 256
        $region128: #{transformer_forward.5} parent=83 // pred_fallthru
          _
        // Predicated region
        $region129: #{transformer_forward.5} parent=83 // pred_check
          %p686 = pneg %p293
        $region130: #{transformer_forward.5} parent=83 // pred_check_branch
          %688 = sbr.rel (%p686) target = $region132
        $region131: #{transformer_forward.5} parent=83 // pred_region
          %689 = dma.done [#allocation21], 16
        $region132: #{transformer_forward.5} parent=83 // pred_fallthru
          _
        // Predicated region
        $region133: #{transformer_forward.5} parent=83 // pred_check
          %p690 = pneg %p314
        $region134: #{transformer_forward.5} parent=83 // pred_check_branch
          %692 = sbr.rel (%p690) target = $region136
        $region135: #{transformer_forward.5} parent=83 // pred_region
          %693 = dma.done [#allocation21], 16
        $region136: #{transformer_forward.5} parent=83 // pred_fallthru
          _
        // Predicated region
        $region137: #{transformer_forward.5} parent=83 // pred_check
          %p694 = pneg %p335
        $region138: #{transformer_forward.5} parent=83 // pred_check_branch
          %696 = sbr.rel (%p694) target = $region140
        $region139: #{transformer_forward.5} parent=83 // pred_region
          %697 = dma.done [#allocation24], 512
        $region140: #{transformer_forward.5} parent=83 // pred_fallthru
          _
        // Predicated region
        $region141: #{transformer_forward.5} parent=83 // pred_check
          %p698 = pneg %p356
        $region142: #{transformer_forward.5} parent=83 // pred_check_branch
          %700 = sbr.rel (%p698) target = $region144
        $region143: #{transformer_forward.5} parent=83 // pred_region
          %701 = dma.done [#allocation24], 512
        $region144: #{transformer_forward.5} parent=83 // pred_fallthru
          _
        // Predicated region
        $region145: #{transformer_forward.5} parent=83 // pred_check
          %p702 = pneg %p377
        $region146: #{transformer_forward.5} parent=83 // pred_check_branch
          %704 = sbr.rel (%p702) target = $region148
        $region147: #{transformer_forward.5} parent=83 // pred_region
          %705 = dma.done [#allocation27], 1024
        $region148: #{transformer_forward.5} parent=83 // pred_fallthru
          _
        %s706 = sand.u32 %s49, 1
        %s707 = scalar_lea.sflag [#allocation3], %s706
        %s708 = sand.u32 %s49, 1
        %s709 = smul.addr %s708, 8
        %s710 = scalar_lea.vmem [#allocation2], %s709
        %p711 = pneg %p62
        %p712 = pneg %p59
        %p713 = pneg %p83
        %p714 = pneg %p80
        %p715 = pneg %p104
        %p716 = pneg %p101
        %p717 = pneg %p125
        %p718 = pneg %p122
        %p719 = pneg %p146
        %p720 = pneg %p143
        %p721 = pneg %p167
        %p722 = pneg %p164
        %p723 = pneg %p188
        %p724 = pneg %p185
        %p725 = pneg %p209
        %p726 = pneg %p206
        %p727 = pneg %p230
        %p728 = pneg %p227
        %p729 = pneg %p251
        %p730 = pneg %p248
        %p731 = pneg %p272
        %p732 = pneg %p269
        %p733 = pneg %p293
        %p734 = pneg %p290
        %p735 = pneg %p314
        %p736 = pneg %p311
        %p737 = pneg %p335
        %p738 = pneg %p332
        %p739 = pneg %p356
        %p740 = pneg %p353
        %p741 = pneg %p377
        %p742 = pneg %p374
        %p743 = pneg %p403
        %p744 = pneg %p400
        %s745 = sand.u32 %s390, 1
        %s746 = scalar_lea.sflag [#allocation4], %s745
        %s747 = sand.u32 %s390, 1
        %s748 = smul.addr %s747, 8
        %s749 = scalar_lea.vmem [#allocation28], %s748
        %v751 = vld [vmem:[%s641] sm:$0xf]
        %v752 = vld [vmem:[%s641 + $0x4] sm:$0x1]
        %v753 = vunpack.c.l.bf16 %v751
        %v754 = vunpack.c.l.bf16 %v752
        %v755 = vld [vmem:[#allocation17] sm:$0xff]
        %v756 = vld [vmem:[#allocation17 + $0x8] sm:$0x1]
        %v757 = vld [vmem:[#allocation19] sm:$0xff]
        %v758 = vld [vmem:[#allocation19 + $0x8] sm:$0x1]
        %v759 = vld [vmem:[#allocation5] sm:$0x1]
        %v760 = vld [vmem:[#allocation7] sm:$0x1]
        %vm761 = vcmask 523264
        %v762 = vsel %vm761, %v753, 0.0
        %763 = vadd.xlane.f32.xlu0 %v762
        %v764 = vpop.xlane.xlu0 %763
        %vm765 = vcmask 516096
        %v766 = vsel %vm765, %v754, 0.0
        %767 = vadd.xlane.f32.xlu0 %v766
        %v768 = vpop.xlane.xlu0 %767
        %v769 = vrcp.pop 64.0
        %v770 = vmul.f32 %v764, %v769
        %v771 = vmul.f32 %v768, %v769
        %v772 = vsub.f32 %v753, %v770
        %v773 = vsub.f32 %v754, %v771
        %v774 = vmul.f32 %v772, %v772
        %v775 = vmul.f32 %v773, %v773
        %v776 = vsel %vm761, %v774, 0.0
        %777 = vadd.xlane.f32.xlu0 %v776
        %v778 = vpop.xlane.xlu0 %777
        %v779 = vsel %vm765, %v775, 0.0
        %780 = vadd.xlane.f32.xlu0 %v779
        %v781 = vpop.xlane.xlu0 %780
        %v782 = vmul.f32 %v778, %v769
        %v783 = vmul.f32 %v781, %v769
        %v784 = vadd.f32 %v782, 1e-05
        %v785 = vadd.f32 %v783, 1e-05
        %v786 = vrsqrt.pop %v784
        %v787 = vrsqrt.pop %v785
        %v788 = vmul.f32 %v772, %v786
        %v789 = vmul.f32 %v773, %v787
        %v791 = vlaneseq
        %v792 = vshrl.u32 %v791, 7
        %v793 = vsub.s32 0, %v792
        %v794 = vrot.slane %v759, %v793
        %v796 = vmul.f32 %v788, %v794
        %v797 = vmul.f32 %v789, %v794
        %v799 = vlaneseq
        %v800 = vshrl.u32 %v799, 7
        %v801 = vsub.s32 0, %v800
        %v802 = vrot.slane %v760, %v801
        %v804 = vadd.f32 %v796, %v802
        %v805 = vadd.f32 %v797, %v802
        %v806 = vpack.c.bf16 %v805, %v804
        %v807 = vld [vmem:[#allocation8] sm:$0xf]
        %v808 = vld [vmem:[#allocation8 + $0x4] sm:$0xf]
        %v809 = vld [vmem:[#allocation8 + $0x8] sm:$0xf]
        %v810 = vld [vmem:[#allocation8 + $0xc] sm:$0xf]
        %v811 = vld [vmem:[#allocation8 + $0x10] sm:$0xf]
        %v812 = vld [vmem:[#allocation8 + $0x14] sm:$0xf]
        %v813 = vld [vmem:[#allocation8 + $0x18] sm:$0xf]
        %v814 = vld [vmem:[#allocation8 + $0x1c] sm:$0xf]
        %v823 = vunpack.c.l.b16 %v807
        %v824 = vunpack.c.l.b16 %v808
        %v825 = vunpack.c.l.b16 %v809
        %v826 = vunpack.c.l.b16 %v810
        %v827 = vunpack.c.l.b16 %v811
        %v828 = vunpack.c.l.b16 %v812
        %v829 = vunpack.c.l.b16 %v813
        %v830 = vunpack.c.l.b16 %v814
        %v831 = vpack.c.b16 %v824, %v823
        %v832 = vpack.c.b16 %v826, %v825
        %v833 = vpack.c.b16 %v828, %v827
        %v834 = vpack.c.b16 %v830, %v829
        %v840 = vsel %vm761, %v806, 0
        %842 = vmatprep.subr.bf16.mxu0 0
        %843 = vmatpush1.bf16.msra.mxu0 %v831
        %844 = vmatprep.subr.bf16.mxu0 0
        %845 = vmatpush1.bf16.msra.mxu0 %v832
        %846 = vmatprep.subr.bf16.mxu0 0
        %847 = vmatpush1.bf16.msra.mxu0 %v833
        %848 = vmatprep.subr.bf16.mxu0 0
        %849 = vmatpush1.bf16.msra.mxu0 %v834
        %850 = vmatprep.subr.bf16.mxu0 0
        %851 = vmatpush1.bf16.msra.mxu0 0
        %852 = vmatprep.subr.bf16.mxu0 0
        %853 = vmatpush1.bf16.msra.mxu0 0
        %854 = vmatprep.subr.bf16.mxu0 0
        %855 = vmatpush1.bf16.msra.mxu0 0
        %856 = vmatprep.subr.bf16.mxu0 0
        %857 = vmatpush1.bf16.msra.mxu0 0
        %858 = vmatprep.subr.bf16.mxu0 0
        %859 = vmatpush1.bf16.msra.mxu0 0
        %860 = vmatprep.subr.bf16.mxu0 0
        %861 = vmatpush1.bf16.msra.mxu0 0
        %862 = vmatprep.subr.bf16.mxu0 0
        %863 = vmatpush1.bf16.msra.mxu0 0
        %864 = vmatprep.subr.bf16.mxu0 0
        %865 = vmatpush1.bf16.msra.mxu0 0
        %866 = vmatprep.subr.bf16.mxu0 0
        %867 = vmatpush1.bf16.msra.mxu0 0
        %868 = vmatprep.subr.bf16.mxu0 0
        %869 = vmatpush1.bf16.msra.mxu0 0
        %870 = vmatprep.subr.bf16.mxu0 0
        %871 = vmatpush1.bf16.msra.mxu0 0
        %872 = vmatprep.subr.bf16.mxu0 0
        %873 = vmatpush1.bf16.msra.mxu0 0
        %874 = vmatprep.mubr.bf16.mxu0 0
        %875 = vmatmul.mubr.bf16.gmra.mrb[0].mxu0 %v840
        %v876 = vpop.f32.mrb[0].mxu0
        %v877 = vadd.f32 0.0, %v876
        %v878 = vpop.f32.mrb[0].mxu0
        %v879 = vpop.f32.mrb[0].mxu0
        %v880 = vadd.f32 0.0, %v879
        %v881 = vpop.f32.mrb[0].mxu0
        %882 = vdwg.mxu0
        %v883 = vld [vmem:[#allocation10] sm:$0xf]
        %v884 = vld [vmem:[#allocation10 + $0x4] sm:$0xf]
        %v885 = vld [vmem:[#allocation10 + $0x8] sm:$0xf]
        %v886 = vld [vmem:[#allocation10 + $0xc] sm:$0xf]
        %v887 = vld [vmem:[#allocation10 + $0x10] sm:$0xf]
        %v888 = vld [vmem:[#allocation10 + $0x14] sm:$0xf]
        %v889 = vld [vmem:[#allocation10 + $0x18] sm:$0xf]
        %v890 = vld [vmem:[#allocation10 + $0x1c] sm:$0xf]
        %v899 = vunpack.c.l.b16 %v883
        %v900 = vunpack.c.l.b16 %v884
        %v901 = vunpack.c.l.b16 %v885
        %v902 = vunpack.c.l.b16 %v886
        %v903 = vunpack.c.l.b16 %v887
        %v904 = vunpack.c.l.b16 %v888
        %v905 = vunpack.c.l.b16 %v889
        %v906 = vunpack.c.l.b16 %v890
        %v907 = vpack.c.b16 %v900, %v899
        %v908 = vpack.c.b16 %v902, %v901
        %v909 = vpack.c.b16 %v904, %v903
        %v910 = vpack.c.b16 %v906, %v905
        %915 = vmatprep.subr.bf16.mxu0 0
        %916 = vmatpush1.bf16.msra.mxu0 %v907
        %917 = vmatprep.subr.bf16.mxu0 0
        %918 = vmatpush1.bf16.msra.mxu0 %v908
        %919 = vmatprep.subr.bf16.mxu0 0
        %920 = vmatpush1.bf16.msra.mxu0 %v909
        %921 = vmatprep.subr.bf16.mxu0 0
        %922 = vmatpush1.bf16.msra.mxu0 %v910
        %923 = vmatprep.subr.bf16.mxu0 0
        %924 = vmatpush1.bf16.msra.mxu0 0
        %925 = vmatprep.subr.bf16.mxu0 0
        %926 = vmatpush1.bf16.msra.mxu0 0
        %927 = vmatprep.subr.bf16.mxu0 0
        %928 = vmatpush1.bf16.msra.mxu0 0
        %929 = vmatprep.subr.bf16.mxu0 0
        %930 = vmatpush1.bf16.msra.mxu0 0
        %931 = vmatprep.subr.bf16.mxu0 0
        %932 = vmatpush1.bf16.msra.mxu0 0
        %933 = vmatprep.subr.bf16.mxu0 0
        %934 = vmatpush1.bf16.msra.mxu0 0
        %935 = vmatprep.subr.bf16.mxu0 0
        %936 = vmatpush1.bf16.msra.mxu0 0
        %937 = vmatprep.subr.bf16.mxu0 0
        %938 = vmatpush1.bf16.msra.mxu0 0
        %939 = vmatprep.subr.bf16.mxu0 0
        %940 = vmatpush1.bf16.msra.mxu0 0
        %941 = vmatprep.subr.bf16.mxu0 0
        %942 = vmatpush1.bf16.msra.mxu0 0
        %943 = vmatprep.subr.bf16.mxu0 0
        %944 = vmatpush1.bf16.msra.mxu0 0
        %945 = vmatprep.subr.bf16.mxu0 0
        %946 = vmatpush1.bf16.msra.mxu0 0
        %947 = vmatprep.mubr.bf16.mxu0 0
        %948 = vmatmul.mubr.bf16.gmra.mrb[0].mxu0 %v840
        %v949 = vpop.f32.mrb[0].mxu0
        %v950 = vadd.f32 0.0, %v949
        %v951 = vpop.f32.mrb[0].mxu0
        %v952 = vpop.f32.mrb[0].mxu0
        %v953 = vadd.f32 0.0, %v952
        %v954 = vpop.f32.mrb[0].mxu0
        %955 = vdwg.mxu0
        %v956 = vld [vmem:[#allocation11] sm:$0xf]
        %v957 = vld [vmem:[#allocation11 + $0x4] sm:$0xf]
        %v958 = vld [vmem:[#allocation11 + $0x8] sm:$0xf]
        %v959 = vld [vmem:[#allocation11 + $0xc] sm:$0xf]
        %v960 = vld [vmem:[#allocation11 + $0x10] sm:$0xf]
        %v961 = vld [vmem:[#allocation11 + $0x14] sm:$0xf]
        %v962 = vld [vmem:[#allocation11 + $0x18] sm:$0xf]
        %v963 = vld [vmem:[#allocation11 + $0x1c] sm:$0xf]
        %v972 = vunpack.c.l.b16 %v956
        %v973 = vunpack.c.l.b16 %v957
        %v974 = vunpack.c.l.b16 %v958
        %v975 = vunpack.c.l.b16 %v959
        %v976 = vunpack.c.l.b16 %v960
        %v977 = vunpack.c.l.b16 %v961
        %v978 = vunpack.c.l.b16 %v962
        %v979 = vunpack.c.l.b16 %v963
        %v980 = vpack.c.b16 %v973, %v972
        %v981 = vpack.c.b16 %v975, %v974
        %v982 = vpack.c.b16 %v977, %v976
        %v983 = vpack.c.b16 %v979, %v978
        %988 = vmatprep.subr.bf16.mxu0 0
        %989 = vmatpush1.bf16.msra.mxu0 %v980
        %990 = vmatprep.subr.bf16.mxu0 0
        %991 = vmatpush1.bf16.msra.mxu0 %v981
        %992 = vmatprep.subr.bf16.mxu0 0
        %993 = vmatpush1.bf16.msra.mxu0 %v982
        %994 = vmatprep.subr.bf16.mxu0 0
        %995 = vmatpush1.bf16.msra.mxu0 %v983
        %996 = vmatprep.subr.bf16.mxu0 0
        %997 = vmatpush1.bf16.msra.mxu0 0
        %998 = vmatprep.subr.bf16.mxu0 0
        %999 = vmatpush1.bf16.msra.mxu0 0
        %1000 = vmatprep.subr.bf16.mxu0 0
        %1001 = vmatpush1.bf16.msra.mxu0 0
        %1002 = vmatprep.subr.bf16.mxu0 0
        %1003 = vmatpush1.bf16.msra.mxu0 0
        %1004 = vmatprep.subr.bf16.mxu0 0
        %1005 = vmatpush1.bf16.msra.mxu0 0
        %1006 = vmatprep.subr.bf16.mxu0 0
        %1007 = vmatpush1.bf16.msra.mxu0 0
        %1008 = vmatprep.subr.bf16.mxu0 0
        %1009 = vmatpush1.bf16.msra.mxu0 0
        %1010 = vmatprep.subr.bf16.mxu0 0
        %1011 = vmatpush1.bf16.msra.mxu0 0
        %1012 = vmatprep.subr.bf16.mxu0 0
        %1013 = vmatpush1.bf16.msra.mxu0 0
        %1014 = vmatprep.subr.bf16.mxu0 0
        %1015 = vmatpush1.bf16.msra.mxu0 0
        %1016 = vmatprep.subr.bf16.mxu0 0
        %1017 = vmatpush1.bf16.msra.mxu0 0
        %1018 = vmatprep.subr.bf16.mxu0 0
        %1019 = vmatpush1.bf16.msra.mxu0 0
        %1020 = vmatprep.mubr.bf16.mxu0 0
        %1021 = vmatmul.mubr.bf16.gmra.mrb[0].mxu0 %v840
        %v1022 = vpop.f32.mrb[0].mxu0
        %v1023 = vadd.f32 0.0, %v1022
        %v1024 = vpop.f32.mrb[0].mxu0
        %v1025 = vpop.f32.mrb[0].mxu0
        %v1026 = vadd.f32 0.0, %v1025
        %v1027 = vpop.f32.mrb[0].mxu0
        %1028 = vdwg.mxu0
        %v1029 = vld [vmem:[#allocation13] sm:$0xf]
        %v1030 = vld [vmem:[#allocation13 + $0x4] sm:$0xf]
        %v1031 = vld [vmem:[#allocation13 + $0x8] sm:$0xf]
        %v1032 = vld [vmem:[#allocation13 + $0xc] sm:$0xf]
        %v1033 = vld [vmem:[#allocation13 + $0x10] sm:$0xf]
        %v1034 = vld [vmem:[#allocation13 + $0x14] sm:$0xf]
        %v1035 = vld [vmem:[#allocation13 + $0x18] sm:$0xf]
        %v1036 = vld [vmem:[#allocation13 + $0x1c] sm:$0xf]
        %v1045 = vunpack.c.l.b16 %v1029
        %v1046 = vunpack.c.l.b16 %v1030
        %v1047 = vunpack.c.l.b16 %v1031
        %v1048 = vunpack.c.l.b16 %v1032
        %v1049 = vunpack.c.l.b16 %v1033
        %v1050 = vunpack.c.l.b16 %v1034
        %v1051 = vunpack.c.l.b16 %v1035
        %v1052 = vunpack.c.l.b16 %v1036
        %v1053 = vpack.c.b16 %v1046, %v1045
        %v1054 = vpack.c.b16 %v1048, %v1047
        %v1055 = vpack.c.b16 %v1050, %v1049
        %v1056 = vpack.c.b16 %v1052, %v1051
        %1061 = vmatprep.subr.bf16.mxu0 0
        %1062 = vmatpush1.bf16.msra.mxu0 %v1053
        %1063 = vmatprep.subr.bf16.mxu0 0
        %1064 = vmatpush1.bf16.msra.mxu0 %v1054
        %1065 = vmatprep.subr.bf16.mxu0 0
        %1066 = vmatpush1.bf16.msra.mxu0 %v1055
        %1067 = vmatprep.subr.bf16.mxu0 0
        %1068 = vmatpush1.bf16.msra.mxu0 %v1056
        %1069 = vmatprep.subr.bf16.mxu0 0
        %1070 = vmatpush1.bf16.msra.mxu0 0
        %1071 = vmatprep.subr.bf16.mxu0 0
        %1072 = vmatpush1.bf16.msra.mxu0 0
        %1073 = vmatprep.subr.bf16.mxu0 0
        %1074 = vmatpush1.bf16.msra.mxu0 0
        %1075 = vmatprep.subr.bf16.mxu0 0
        %1076 = vmatpush1.bf16.msra.mxu0 0
        %1077 = vmatprep.subr.bf16.mxu0 0
        %1078 = vmatpush1.bf16.msra.mxu0 0
        %1079 = vmatprep.subr.bf16.mxu0 0
        %1080 = vmatpush1.bf16.msra.mxu0 0
        %1081 = vmatprep.subr.bf16.mxu0 0
        %1082 = vmatpush1.bf16.msra.mxu0 0
        %1083 = vmatprep.subr.bf16.mxu0 0
        %1084 = vmatpush1.bf16.msra.mxu0 0
        %1085 = vmatprep.subr.bf16.mxu0 0
        %1086 = vmatpush1.bf16.msra.mxu0 0
        %1087 = vmatprep.subr.bf16.mxu0 0
        %1088 = vmatpush1.bf16.msra.mxu0 0
        %1089 = vmatprep.subr.bf16.mxu0 0
        %1090 = vmatpush1.bf16.msra.mxu0 0
        %1091 = vmatprep.subr.bf16.mxu0 0
        %1092 = vmatpush1.bf16.msra.mxu0 0
        %1093 = vmatprep.mubr.bf16.mxu0 0
        %1094 = vmatmul.mubr.bf16.gmra.mrb[0].mxu0 %v840
        %v1095 = vpop.f32.mrb[0].mxu0
        %v1096 = vadd.f32 0.0, %v1095
        %v1097 = vpop.f32.mrb[0].mxu0
        %v1098 = vpop.f32.mrb[0].mxu0
        %v1099 = vadd.f32 0.0, %v1098
        %v1100 = vpop.f32.mrb[0].mxu0
        %1101 = vdwg.mxu0
        %v1102 = vld [vmem:[#allocation14] sm:$0xf]
        %v1103 = vld [vmem:[#allocation14 + $0x4] sm:$0xf]
        %v1104 = vld [vmem:[#allocation14 + $0x8] sm:$0xf]
        %v1105 = vld [vmem:[#allocation14 + $0xc] sm:$0xf]
        %v1106 = vld [vmem:[#allocation14 + $0x10] sm:$0xf]
        %v1107 = vld [vmem:[#allocation14 + $0x14] sm:$0xf]
        %v1108 = vld [vmem:[#allocation14 + $0x18] sm:$0xf]
        %v1109 = vld [vmem:[#allocation14 + $0x1c] sm:$0xf]
        %v1118 = vunpack.c.l.b16 %v1102
        %v1119 = vunpack.c.l.b16 %v1103
        %v1120 = vunpack.c.l.b16 %v1104
        %v1121 = vunpack.c.l.b16 %v1105
        %v1122 = vunpack.c.l.b16 %v1106
        %v1123 = vunpack.c.l.b16 %v1107
        %v1124 = vunpack.c.l.b16 %v1108
        %v1125 = vunpack.c.l.b16 %v1109
        %v1126 = vpack.c.b16 %v1119, %v1118
        %v1127 = vpack.c.b16 %v1121, %v1120
        %v1128 = vpack.c.b16 %v1123, %v1122
        %v1129 = vpack.c.b16 %v1125, %v1124
        %1134 = vmatprep.subr.bf16.mxu0 0
        %1135 = vmatpush1.bf16.msra.mxu0 %v1126
        %1136 = vmatprep.subr.bf16.mxu0 0
        %1137 = vmatpush1.bf16.msra.mxu0 %v1127
        %1138 = vmatprep.subr.bf16.mxu0 0
        %1139 = vmatpush1.bf16.msra.mxu0 %v1128
        %1140 = vmatprep.subr.bf16.mxu0 0
        %1141 = vmatpush1.bf16.msra.mxu0 %v1129
        %1142 = vmatprep.subr.bf16.mxu0 0
        %1143 = vmatpush1.bf16.msra.mxu0 0
        %1144 = vmatprep.subr.bf16.mxu0 0
        %1145 = vmatpush1.bf16.msra.mxu0 0
        %1146 = vmatprep.subr.bf16.mxu0 0
        %1147 = vmatpush1.bf16.msra.mxu0 0
        %1148 = vmatprep.subr.bf16.mxu0 0
        %1149 = vmatpush1.bf16.msra.mxu0 0
        %1150 = vmatprep.subr.bf16.mxu0 0
        %1151 = vmatpush1.bf16.msra.mxu0 0
        %1152 = vmatprep.subr.bf16.mxu0 0
        %1153 = vmatpush1.bf16.msra.mxu0 0
        %1154 = vmatprep.subr.bf16.mxu0 0
        %1155 = vmatpush1.bf16.msra.mxu0 0
        %1156 = vmatprep.subr.bf16.mxu0 0
        %1157 = vmatpush1.bf16.msra.mxu0 0
        %1158 = vmatprep.subr.bf16.mxu0 0
        %1159 = vmatpush1.bf16.msra.mxu0 0
        %1160 = vmatprep.subr.bf16.mxu0 0
        %1161 = vmatpush1.bf16.msra.mxu0 0
        %1162 = vmatprep.subr.bf16.mxu0 0
        %1163 = vmatpush1.bf16.msra.mxu0 0
        %1164 = vmatprep.subr.bf16.mxu0 0
        %1165 = vmatpush1.bf16.msra.mxu0 0
        %1166 = vmatprep.mubr.bf16.mxu0 0
        %1167 = vmatmul.mubr.bf16.gmra.mrb[0].mxu0 %v840
        %v1168 = vpop.f32.mrb[0].mxu0
        %v1169 = vadd.f32 0.0, %v1168
        %v1170 = vpop.f32.mrb[0].mxu0
        %v1171 = vpop.f32.mrb[0].mxu0
        %v1172 = vadd.f32 0.0, %v1171
        %v1173 = vpop.f32.mrb[0].mxu0
        %1174 = vdwg.mxu0
        %v1175 = vmul.f32 %v877, %v755
        %v1176 = vmul.f32 %v880, %v756
        %v1177 = vmul.f32 %v950, %v757
        %v1178 = vmul.f32 %v953, %v758
        %v1179 = vadd.f32 %v1175, %v1177
        %v1180 = vadd.f32 %v1176, %v1178
        %v1181 = vpack.c.bf16 %v1180, %v1179
        %v1182 = vmul.f32 %v1023, %v755
        %v1183 = vmul.f32 %v1026, %v756
        %v1184 = vmul.f32 %v1096, %v757
        %v1185 = vmul.f32 %v1099, %v758
        %v1186 = vadd.f32 %v1182, %v1184
        %v1187 = vadd.f32 %v1183, %v1185
        %v1188 = vpack.c.bf16 %v1187, %v1186
        %v1189 = vpack.c.bf16 %v1172, %v1169
        %vm1190 = vcmask 261120
        %v1192 = vsel %vm1190, %v1181, 0
        %v1195 = vsel %vm1190, %v1188, 0
        %1197 = vmatprep.subr.bf16.mxu0 0
        %1198 = vmatpush1.bf16.xpose.msra.mxu0 %v1195
        %1199 = vmatprep.subr.bf16.mxu0 0
        %1200 = vmatpush1.bf16.xpose.msra.mxu0 0
        %1201 = vmatprep.subr.bf16.mxu0 0
        %1202 = vmatpush1.bf16.xpose.msra.mxu0 0
        %1203 = vmatprep.subr.bf16.mxu0 0
        %1204 = vmatpush1.bf16.xpose.msra.mxu0 0
        %1205 = vmatprep.subr.bf16.mxu0 0
        %1206 = vmatpush1.bf16.xpose.msra.mxu0 0
        %1207 = vmatprep.subr.bf16.mxu0 0
        %1208 = vmatpush1.bf16.xpose.msra.mxu0 0
        %1209 = vmatprep.subr.bf16.mxu0 0
        %1210 = vmatpush1.bf16.xpose.msra.mxu0 0
        %1211 = vmatprep.subr.bf16.mxu0 0
        %1212 = vmatpush1.bf16.xpose.msra.mxu0 0
        %1213 = vmatprep.subr.bf16.mxu0 0
        %1214 = vmatpush1.bf16.xpose.msra.mxu0 0
        %1215 = vmatprep.subr.bf16.mxu0 0
        %1216 = vmatpush1.bf16.xpose.msra.mxu0 0
        %1217 = vmatprep.subr.bf16.mxu0 0
        %1218 = vmatpush1.bf16.xpose.msra.mxu0 0
        %1219 = vmatprep.subr.bf16.mxu0 0
        %1220 = vmatpush1.bf16.xpose.msra.mxu0 0
        %1221 = vmatprep.subr.bf16.mxu0 0
        %1222 = vmatpush1.bf16.xpose.msra.mxu0 0
        %1223 = vmatprep.subr.bf16.mxu0 0
        %1224 = vmatpush1.bf16.xpose.msra.mxu0 0
        %1225 = vmatprep.subr.bf16.mxu0 0
        %1226 = vmatpush1.bf16.xpose.msra.mxu0 0
        %1227 = vmatprep.subr.bf16.mxu0 0
        %1228 = vmatpush1.bf16.xpose.msra.mxu0 0
        %1229 = vmatprep.mubr.bf16.mxu0 0
        %1230 = vmatmul.mubr.bf16.gmra.mrb[0].mxu0 %v1192
        %v1231 = vpop.f32.mrb[0].mxu0
        %v1232 = vadd.f32 0.0, %v1231
        %v1233 = vpop.f32.mrb[0].mxu0
        %v1234 = vpop.f32.mrb[0].mxu0
        %v1235 = vadd.f32 0.0, %v1234
        %v1236 = vpop.f32.mrb[0].mxu0
        %1237 = vdwg.mxu0
        %v1238 = vmul.f32 %v1232, 0.17677669
        %v1239 = vmul.f32 %v1235, 0.17677669
        %v1240 = vlaneseq
        %v1241 = vshrl.u32 %v1240, 7
        %v1242 = vadd.s32 %v1241, 8
        %v1243 = vlaneseq
        %v1244 = vand.u32 %v1243, 127
        %vm1245 = vcmp.le.s32.totalorder %v1244, %v1241
        %vm1246 = vcmp.le.s32.totalorder %v1244, %v1242
        %v1247 = vsel %vm1245, %v1238, -1e+30
        %v1248 = vsel %vm1246, %v1239, -1e+30
        %vm1249 = vcmask 72704
        %v1250 = vsel %vm1249, %v1247, -inf
        %1251 = vmax.xlane.f32.xlu0 %v1250
        %v1252 = vpop.xlane.xlu0 %1251
        %vm1253 = vcmask 65536
        %v1254 = vsel %vm1253, %v1248, -inf
        %1255 = vmax.xlane.f32.xlu0 %v1254
        %v1256 = vpop.xlane.xlu0 %1255
        %v1257 = vmax.f32 %v1252, -1e+30
        %v1258 = vmax.f32 %v1256, -1e+30
        %v1259 = vsub.f32 -1e+30, %v1257
        %v1260 = vsub.f32 -1e+30, %v1258
        %v1261 = vmul.f32 %v1259, 1.442695
        %v1262 = vpow.pop %v1261
        %v1263 = vmul.f32 %v1260, 1.442695
        %v1264 = vpow.pop %v1263
        %v1265 = vsub.f32 %v1247, %v1257
        %v1266 = vsub.f32 %v1248, %v1258
        %v1267 = vmul.f32 %v1265, 1.442695
        %v1268 = vpow.pop %v1267
        %v1269 = vmul.f32 %v1266, 1.442695
        %v1270 = vpow.pop %v1269
        %v1271 = vmul.f32 %v1262, 0.0
        %v1272 = vmul.f32 %v1264, 0.0
        %v1273 = vsel %vm1249, %v1268, 0.0
        %1274 = vadd.xlane.f32.xlu0 %v1273
        %v1275 = vpop.xlane.xlu0 %1274
        %v1276 = vsel %vm1253, %v1270, 0.0
        %1277 = vadd.xlane.f32.xlu0 %v1276
        %v1278 = vpop.xlane.xlu0 %1277
        %v1279 = vadd.f32 %v1271, %v1275
        %v1280 = vadd.f32 %v1272, %v1278
        %v1281 = vpack.c.bf16 %v1270, %v1268
        %v1283 = vsel %vm1249, %v1281, 0
        %vm1285 = vcmask 1043456
        %vm1286 = vcmask 1044480
        %v1287 = vsel %vm1285, 4294967295, 65535
        %v1288 = vsel %vm1286, %v1287, 0
        %v1290 = vand.u32 %v1189, %v1288
        %1292 = vmatprep.subr.bf16.mxu0 0
        %1293 = vmatpush1.bf16.msra.mxu0 %v1290
        %1294 = vmatprep.subr.bf16.mxu0 0
        %1295 = vmatpush1.bf16.msra.mxu0 0
        %1296 = vmatprep.subr.bf16.mxu0 0
        %1297 = vmatpush1.bf16.msra.mxu0 0
        %1298 = vmatprep.subr.bf16.mxu0 0
        %1299 = vmatpush1.bf16.msra.mxu0 0
        %1300 = vmatprep.subr.bf16.mxu0 0
        %1301 = vmatpush1.bf16.msra.mxu0 0
        %1302 = vmatprep.subr.bf16.mxu0 0
        %1303 = vmatpush1.bf16.msra.mxu0 0
        %1304 = vmatprep.subr.bf16.mxu0 0
        %1305 = vmatpush1.bf16.msra.mxu0 0
        %1306 = vmatprep.subr.bf16.mxu0 0
        %1307 = vmatpush1.bf16.msra.mxu0 0
        %1308 = vmatprep.subr.bf16.mxu0 0
        %1309 = vmatpush1.bf16.msra.mxu0 0
        %1310 = vmatprep.subr.bf16.mxu0 0
        %1311 = vmatpush1.bf16.msra.mxu0 0
        %1312 = vmatprep.subr.bf16.mxu0 0
        %1313 = vmatpush1.bf16.msra.mxu0 0
        %1314 = vmatprep.subr.bf16.mxu0 0
        %1315 = vmatpush1.bf16.msra.mxu0 0
        %1316 = vmatprep.subr.bf16.mxu0 0
        %1317 = vmatpush1.bf16.msra.mxu0 0
        %1318 = vmatprep.subr.bf16.mxu0 0
        %1319 = vmatpush1.bf16.msra.mxu0 0
        %1320 = vmatprep.subr.bf16.mxu0 0
        %1321 = vmatpush1.bf16.msra.mxu0 0
        %1322 = vmatprep.subr.bf16.mxu0 0
        %1323 = vmatpush1.bf16.msra.mxu0 0
        %1324 = vmatprep.mubr.bf16.mxu0 0
        %1325 = vmatmul.mubr.bf16.gmra.mrb[0].mxu0 %v1283
        %v1326 = vpop.f32.mrb[0].mxu0
        %v1327 = vadd.f32 0.0, %v1326
        %v1328 = vpop.f32.mrb[0].mxu0
        %v1329 = vpop.f32.mrb[0].mxu0
        %v1330 = vadd.f32 0.0, %v1329
        %v1331 = vpop.f32.mrb[0].mxu0
        %1332 = vdwg.mxu0
        %v1333 = vadd.f32 %v1271, %v1327
        %v1334 = vadd.f32 %v1272, %v1330
        %v1335 = vrcp.pop %v1279
        %v1336 = vrcp.pop %v1280
        %v1337 = vmul.f32 %v1333, %v1335
        %v1338 = vmul.f32 %v1334, %v1336
        %v1339 = vpack.c.bf16 %v1338, %v1337
        %v1340 = vld [vmem:[#allocation16] sm:$0xf]
        %v1341 = vld [vmem:[#allocation16 + $0x4] sm:$0xf]
        %v1342 = vld [vmem:[#allocation16 + $0x8] sm:$0xf]
        %v1343 = vld [vmem:[#allocation16 + $0xc] sm:$0xf]
        %s1344 = scalar_lea.vmem [#allocation8], 32
        %v1345 = vld [vmem:[%s1344] sm:$0xf]
        %v1346 = vld [vmem:[%s1344 + $0x4] sm:$0xf]
        %v1347 = vld [vmem:[%s1344 + $0x8] sm:$0xf]
        %v1348 = vld [vmem:[%s1344 + $0xc] sm:$0xf]
        %v1349 = vld [vmem:[%s1344 + $0x10] sm:$0xf]
        %v1350 = vld [vmem:[%s1344 + $0x14] sm:$0xf]
        %v1351 = vld [vmem:[%s1344 + $0x18] sm:$0xf]
        %v1352 = vld [vmem:[%s1344 + $0x1c] sm:$0xf]
        %v1361 = vunpack.c.l.b16 %v1345
        %v1362 = vunpack.c.l.b16 %v1346
        %v1363 = vunpack.c.l.b16 %v1347
        %v1364 = vunpack.c.l.b16 %v1348
        %v1365 = vunpack.c.l.b16 %v1349
        %v1366 = vunpack.c.l.b16 %v1350
        %v1367 = vunpack.c.l.b16 %v1351
        %v1368 = vunpack.c.l.b16 %v1352
        %v1369 = vpack.c.b16 %v1362, %v1361
        %v1370 = vpack.c.b16 %v1364, %v1363
        %v1371 = vpack.c.b16 %v1366, %v1365
        %v1372 = vpack.c.b16 %v1368, %v1367
        %1377 = vmatprep.subr.bf16.mxu0 0
        %1378 = vmatpush1.bf16.msra.mxu0 %v1369
        %1379 = vmatprep.subr.bf16.mxu0 0
        %1380 = vmatpush1.bf16.msra.mxu0 %v1370
        %1381 = vmatprep.subr.bf16.mxu0 0
        %1382 = vmatpush1.bf16.msra.mxu0 %v1371
        %1383 = vmatprep.subr.bf16.mxu0 0
        %1384 = vmatpush1.bf16.msra.mxu0 %v1372
        %1385 = vmatprep.subr.bf16.mxu0 0
        %1386 = vmatpush1.bf16.msra.mxu0 0
        %1387 = vmatprep.subr.bf16.mxu0 0
        %1388 = vmatpush1.bf16.msra.mxu0 0
        %1389 = vmatprep.subr.bf16.mxu0 0
        %1390 = vmatpush1.bf16.msra.mxu0 0
        %1391 = vmatprep.subr.bf16.mxu0 0
        %1392 = vmatpush1.bf16.msra.mxu0 0
        %1393 = vmatprep.subr.bf16.mxu0 0
        %1394 = vmatpush1.bf16.msra.mxu0 0
        %1395 = vmatprep.subr.bf16.mxu0 0
        %1396 = vmatpush1.bf16.msra.mxu0 0
        %1397 = vmatprep.subr.bf16.mxu0 0
        %1398 = vmatpush1.bf16.msra.mxu0 0
        %1399 = vmatprep.subr.bf16.mxu0 0
        %1400 = vmatpush1.bf16.msra.mxu0 0
        %1401 = vmatprep.subr.bf16.mxu0 0
        %1402 = vmatpush1.bf16.msra.mxu0 0
        %1403 = vmatprep.subr.bf16.mxu0 0
        %1404 = vmatpush1.bf16.msra.mxu0 0
        %1405 = vmatprep.subr.bf16.mxu0 0
        %1406 = vmatpush1.bf16.msra.mxu0 0
        %1407 = vmatprep.subr.bf16.mxu0 0
        %1408 = vmatpush1.bf16.msra.mxu0 0
        %1409 = vmatprep.mubr.bf16.mxu0 0
        %1410 = vmatmul.mubr.bf16.gmra.mrb[0].mxu0 %v840
        %v1411 = vpop.f32.mrb[0].mxu0
        %v1412 = vadd.f32 0.0, %v1411
        %v1413 = vpop.f32.mrb[0].mxu0
        %v1414 = vpop.f32.mrb[0].mxu0
        %v1415 = vadd.f32 0.0, %v1414
        %v1416 = vpop.f32.mrb[0].mxu0
        %1417 = vdwg.mxu0
        %s1418 = scalar_lea.vmem [#allocation10], 32
        %v1419 = vld [vmem:[%s1418] sm:$0xf]
        %v1420 = vld [vmem:[%s1418 + $0x4] sm:$0xf]
        %v1421 = vld [vmem:[%s1418 + $0x8] sm:$0xf]
        %v1422 = vld [vmem:[%s1418 + $0xc] sm:$0xf]
        %v1423 = vld [vmem:[%s1418 + $0x10] sm:$0xf]
        %v1424 = vld [vmem:[%s1418 + $0x14] sm:$0xf]
        %v1425 = vld [vmem:[%s1418 + $0x18] sm:$0xf]
        %v1426 = vld [vmem:[%s1418 + $0x1c] sm:$0xf]
        %v1435 = vunpack.c.l.b16 %v1419
        %v1436 = vunpack.c.l.b16 %v1420
        %v1437 = vunpack.c.l.b16 %v1421
        %v1438 = vunpack.c.l.b16 %v1422
        %v1439 = vunpack.c.l.b16 %v1423
        %v1440 = vunpack.c.l.b16 %v1424
        %v1441 = vunpack.c.l.b16 %v1425
        %v1442 = vunpack.c.l.b16 %v1426
        %v1443 = vpack.c.b16 %v1436, %v1435
        %v1444 = vpack.c.b16 %v1438, %v1437
        %v1445 = vpack.c.b16 %v1440, %v1439
        %v1446 = vpack.c.b16 %v1442, %v1441
        %1451 = vmatprep.subr.bf16.mxu0 0
        %1452 = vmatpush1.bf16.msra.mxu0 %v1443
        %1453 = vmatprep.subr.bf16.mxu0 0
        %1454 = vmatpush1.bf16.msra.mxu0 %v1444
        %1455 = vmatprep.subr.bf16.mxu0 0
        %1456 = vmatpush1.bf16.msra.mxu0 %v1445
        %1457 = vmatprep.subr.bf16.mxu0 0
        %1458 = vmatpush1.bf16.msra.mxu0 %v1446
        %1459 = vmatprep.subr.bf16.mxu0 0
        %1460 = vmatpush1.bf16.msra.mxu0 0
        %1461 = vmatprep.subr.bf16.mxu0 0
        %1462 = vmatpush1.bf16.msra.mxu0 0
        %1463 = vmatprep.subr.bf16.mxu0 0
        %1464 = vmatpush1.bf16.msra.mxu0 0
        %1465 = vmatprep.subr.bf16.mxu0 0
        %1466 = vmatpush1.bf16.msra.mxu0 0
        %1467 = vmatprep.subr.bf16.mxu0 0
        %1468 = vmatpush1.bf16.msra.mxu0 0
        %1469 = vmatprep.subr.bf16.mxu0 0
        %1470 = vmatpush1.bf16.msra.mxu0 0
        %1471 = vmatprep.subr.bf16.mxu0 0
        %1472 = vmatpush1.bf16.msra.mxu0 0
        %1473 = vmatprep.subr.bf16.mxu0 0
        %1474 = vmatpush1.bf16.msra.mxu0 0
        %1475 = vmatprep.subr.bf16.mxu0 0
        %1476 = vmatpush1.bf16.msra.mxu0 0
        %1477 = vmatprep.subr.bf16.mxu0 0
        %1478 = vmatpush1.bf16.msra.mxu0 0
        %1479 = vmatprep.subr.bf16.mxu0 0
        %1480 = vmatpush1.bf16.msra.mxu0 0
        %1481 = vmatprep.subr.bf16.mxu0 0
        %1482 = vmatpush1.bf16.msra.mxu0 0
        %1483 = vmatprep.mubr.bf16.mxu0 0
        %1484 = vmatmul.mubr.bf16.gmra.mrb[0].mxu0 %v840
        %v1485 = vpop.f32.mrb[0].mxu0
        %v1486 = vadd.f32 0.0, %v1485
        %v1487 = vpop.f32.mrb[0].mxu0
        %v1488 = vpop.f32.mrb[0].mxu0
        %v1489 = vadd.f32 0.0, %v1488
        %v1490 = vpop.f32.mrb[0].mxu0
        %1491 = vdwg.mxu0
        %s1492 = scalar_lea.vmem [#allocation11], 32
        %v1493 = vld [vmem:[%s1492] sm:$0xf]
        %v1494 = vld [vmem:[%s1492 + $0x4] sm:$0xf]
        %v1495 = vld [vmem:[%s1492 + $0x8] sm:$0xf]
        %v1496 = vld [vmem:[%s1492 + $0xc] sm:$0xf]
        %v1497 = vld [vmem:[%s1492 + $0x10] sm:$0xf]
        %v1498 = vld [vmem:[%s1492 + $0x14] sm:$0xf]
        %v1499 = vld [vmem:[%s1492 + $0x18] sm:$0xf]
        %v1500 = vld [vmem:[%s1492 + $0x1c] sm:$0xf]
        %v1509 = vunpack.c.l.b16 %v1493
        %v1510 = vunpack.c.l.b16 %v1494
        %v1511 = vunpack.c.l.b16 %v1495
        %v1512 = vunpack.c.l.b16 %v1496
        %v1513 = vunpack.c.l.b16 %v1497
        %v1514 = vunpack.c.l.b16 %v1498
        %v1515 = vunpack.c.l.b16 %v1499
        %v1516 = vunpack.c.l.b16 %v1500
        %v1517 = vpack.c.b16 %v1510, %v1509
        %v1518 = vpack.c.b16 %v1512, %v1511
        %v1519 = vpack.c.b16 %v1514, %v1513
        %v1520 = vpack.c.b16 %v1516, %v1515
        %1525 = vmatprep.subr.bf16.mxu0 0
        %1526 = vmatpush1.bf16.msra.mxu0 %v1517
        %1527 = vmatprep.subr.bf16.mxu0 0
        %1528 = vmatpush1.bf16.msra.mxu0 %v1518
        %1529 = vmatprep.subr.bf16.mxu0 0
        %1530 = vmatpush1.bf16.msra.mxu0 %v1519
        %1531 = vmatprep.subr.bf16.mxu0 0
        %1532 = vmatpush1.bf16.msra.mxu0 %v1520
        %1533 = vmatprep.subr.bf16.mxu0 0
        %1534 = vmatpush1.bf16.msra.mxu0 0
        %1535 = vmatprep.subr.bf16.mxu0 0
        %1536 = vmatpush1.bf16.msra.mxu0 0
        %1537 = vmatprep.subr.bf16.mxu0 0
        %1538 = vmatpush1.bf16.msra.mxu0 0
        %1539 = vmatprep.subr.bf16.mxu0 0
        %1540 = vmatpush1.bf16.msra.mxu0 0
        %1541 = vmatprep.subr.bf16.mxu0 0
        %1542 = vmatpush1.bf16.msra.mxu0 0
        %1543 = vmatprep.subr.bf16.mxu0 0
        %1544 = vmatpush1.bf16.msra.mxu0 0
        %1545 = vmatprep.subr.bf16.mxu0 0
        %1546 = vmatpush1.bf16.msra.mxu0 0
        %1547 = vmatprep.subr.bf16.mxu0 0
        %1548 = vmatpush1.bf16.msra.mxu0 0
        %1549 = vmatprep.subr.bf16.mxu0 0
        %1550 = vmatpush1.bf16.msra.mxu0 0
        %1551 = vmatprep.subr.bf16.mxu0 0
        %1552 = vmatpush1.bf16.msra.mxu0 0
        %1553 = vmatprep.subr.bf16.mxu0 0
        %1554 = vmatpush1.bf16.msra.mxu0 0
        %1555 = vmatprep.subr.bf16.mxu0 0
        %1556 = vmatpush1.bf16.msra.mxu0 0
        %1557 = vmatprep.mubr.bf16.mxu0 0
        %1558 = vmatmul.mubr.bf16.gmra.mrb[0].mxu0 %v840
        %v1559 = vpop.f32.mrb[0].mxu0
        %v1560 = vadd.f32 0.0, %v1559
        %v1561 = vpop.f32.mrb[0].mxu0
        %v1562 = vpop.f32.mrb[0].mxu0
        %v1563 = vadd.f32 0.0, %v1562
        %v1564 = vpop.f32.mrb[0].mxu0
        %1565 = vdwg.mxu0
        %s1566 = scalar_lea.vmem [#allocation13], 32
        %v1567 = vld [vmem:[%s1566] sm:$0xf]
        %v1568 = vld [vmem:[%s1566 + $0x4] sm:$0xf]
        %v1569 = vld [vmem:[%s1566 + $0x8] sm:$0xf]
        %v1570 = vld [vmem:[%s1566 + $0xc] sm:$0xf]
        %v1571 = vld [vmem:[%s1566 + $0x10] sm:$0xf]
        %v1572 = vld [vmem:[%s1566 + $0x14] sm:$0xf]
        %v1573 = vld [vmem:[%s1566 + $0x18] sm:$0xf]
        %v1574 = vld [vmem:[%s1566 + $0x1c] sm:$0xf]
        %v1583 = vunpack.c.l.b16 %v1567
        %v1584 = vunpack.c.l.b16 %v1568
        %v1585 = vunpack.c.l.b16 %v1569
        %v1586 = vunpack.c.l.b16 %v1570
        %v1587 = vunpack.c.l.b16 %v1571
        %v1588 = vunpack.c.l.b16 %v1572
        %v1589 = vunpack.c.l.b16 %v1573
        %v1590 = vunpack.c.l.b16 %v1574
        %v1591 = vpack.c.b16 %v1584, %v1583
        %v1592 = vpack.c.b16 %v1586, %v1585
        %v1593 = vpack.c.b16 %v1588, %v1587
        %v1594 = vpack.c.b16 %v1590, %v1589
        %1599 = vmatprep.subr.bf16.mxu0 0
        %1600 = vmatpush1.bf16.msra.mxu0 %v1591
        %1601 = vmatprep.subr.bf16.mxu0 0
        %1602 = vmatpush1.bf16.msra.mxu0 %v1592
        %1603 = vmatprep.subr.bf16.mxu0 0
        %1604 = vmatpush1.bf16.msra.mxu0 %v1593
        %1605 = vmatprep.subr.bf16.mxu0 0
        %1606 = vmatpush1.bf16.msra.mxu0 %v1594
        %1607 = vmatprep.subr.bf16.mxu0 0
        %1608 = vmatpush1.bf16.msra.mxu0 0
        %1609 = vmatprep.subr.bf16.mxu0 0
        %1610 = vmatpush1.bf16.msra.mxu0 0
        %1611 = vmatprep.subr.bf16.mxu0 0
        %1612 = vmatpush1.bf16.msra.mxu0 0
        %1613 = vmatprep.subr.bf16.mxu0 0
        %1614 = vmatpush1.bf16.msra.mxu0 0
        %1615 = vmatprep.subr.bf16.mxu0 0
        %1616 = vmatpush1.bf16.msra.mxu0 0
        %1617 = vmatprep.subr.bf16.mxu0 0
        %1618 = vmatpush1.bf16.msra.mxu0 0
        %1619 = vmatprep.subr.bf16.mxu0 0
        %1620 = vmatpush1.bf16.msra.mxu0 0
        %1621 = vmatprep.subr.bf16.mxu0 0
        %1622 = vmatpush1.bf16.msra.mxu0 0
        %1623 = vmatprep.subr.bf16.mxu0 0
        %1624 = vmatpush1.bf16.msra.mxu0 0
        %1625 = vmatprep.subr.bf16.mxu0 0
        %1626 = vmatpush1.bf16.msra.mxu0 0
        %1627 = vmatprep.subr.bf16.mxu0 0
        %1628 = vmatpush1.bf16.msra.mxu0 0
        %1629 = vmatprep.subr.bf16.mxu0 0
        %1630 = vmatpush1.bf16.msra.mxu0 0
        %1631 = vmatprep.mubr.bf16.mxu0 0
        %1632 = vmatmul.mubr.bf16.gmra.mrb[0].mxu0 %v840
        %v1633 = vpop.f32.mrb[0].mxu0
        %v1634 = vadd.f32 0.0, %v1633
        %v1635 = vpop.f32.mrb[0].mxu0
        %v1636 = vpop.f32.mrb[0].mxu0
        %v1637 = vadd.f32 0.0, %v1636
        %v1638 = vpop.f32.mrb[0].mxu0
        %1639 = vdwg.mxu0
        %s1640 = scalar_lea.vmem [#allocation14], 32
        %v1641 = vld [vmem:[%s1640] sm:$0xf]
        %v1642 = vld [vmem:[%s1640 + $0x4] sm:$0xf]
        %v1643 = vld [vmem:[%s1640 + $0x8] sm:$0xf]
        %v1644 = vld [vmem:[%s1640 + $0xc] sm:$0xf]
        %v1645 = vld [vmem:[%s1640 + $0x10] sm:$0xf]
        %v1646 = vld [vmem:[%s1640 + $0x14] sm:$0xf]
        %v1647 = vld [vmem:[%s1640 + $0x18] sm:$0xf]
        %v1648 = vld [vmem:[%s1640 + $0x1c] sm:$0xf]
        %v1657 = vunpack.c.l.b16 %v1641
        %v1658 = vunpack.c.l.b16 %v1642
        %v1659 = vunpack.c.l.b16 %v1643
        %v1660 = vunpack.c.l.b16 %v1644
        %v1661 = vunpack.c.l.b16 %v1645
        %v1662 = vunpack.c.l.b16 %v1646
        %v1663 = vunpack.c.l.b16 %v1647
        %v1664 = vunpack.c.l.b16 %v1648
        %v1665 = vpack.c.b16 %v1658, %v1657
        %v1666 = vpack.c.b16 %v1660, %v1659
        %v1667 = vpack.c.b16 %v1662, %v1661
        %v1668 = vpack.c.b16 %v1664, %v1663
        %1673 = vmatprep.subr.bf16.mxu0 0
        %1674 = vmatpush1.bf16.msra.mxu0 %v1665
        %1675 = vmatprep.subr.bf16.mxu0 0
        %1676 = vmatpush1.bf16.msra.mxu0 %v1666
        %1677 = vmatprep.subr.bf16.mxu0 0
        %1678 = vmatpush1.bf16.msra.mxu0 %v1667
        %1679 = vmatprep.subr.bf16.mxu0 0
        %1680 = vmatpush1.bf16.msra.mxu0 %v1668
        %1681 = vmatprep.subr.bf16.mxu0 0
        %1682 = vmatpush1.bf16.msra.mxu0 0
        %1683 = vmatprep.subr.bf16.mxu0 0
        %1684 = vmatpush1.bf16.msra.mxu0 0
        %1685 = vmatprep.subr.bf16.mxu0 0
        %1686 = vmatpush1.bf16.msra.mxu0 0
        %1687 = vmatprep.subr.bf16.mxu0 0
        %1688 = vmatpush1.bf16.msra.mxu0 0
        %1689 = vmatprep.subr.bf16.mxu0 0
        %1690 = vmatpush1.bf16.msra.mxu0 0
        %1691 = vmatprep.subr.bf16.mxu0 0
        %1692 = vmatpush1.bf16.msra.mxu0 0
        %1693 = vmatprep.subr.bf16.mxu0 0
        %1694 = vmatpush1.bf16.msra.mxu0 0
        %1695 = vmatprep.subr.bf16.mxu0 0
        %1696 = vmatpush1.bf16.msra.mxu0 0
        %1697 = vmatprep.subr.bf16.mxu0 0
        %1698 = vmatpush1.bf16.msra.mxu0 0
        %1699 = vmatprep.subr.bf16.mxu0 0
        %1700 = vmatpush1.bf16.msra.mxu0 0
        %1701 = vmatprep.subr.bf16.mxu0 0
        %1702 = vmatpush1.bf16.msra.mxu0 0
        %1703 = vmatprep.subr.bf16.mxu0 0
        %1704 = vmatpush1.bf16.msra.mxu0 0
        %1705 = vmatprep.mubr.bf16.mxu0 0
        %1706 = vmatmul.mubr.bf16.gmra.mrb[0].mxu0 %v840
        %v1707 = vpop.f32.mrb[0].mxu0
        %v1708 = vadd.f32 0.0, %v1707
        %v1709 = vpop.f32.mrb[0].mxu0
        %v1710 = vpop.f32.mrb[0].mxu0
        %v1711 = vadd.f32 0.0, %v1710
        %v1712 = vpop.f32.mrb[0].mxu0
        %1713 = vdwg.mxu0
        %v1714 = vmul.f32 %v1412, %v755
        %v1715 = vmul.f32 %v1415, %v756
        %v1716 = vmul.f32 %v1486, %v757
        %v1717 = vmul.f32 %v1489, %v758
        %v1718 = vadd.f32 %v1714, %v1716
        %v1719 = vadd.f32 %v1715, %v1717
        %v1720 = vpack.c.bf16 %v1719, %v1718
        %v1721 = vmul.f32 %v1560, %v755
        %v1722 = vmul.f32 %v1563, %v756
        %v1723 = vmul.f32 %v1634, %v757
        %v1724 = vmul.f32 %v1637, %v758
        %v1725 = vadd.f32 %v1721, %v1723
        %v1726 = vadd.f32 %v1722, %v1724
        %v1727 = vpack.c.bf16 %v1726, %v1725
        %v1728 = vpack.c.bf16 %v1711, %v1708
        %v1730 = vsel %vm1190, %v1720, 0
        %v1733 = vsel %vm1190, %v1727, 0
        %1735 = vmatprep.subr.bf16.mxu0 0
        %1736 = vmatpush1.bf16.xpose.msra.mxu0 %v1733
        %1737 = vmatprep.subr.bf16.mxu0 0
        %1738 = vmatpush1.bf16.xpose.msra.mxu0 0
        %1739 = vmatprep.subr.bf16.mxu0 0
        %1740 = vmatpush1.bf16.xpose.msra.mxu0 0
        %1741 = vmatprep.subr.bf16.mxu0 0
        %1742 = vmatpush1.bf16.xpose.msra.mxu0 0
        %1743 = vmatprep.subr.bf16.mxu0 0
        %1744 = vmatpush1.bf16.xpose.msra.mxu0 0
        %1745 = vmatprep.subr.bf16.mxu0 0
        %1746 = vmatpush1.bf16.xpose.msra.mxu0 0
        %1747 = vmatprep.subr.bf16.mxu0 0
        %1748 = vmatpush1.bf16.xpose.msra.mxu0 0
        %1749 = vmatprep.subr.bf16.mxu0 0
        %1750 = vmatpush1.bf16.xpose.msra.mxu0 0
        %1751 = vmatprep.subr.bf16.mxu0 0
        %1752 = vmatpush1.bf16.xpose.msra.mxu0 0
        %1753 = vmatprep.subr.bf16.mxu0 0
        %1754 = vmatpush1.bf16.xpose.msra.mxu0 0
        %1755 = vmatprep.subr.bf16.mxu0 0
        %1756 = vmatpush1.bf16.xpose.msra.mxu0 0
        %1757 = vmatprep.subr.bf16.mxu0 0
        %1758 = vmatpush1.bf16.xpose.msra.mxu0 0
        %1759 = vmatprep.subr.bf16.mxu0 0
        %1760 = vmatpush1.bf16.xpose.msra.mxu0 0
        %1761 = vmatprep.subr.bf16.mxu0 0
        %1762 = vmatpush1.bf16.xpose.msra.mxu0 0
        %1763 = vmatprep.subr.bf16.mxu0 0
        %1764 = vmatpush1.bf16.xpose.msra.mxu0 0
        %1765 = vmatprep.subr.bf16.mxu0 0
        %1766 = vmatpush1.bf16.xpose.msra.mxu0 0
        %1767 = vmatprep.mubr.bf16.mxu0 0
        %1768 = vmatmul.mubr.bf16.gmra.mrb[0].mxu0 %v1730
        %v1769 = vpop.f32.mrb[0].mxu0
        %v1770 = vadd.f32 0.0, %v1769
        %v1771 = vpop.f32.mrb[0].mxu0
        %v1772 = vpop.f32.mrb[0].mxu0
        %v1773 = vadd.f32 0.0, %v1772
        %v1774 = vpop.f32.mrb[0].mxu0
        %1775 = vdwg.mxu0
        %v1776 = vmul.f32 %v1770, 0.17677669
        %v1777 = vmul.f32 %v1773, 0.17677669
        %v1778 = vsel %vm1245, %v1776, -1e+30
        %v1779 = vsel %vm1246, %v1777, -1e+30
        %v1780 = vsel %vm1249, %v1778, -inf
        %1781 = vmax.xlane.f32.xlu0 %v1780
        %v1782 = vpop.xlane.xlu0 %1781
        %v1783 = vsel %vm1253, %v1779, -inf
        %1784 = vmax.xlane.f32.xlu0 %v1783
        %v1785 = vpop.xlane.xlu0 %1784
        %v1786 = vmax.f32 %v1782, -1e+30
        %v1787 = vmax.f32 %v1785, -1e+30
        %v1788 = vsub.f32 -1e+30, %v1786
        %v1789 = vsub.f32 -1e+30, %v1787
        %v1790 = vmul.f32 %v1788, 1.442695
        %v1791 = vpow.pop %v1790
        %v1792 = vmul.f32 %v1789, 1.442695
        %v1793 = vpow.pop %v1792
        %v1794 = vsub.f32 %v1778, %v1786
        %v1795 = vsub.f32 %v1779, %v1787
        %v1796 = vmul.f32 %v1794, 1.442695
        %v1797 = vpow.pop %v1796
        %v1798 = vmul.f32 %v1795, 1.442695
        %v1799 = vpow.pop %v1798
        %v1800 = vmul.f32 %v1791, 0.0
        %v1801 = vmul.f32 %v1793, 0.0
        %v1802 = vsel %vm1249, %v1797, 0.0
        %1803 = vadd.xlane.f32.xlu0 %v1802
        %v1804 = vpop.xlane.xlu0 %1803
        %v1805 = vsel %vm1253, %v1799, 0.0
        %1806 = vadd.xlane.f32.xlu0 %v1805
        %v1807 = vpop.xlane.xlu0 %1806
        %v1808 = vadd.f32 %v1800, %v1804
        %v1809 = vadd.f32 %v1801, %v1807
        %v1810 = vpack.c.bf16 %v1799, %v1797
        %v1812 = vsel %vm1249, %v1810, 0
        %v1815 = vand.u32 %v1728, %v1288
        %1817 = vmatprep.subr.bf16.mxu0 0
        %1818 = vmatpush1.bf16.msra.mxu0 %v1815
        %1819 = vmatprep.subr.bf16.mxu0 0
        %1820 = vmatpush1.bf16.msra.mxu0 0
        %1821 = vmatprep.subr.bf16.mxu0 0
        %1822 = vmatpush1.bf16.msra.mxu0 0
        %1823 = vmatprep.subr.bf16.mxu0 0
        %1824 = vmatpush1.bf16.msra.mxu0 0
        %1825 = vmatprep.subr.bf16.mxu0 0
        %1826 = vmatpush1.bf16.msra.mxu0 0
        %1827 = vmatprep.subr.bf16.mxu0 0
        %1828 = vmatpush1.bf16.msra.mxu0 0
        %1829 = vmatprep.subr.bf16.mxu0 0
        %1830 = vmatpush1.bf16.msra.mxu0 0
        %1831 = vmatprep.subr.bf16.mxu0 0
        %1832 = vmatpush1.bf16.msra.mxu0 0
        %1833 = vmatprep.subr.bf16.mxu0 0
        %1834 = vmatpush1.bf16.msra.mxu0 0
        %1835 = vmatprep.subr.bf16.mxu0 0
        %1836 = vmatpush1.bf16.msra.mxu0 0
        %1837 = vmatprep.subr.bf16.mxu0 0
        %1838 = vmatpush1.bf16.msra.mxu0 0
        %1839 = vmatprep.subr.bf16.mxu0 0
        %1840 = vmatpush1.bf16.msra.mxu0 0
        %1841 = vmatprep.subr.bf16.mxu0 0
        %1842 = vmatpush1.bf16.msra.mxu0 0
        %1843 = vmatprep.subr.bf16.mxu0 0
        %1844 = vmatpush1.bf16.msra.mxu0 0
        %1845 = vmatprep.subr.bf16.mxu0 0
        %1846 = vmatpush1.bf16.msra.mxu0 0
        %1847 = vmatprep.subr.bf16.mxu0 0
        %1848 = vmatpush1.bf16.msra.mxu0 0
        %1849 = vmatprep.mubr.bf16.mxu0 0
        %1850 = vmatmul.mubr.bf16.gmra.mrb[0].mxu0 %v1812
        %v1851 = vpop.f32.mrb[0].mxu0
        %v1852 = vadd.f32 0.0, %v1851
        %v1853 = vpop.f32.mrb[0].mxu0
        %v1854 = vpop.f32.mrb[0].mxu0
        %v1855 = vadd.f32 0.0, %v1854
        %v1856 = vpop.f32.mrb[0].mxu0
        %1857 = vdwg.mxu0
        %v1858 = vadd.f32 %v1800, %v1852
        %v1859 = vadd.f32 %v1801, %v1855
        %v1860 = vrcp.pop %v1808
        %v1861 = vrcp.pop %v1809
        %v1862 = vmul.f32 %v1858, %v1860
        %v1863 = vmul.f32 %v1859, %v1861
        %v1864 = vpack.c.bf16 %v1863, %v1862
        %s1865 = scalar_lea.vmem [#allocation16], 16
        %v1866 = vld [vmem:[%s1865] sm:$0xf]
        %v1867 = vld [vmem:[%s1865 + $0x4] sm:$0xf]
        %v1868 = vld [vmem:[%s1865 + $0x8] sm:$0xf]
        %v1869 = vld [vmem:[%s1865 + $0xc] sm:$0xf]
        %v1874 = vunpack.c.l.b16 %v1866
        %v1875 = vunpack.c.l.b16 %v1867
        %v1876 = vunpack.c.l.b16 %v1868
        %v1877 = vunpack.c.l.b16 %v1869
        %v1878 = vpack.c.b16 %v1875, %v1874
        %v1879 = vpack.c.b16 %v1877, %v1876
        %v1883 = vsel %vm1190, %v1864, 0
        %1885 = vmatprep.subr.bf16.mxu0 0
        %1886 = vmatpush1.bf16.msra.mxu0 %v1878
        %1887 = vmatprep.subr.bf16.mxu0 0
        %1888 = vmatpush1.bf16.msra.mxu0 %v1879
        %1889 = vmatprep.subr.bf16.mxu0 0
        %1890 = vmatpush1.bf16.msra.mxu0 0
        %1891 = vmatprep.subr.bf16.mxu0 0
        %1892 = vmatpush1.bf16.msra.mxu0 0
        %1893 = vmatprep.subr.bf16.mxu0 0
        %1894 = vmatpush1.bf16.msra.mxu0 0
        %1895 = vmatprep.subr.bf16.mxu0 0
        %1896 = vmatpush1.bf16.msra.mxu0 0
        %1897 = vmatprep.subr.bf16.mxu0 0
        %1898 = vmatpush1.bf16.msra.mxu0 0
        %1899 = vmatprep.subr.bf16.mxu0 0
        %1900 = vmatpush1.bf16.msra.mxu0 0
        %1901 = vmatprep.subr.bf16.mxu0 0
        %1902 = vmatpush1.bf16.msra.mxu0 0
        %1903 = vmatprep.subr.bf16.mxu0 0
        %1904 = vmatpush1.bf16.msra.mxu0 0
        %1905 = vmatprep.subr.bf16.mxu0 0
        %1906 = vmatpush1.bf16.msra.mxu0 0
        %1907 = vmatprep.subr.bf16.mxu0 0
        %1908 = vmatpush1.bf16.msra.mxu0 0
        %1909 = vmatprep.subr.bf16.mxu0 0
        %1910 = vmatpush1.bf16.msra.mxu0 0
        %1911 = vmatprep.subr.bf16.mxu0 0
        %1912 = vmatpush1.bf16.msra.mxu0 0
        %1913 = vmatprep.subr.bf16.mxu0 0
        %1914 = vmatpush1.bf16.msra.mxu0 0
        %1915 = vmatprep.subr.bf16.mxu0 0
        %1916 = vmatpush1.bf16.msra.mxu0 0
        %1917 = vmatprep.mubr.bf16.mxu0 0
        %1918 = vmatmul.mubr.bf16.gmra.mrb[0].mxu0 %v1883
        %v1919 = vpop.f32.mrb[0].mxu0
        %v1920 = vadd.f32 0.0, %v1919
        %v1921 = vpop.f32.mrb[0].mxu0
        %v1922 = vpop.f32.mrb[0].mxu0
        %v1923 = vadd.f32 0.0, %v1922
        %v1924 = vpop.f32.mrb[0].mxu0
        %1925 = vdwg.mxu0
        %v1930 = vunpack.c.l.b16 %v1340
        %v1931 = vunpack.c.l.b16 %v1341
        %v1932 = vunpack.c.l.b16 %v1342
        %v1933 = vunpack.c.l.b16 %v1343
        %v1934 = vpack.c.b16 %v1931, %v1930
        %v1935 = vpack.c.b16 %v1933, %v1932
        %v1939 = vsel %vm1190, %v1339, 0
        %1941 = vmatprep.subr.bf16.mxu0 0
        %1942 = vmatpush1.bf16.msra.mxu0 %v1934
        %1943 = vmatprep.subr.bf16.mxu0 0
        %1944 = vmatpush1.bf16.msra.mxu0 %v1935
        %1945 = vmatprep.subr.bf16.mxu0 0
        %1946 = vmatpush1.bf16.msra.mxu0 0
        %1947 = vmatprep.subr.bf16.mxu0 0
        %1948 = vmatpush1.bf16.msra.mxu0 0
        %1949 = vmatprep.subr.bf16.mxu0 0
        %1950 = vmatpush1.bf16.msra.mxu0 0
        %1951 = vmatprep.subr.bf16.mxu0 0
        %1952 = vmatpush1.bf16.msra.mxu0 0
        %1953 = vmatprep.subr.bf16.mxu0 0
        %1954 = vmatpush1.bf16.msra.mxu0 0
        %1955 = vmatprep.subr.bf16.mxu0 0
        %1956 = vmatpush1.bf16.msra.mxu0 0
        %1957 = vmatprep.subr.bf16.mxu0 0
        %1958 = vmatpush1.bf16.msra.mxu0 0
        %1959 = vmatprep.subr.bf16.mxu0 0
        %1960 = vmatpush1.bf16.msra.mxu0 0
        %1961 = vmatprep.subr.bf16.mxu0 0
        %1962 = vmatpush1.bf16.msra.mxu0 0
        %1963 = vmatprep.subr.bf16.mxu0 0
        %1964 = vmatpush1.bf16.msra.mxu0 0
        %1965 = vmatprep.subr.bf16.mxu0 0
        %1966 = vmatpush1.bf16.msra.mxu0 0
        %1967 = vmatprep.subr.bf16.mxu0 0
        %1968 = vmatpush1.bf16.msra.mxu0 0
        %1969 = vmatprep.subr.bf16.mxu0 0
        %1970 = vmatpush1.bf16.msra.mxu0 0
        %1971 = vmatprep.subr.bf16.mxu0 0
        %1972 = vmatpush1.bf16.msra.mxu0 0
        %1973 = vmatprep.mubr.bf16.mxu0 0
        %1974 = vmatmul.mubr.bf16.gmra.mrb[0].mxu0 %v1939
        %v1975 = vpop.f32.mrb[0].mxu0
        %v1976 = vadd.f32 %v1920, %v1975
        %v1977 = vpop.f32.mrb[0].mxu0
        %v1978 = vpop.f32.mrb[0].mxu0
        %v1979 = vadd.f32 %v1923, %v1978
        %v1980 = vpop.f32.mrb[0].mxu0
        %1981 = vdwg.mxu0
        %v1982 = vadd.f32 %v753, %v1976
        %v1983 = vadd.f32 %v754, %v1979
        %v1984 = vld [vmem:[#allocation20] sm:$0x1]
        %v1985 = vld [vmem:[#allocation22] sm:$0x1]
        %v1986 = vsel %vm761, %v1982, 0.0
        %1987 = vadd.xlane.f32.xlu0 %v1986
        %v1988 = vpop.xlane.xlu0 %1987
        %v1989 = vsel %vm765, %v1983, 0.0
        %1990 = vadd.xlane.f32.xlu0 %v1989
        %v1991 = vpop.xlane.xlu0 %1990
        %v1992 = vmul.f32 %v1988, %v769
        %v1993 = vmul.f32 %v1991, %v769
        %v1994 = vsub.f32 %v1982, %v1992
        %v1995 = vsub.f32 %v1983, %v1993
        %v1996 = vmul.f32 %v1994, %v1994
        %v1997 = vmul.f32 %v1995, %v1995
        %v1998 = vsel %vm761, %v1996, 0.0
        %1999 = vadd.xlane.f32.xlu0 %v1998
        %v2000 = vpop.xlane.xlu0 %1999
        %v2001 = vsel %vm765, %v1997, 0.0
        %2002 = vadd.xlane.f32.xlu0 %v2001
        %v2003 = vpop.xlane.xlu0 %2002
        %v2004 = vmul.f32 %v2000, %v769
        %v2005 = vmul.f32 %v2003, %v769
        %v2006 = vadd.f32 %v2004, 1e-05
        %v2007 = vadd.f32 %v2005, 1e-05
        %v2008 = vrsqrt.pop %v2006
        %v2009 = vrsqrt.pop %v2007
        %v2010 = vmul.f32 %v1994, %v2008
        %v2011 = vmul.f32 %v1995, %v2009
        %v2013 = vlaneseq
        %v2014 = vshrl.u32 %v2013, 7
        %v2015 = vsub.s32 0, %v2014
        %v2016 = vrot.slane %v1984, %v2015
        %v2018 = vmul.f32 %v2010, %v2016
        %v2019 = vmul.f32 %v2011, %v2016
        %v2021 = vlaneseq
        %v2022 = vshrl.u32 %v2021, 7
        %v2023 = vsub.s32 0, %v2022
        %v2024 = vrot.slane %v1985, %v2023
        %v2026 = vadd.f32 %v2018, %v2024
        %v2027 = vadd.f32 %v2019, %v2024
        %v2028 = vpack.c.bf16 %v2027, %v2026
        %v2029 = vld [vmem:[#allocation23] sm:$0xf]
        %v2030 = vld [vmem:[#allocation23 + $0x4] sm:$0xf]
        %v2031 = vld [vmem:[#allocation23 + $0x8] sm:$0xf]
        %v2032 = vld [vmem:[#allocation23 + $0xc] sm:$0xf]
        %v2033 = vld [vmem:[#allocation23 + $0x10] sm:$0xf]
        %v2034 = vld [vmem:[#allocation23 + $0x14] sm:$0xf]
        %v2035 = vld [vmem:[#allocation23 + $0x18] sm:$0xf]
        %v2036 = vld [vmem:[#allocation23 + $0x1c] sm:$0xf]
        %v2045 = vunpack.c.l.b16 %v2029
        %v2046 = vunpack.c.l.b16 %v2030
        %v2047 = vunpack.c.l.b16 %v2031
        %v2048 = vunpack.c.l.b16 %v2032
        %v2049 = vunpack.c.l.b16 %v2033
        %v2050 = vunpack.c.l.b16 %v2034
        %v2051 = vunpack.c.l.b16 %v2035
        %v2052 = vunpack.c.l.b16 %v2036
        %v2053 = vpack.c.b16 %v2046, %v2045
        %v2054 = vpack.c.b16 %v2048, %v2047
        %v2055 = vpack.c.b16 %v2050, %v2049
        %v2056 = vpack.c.b16 %v2052, %v2051
        %v2062 = vsel %vm761, %v2028, 0
        %2064 = vmatprep.subr.bf16.mxu0 0
        %2065 = vmatpush1.bf16.msra.mxu0 %v2053
        %2066 = vmatprep.subr.bf16.mxu0 0
        %2067 = vmatpush1.bf16.msra.mxu0 %v2054
        %2068 = vmatprep.subr.bf16.mxu0 0
        %2069 = vmatpush1.bf16.msra.mxu0 %v2055
        %2070 = vmatprep.subr.bf16.mxu0 0
        %2071 = vmatpush1.bf16.msra.mxu0 %v2056
        %2072 = vmatprep.subr.bf16.mxu0 0
        %2073 = vmatpush1.bf16.msra.mxu0 0
        %2074 = vmatprep.subr.bf16.mxu0 0
        %2075 = vmatpush1.bf16.msra.mxu0 0
        %2076 = vmatprep.subr.bf16.mxu0 0
        %2077 = vmatpush1.bf16.msra.mxu0 0
        %2078 = vmatprep.subr.bf16.mxu0 0
        %2079 = vmatpush1.bf16.msra.mxu0 0
        %2080 = vmatprep.subr.bf16.mxu0 0
        %2081 = vmatpush1.bf16.msra.mxu0 0
        %2082 = vmatprep.subr.bf16.mxu0 0
        %2083 = vmatpush1.bf16.msra.mxu0 0
        %2084 = vmatprep.subr.bf16.mxu0 0
        %2085 = vmatpush1.bf16.msra.mxu0 0
        %2086 = vmatprep.subr.bf16.mxu0 0
        %2087 = vmatpush1.bf16.msra.mxu0 0
        %2088 = vmatprep.subr.bf16.mxu0 0
        %2089 = vmatpush1.bf16.msra.mxu0 0
        %2090 = vmatprep.subr.bf16.mxu0 0
        %2091 = vmatpush1.bf16.msra.mxu0 0
        %2092 = vmatprep.subr.bf16.mxu0 0
        %2093 = vmatpush1.bf16.msra.mxu0 0
        %2094 = vmatprep.subr.bf16.mxu0 0
        %2095 = vmatpush1.bf16.msra.mxu0 0
        %2096 = vmatprep.mubr.bf16.mxu0 0
        %2097 = vmatmul.mubr.bf16.gmra.mrb[0].mxu0 %v2062
        %v2098 = vpop.f32.mrb[0].mxu0
        %v2099 = vadd.f32 0.0, %v2098
        %v2100 = vpop.f32.mrb[0].mxu0
        %v2101 = vpop.f32.mrb[0].mxu0
        %v2102 = vadd.f32 0.0, %v2101
        %v2103 = vpop.f32.mrb[0].mxu0
        %2104 = vdwg.mxu0
        %v2105 = vld [vmem:[#allocation25] sm:$0xf]
        %v2106 = vld [vmem:[#allocation25 + $0x4] sm:$0xf]
        %v2107 = vld [vmem:[#allocation25 + $0x8] sm:$0xf]
        %v2108 = vld [vmem:[#allocation25 + $0xc] sm:$0xf]
        %v2109 = vld [vmem:[#allocation25 + $0x10] sm:$0xf]
        %v2110 = vld [vmem:[#allocation25 + $0x14] sm:$0xf]
        %v2111 = vld [vmem:[#allocation25 + $0x18] sm:$0xf]
        %v2112 = vld [vmem:[#allocation25 + $0x1c] sm:$0xf]
        %v2121 = vunpack.c.l.b16 %v2105
        %v2122 = vunpack.c.l.b16 %v2106
        %v2123 = vunpack.c.l.b16 %v2107
        %v2124 = vunpack.c.l.b16 %v2108
        %v2125 = vunpack.c.l.b16 %v2109
        %v2126 = vunpack.c.l.b16 %v2110
        %v2127 = vunpack.c.l.b16 %v2111
        %v2128 = vunpack.c.l.b16 %v2112
        %v2129 = vpack.c.b16 %v2122, %v2121
        %v2130 = vpack.c.b16 %v2124, %v2123
        %v2131 = vpack.c.b16 %v2126, %v2125
        %v2132 = vpack.c.b16 %v2128, %v2127
        %2137 = vmatprep.subr.bf16.mxu0 0
        %2138 = vmatpush1.bf16.msra.mxu0 %v2129
        %2139 = vmatprep.subr.bf16.mxu0 0
        %2140 = vmatpush1.bf16.msra.mxu0 %v2130
        %2141 = vmatprep.subr.bf16.mxu0 0
        %2142 = vmatpush1.bf16.msra.mxu0 %v2131
        %2143 = vmatprep.subr.bf16.mxu0 0
        %2144 = vmatpush1.bf16.msra.mxu0 %v2132
        %2145 = vmatprep.subr.bf16.mxu0 0
        %2146 = vmatpush1.bf16.msra.mxu0 0
        %2147 = vmatprep.subr.bf16.mxu0 0
        %2148 = vmatpush1.bf16.msra.mxu0 0
        %2149 = vmatprep.subr.bf16.mxu0 0
        %2150 = vmatpush1.bf16.msra.mxu0 0
        %2151 = vmatprep.subr.bf16.mxu0 0
        %2152 = vmatpush1.bf16.msra.mxu0 0
        %2153 = vmatprep.subr.bf16.mxu0 0
        %2154 = vmatpush1.bf16.msra.mxu0 0
        %2155 = vmatprep.subr.bf16.mxu0 0
        %2156 = vmatpush1.bf16.msra.mxu0 0
        %2157 = vmatprep.subr.bf16.mxu0 0
        %2158 = vmatpush1.bf16.msra.mxu0 0
        %2159 = vmatprep.subr.bf16.mxu0 0
        %2160 = vmatpush1.bf16.msra.mxu0 0
        %2161 = vmatprep.subr.bf16.mxu0 0
        %2162 = vmatpush1.bf16.msra.mxu0 0
        %2163 = vmatprep.subr.bf16.mxu0 0
        %2164 = vmatpush1.bf16.msra.mxu0 0
        %2165 = vmatprep.subr.bf16.mxu0 0
        %2166 = vmatpush1.bf16.msra.mxu0 0
        %2167 = vmatprep.subr.bf16.mxu0 0
        %2168 = vmatpush1.bf16.msra.mxu0 0
        %2169 = vmatprep.mubr.bf16.mxu0 0
        %2170 = vmatmul.mubr.bf16.gmra.mrb[0].mxu0 %v2062
        %v2171 = vpop.f32.mrb[0].mxu0
        %v2172 = vadd.f32 0.0, %v2171
        %v2173 = vpop.f32.mrb[0].mxu0
        %v2174 = vpop.f32.mrb[0].mxu0
        %v2175 = vadd.f32 0.0, %v2174
        %v2176 = vpop.f32.mrb[0].mxu0
        %2177 = vdwg.mxu0
        %v2178 = vmul.f32 %v2099, %v2172
        %v2179 = vmul.f32 %v2102, %v2175
        %v2180 = vxor.u32 %v2172, 2147483648
        %v2181 = vxor.u32 %v2175, 2147483648
        %v2182 = vmul.f32 %v2180, 1.442695
        %v2183 = vpow.pop %v2182
        %v2184 = vmul.f32 %v2181, 1.442695
        %v2185 = vpow.pop %v2184
        %v2186 = vadd.f32 %v2183, 1.0
        %v2187 = vadd.f32 %v2185, 1.0
        %v2188 = vrcp.pop %v2186
        %v2189 = vmul.f32 1.0, %v2188
        %v2190 = vrcp.pop %v2187
        %v2191 = vmul.f32 1.0, %v2190
        %v2192 = vmul.f32 %v2178, %v2189
        %v2193 = vmul.f32 %v2179, %v2191
        %v2194 = vpack.c.bf16 %v2193, %v2192
        %v2195 = vld [vmem:[#allocation26] sm:$0xf]
        %v2196 = vld [vmem:[#allocation26 + $0x4] sm:$0xf]
        %v2197 = vld [vmem:[#allocation26 + $0x8] sm:$0xf]
        %v2198 = vld [vmem:[#allocation26 + $0xc] sm:$0xf]
        %v2199 = vld [vmem:[#allocation26 + $0x10] sm:$0xf]
        %v2200 = vld [vmem:[#allocation26 + $0x14] sm:$0xf]
        %v2201 = vld [vmem:[#allocation26 + $0x18] sm:$0xf]
        %v2202 = vld [vmem:[#allocation26 + $0x1c] sm:$0xf]
        %v2203 = vld [vmem:[#allocation26 + $0x20] sm:$0xf]
        %v2204 = vld [vmem:[#allocation26 + $0x24] sm:$0xf]
        %v2205 = vld [vmem:[#allocation26 + $0x28] sm:$0xf]
        %v2206 = vld [vmem:[#allocation26 + $0x2c] sm:$0xf]
        %v2207 = vld [vmem:[#allocation26 + $0x30] sm:$0xf]
        %v2208 = vld [vmem:[#allocation26 + $0x34] sm:$0xf]
        %v2209 = vld [vmem:[#allocation26 + $0x38] sm:$0xf]
        %v2210 = vld [vmem:[#allocation26 + $0x3c] sm:$0xf]
        %v2227 = vunpack.c.l.b16 %v2195
        %v2228 = vunpack.c.l.b16 %v2196
        %v2229 = vunpack.c.l.b16 %v2197
        %v2230 = vunpack.c.l.b16 %v2198
        %v2231 = vunpack.c.l.b16 %v2199
        %v2232 = vunpack.c.l.b16 %v2200
        %v2233 = vunpack.c.l.b16 %v2201
        %v2234 = vunpack.c.l.b16 %v2202
        %v2235 = vunpack.c.l.b16 %v2203
        %v2236 = vunpack.c.l.b16 %v2204
        %v2237 = vunpack.c.l.b16 %v2205
        %v2238 = vunpack.c.l.b16 %v2206
        %v2239 = vunpack.c.l.b16 %v2207
        %v2240 = vunpack.c.l.b16 %v2208
        %v2241 = vunpack.c.l.b16 %v2209
        %v2242 = vunpack.c.l.b16 %v2210
        %v2243 = vpack.c.b16 %v2228, %v2227
        %v2244 = vpack.c.b16 %v2230, %v2229
        %v2245 = vpack.c.b16 %v2232, %v2231
        %v2246 = vpack.c.b16 %v2234, %v2233
        %v2247 = vpack.c.b16 %v2236, %v2235
        %v2248 = vpack.c.b16 %v2238, %v2237
        %v2249 = vpack.c.b16 %v2240, %v2239
        %v2250 = vpack.c.b16 %v2242, %v2241
        %2259 = vmatprep.subr.bf16.mxu0 0
        %2260 = vmatpush1.bf16.msra.mxu0 %v2243
        %2261 = vmatprep.subr.bf16.mxu0 0
        %2262 = vmatpush1.bf16.msra.mxu0 %v2244
        %2263 = vmatprep.subr.bf16.mxu0 0
        %2264 = vmatpush1.bf16.msra.mxu0 %v2245
        %2265 = vmatprep.subr.bf16.mxu0 0
        %2266 = vmatpush1.bf16.msra.mxu0 %v2246
        %2267 = vmatprep.subr.bf16.mxu0 0
        %2268 = vmatpush1.bf16.msra.mxu0 %v2247
        %2269 = vmatprep.subr.bf16.mxu0 0
        %2270 = vmatpush1.bf16.msra.mxu0 %v2248
        %2271 = vmatprep.subr.bf16.mxu0 0
        %2272 = vmatpush1.bf16.msra.mxu0 %v2249
        %2273 = vmatprep.subr.bf16.mxu0 0
        %2274 = vmatpush1.bf16.msra.mxu0 %v2250
        %2275 = vmatprep.subr.bf16.mxu0 0
        %2276 = vmatpush1.bf16.msra.mxu0 0
        %2277 = vmatprep.subr.bf16.mxu0 0
        %2278 = vmatpush1.bf16.msra.mxu0 0
        %2279 = vmatprep.subr.bf16.mxu0 0
        %2280 = vmatpush1.bf16.msra.mxu0 0
        %2281 = vmatprep.subr.bf16.mxu0 0
        %2282 = vmatpush1.bf16.msra.mxu0 0
        %2283 = vmatprep.subr.bf16.mxu0 0
        %2284 = vmatpush1.bf16.msra.mxu0 0
        %2285 = vmatprep.subr.bf16.mxu0 0
        %2286 = vmatpush1.bf16.msra.mxu0 0
        %2287 = vmatprep.subr.bf16.mxu0 0
        %2288 = vmatpush1.bf16.msra.mxu0 0
        %2289 = vmatprep.subr.bf16.mxu0 0
        %2290 = vmatpush1.bf16.msra.mxu0 0
        %2291 = vmatprep.mubr.bf16.mxu0 0
        %2292 = vmatmul.mubr.bf16.gmra.mrb[0].mxu0 %v2194
        %v2293 = vpop.f32.mrb[0].mxu0
        %v2294 = vadd.f32 0.0, %v2293
        %v2295 = vpop.f32.mrb[0].mxu0
        %v2296 = vpop.f32.mrb[0].mxu0
        %v2297 = vadd.f32 0.0, %v2296
        %v2298 = vpop.f32.mrb[0].mxu0
        %2299 = vdwg.mxu0
        %v2300 = vadd.f32 %v1982, %v2294
        %v2301 = vadd.f32 %v1983, %v2297
        %v2302 = vpack.c.bf16 %v2301, %v2300
        %v2304 = vunpack.c.l.b16 %v2302
        %v2305 = vunpack.c.h.b16 %v2302
        %v2306 = vpack.c.b16 %v2304, %v2304
        %v2307 = vpack.c.b16 %v2305, %v2305
        %vm2310 = vcmask 519168
        %2311 = vst.msk [vmem:[%s749] sm:$0xf] %vm2310, %v2306
        %vm2312 = vcmask 516096
        %vm2313 = vsmask.f32 256
        %vm2314 = vmand %vm2312, %vm2313
        %v2315 = vld [vmem:[%s749 + $0x4] sm:$0x1]
        %v2316 = vsel %vm2314, %v2307, %v2315
        %2317 = vst [vmem:[%s749 + $0x4] sm:$0x1] %v2316
        %s2318 = sand.u32 %s390, 1
        %s2319 = scalar_lea.sflag [#allocation4], %s2318
        %s2320 = sand.u32 %s390, 1
        %s2321 = smul.addr %s2320, 8
        %s2322 = scalar_lea.vmem [#allocation28], %s2321
        // Predicated region
        $region149: #{transformer_forward.5} parent=83 // pred_check
          %p2323 = pneg %p400
        $region150: #{transformer_forward.5} parent=83 // pred_check_branch
          %2325 = sbr.rel (%p2323) target = $region152
        $region151: #{transformer_forward.5} parent=83 // pred_region
          %s2327 = ssub.s32 128, 128
          %2328 = vsyncadd %s2319, %s2327
          %s2329 = smul.addr %s41, 2
          %s2330 = smul.addr %s2329, 64
          %s2331 = scalar_lea.hbm %s16, %s2330
          %s2332 = sshll.u32 %s2322, 4
          %s2333 = int_to_ptr.vmem [resolvable:$true] %s2332
          %2338 = dma.vmem_to_hbm [thread:$0]  %s2333, 128, %s2331, %s2319, 64, 64, 4
        $region152: #{transformer_forward.5} parent=83 // pred_fallthru
          _
      $region84: #{transformer_forward.5} parent=5 // pred_fallthru
        _
      %p2339 = scmp.le.s32.totalorder 2, %s36
      // Predicated region
      $region153: #{transformer_forward.5} parent=5 // pred_check
        %p2340 = pneg %p2339
      $region154: #{transformer_forward.5} parent=5 // pred_check_branch
        %2342 = sbr.rel (%p2340) target = $region156
      $region155: #{transformer_forward.5} parent=5 // pred_region
        %s2343 = ssub.s32 %s36, 2
        // Predicated region
        $region157: #{transformer_forward.5} parent=155 // pred_check
          %p2344 = pneg %p406
        $region158: #{transformer_forward.5} parent=155 // pred_check_branch
          %2346 = sbr.rel (%p2344) target = $region160
        $region159: #{transformer_forward.5} parent=155 // pred_region
          %s2347 = sand.u32 %s391, 1
          %s2348 = scalar_lea.sflag [#allocation4], %s2347
          %s2349 = sand.u32 %s391, 1
          %s2350 = smul.addr %s2349, 8
          %s2351 = scalar_lea.vmem [#allocation28], %s2350
          %2352 = dma.done %s2348, 128
        $region160: #{transformer_forward.5} parent=155 // pred_fallthru
          _
      $region156: #{transformer_forward.5} parent=5 // pred_fallthru
        _
    $region6: #{transformer_forward.5} parent=1 // loop_footer
      %s40 = sadd.s32 1, %s36
    $region7: #{transformer_forward.5} parent=1 // loop_footer_branch
      %35 = sbr.rel target = $region3
    $region8: #{transformer_forward.5} parent=1 // loop_exit
      _
    %2353 = vsyncpa [#allocation3], 1
    %s2354 = scalar_lea.sflag [#allocation3], 1
    %2355 = vsyncpa %s2354, 1
    %2356 = vsyncpa [#allocation6], 1
    %2357 = vsyncpa [#allocation9], 1
    %2358 = vsyncpa [#allocation12], 1
    %2359 = vsyncpa [#allocation15], 1
    %2360 = vsyncpa [#allocation18], 1
    %2361 = vsyncpa [#allocation21], 1
    %2362 = vsyncpa [#allocation24], 1
    %2363 = vsyncpa [#allocation27], 1
    %2364 = vsyncpa [#allocation4], 1
    %s2365 = scalar_lea.sflag [#allocation4], 1
    %2366 = vsyncpa %s2365, 1

</llo_original>
